<compile_context>
chip_gen: v5e
topology: v5e:2x2
jax: 0.10.0
libtpu: 0.0.40
codegen_flags: <defaults>
</compile_context>

<pallas_src>
import jax
import jax.numpy as jnp
from jax.experimental import pallas as pl
from jax.experimental.pallas import tpu as pltpu


def encoder_gru_kernel(emb_ref, wih_ref, bih_ref, whh_ref, bhh_ref,
                       hidden_ref, gi_scratch):
    """Whole-sequence GRU encoder in one kernel invocation.

    emb_ref:   [S*B, E]  bf16   (time-major, flattened over time x batch)
    wih_ref:   [E, 3H]   bf16   (gate order r | z | n along last axis)
    bih_ref:   [1, 3H]   f32
    whh_ref:   [H, 3H]   bf16
    bhh_ref:   [1, 3H]   f32
    hidden_ref:[B, H]    f32    (final hidden state)
    gi_scratch:[S*B, 3H] f32    (precomputed input-side gate pre-activations)
    """
    B, H = hidden_ref.shape
    SB, _ = emb_ref.shape
    S = SB // B

    # ---- Prologue: one fat input-projection matmul for ALL time steps. ----
    # M = S*B rows fill the MXU far better than per-step M = B, and b_ih is
    # folded in here exactly once.
    gi_scratch[...] = (
        jnp.dot(emb_ref[...], wih_ref[...],
                preferred_element_type=jnp.float32)
        + bih_ref[...])

    # Hoisted loop-invariants (JAX does not CSE broadcast_in_dim).
    bhh = jnp.broadcast_to(bhh_ref[...], (B, 3 * H))     # [B, 3H] f32, once
    whh = whh_ref[...]                                   # [H, 3H] bf16, resident

    # ---- Serialized recurrence: only the h @ W_hh matmul per step. ----
    def step(t, h):
        row = pl.multiple_of(t * B, B)                   # sublane-aligned start
        gi = gi_scratch[pl.ds(row, B), :]                # [B, 3H] f32 (precomputed)
        gh = jnp.dot(h.astype(jnp.bfloat16), whh,
                     preferred_element_type=jnp.float32) + bhh
        # PyTorch GRU gate order r | z | n; each H-wide slice is a clean
        # 128-lane block.
        r = jax.nn.sigmoid(gi[:, 0 * H:1 * H] + gh[:, 0 * H:1 * H])
        z = jax.nn.sigmoid(gi[:, 1 * H:2 * H] + gh[:, 1 * H:2 * H])
        n = jnp.tanh(gi[:, 2 * H:3 * H] + r * gh[:, 2 * H:3 * H])
        return (1.0 - z) * n + z * h                     # [B, H] f32 carry

    h0 = jnp.zeros((B, H), jnp.float32)                  # nn.GRU default h0
    h_final = jax.lax.fori_loop(0, S, step, h0, unroll=True)

    # Single lane-dense unmasked store, one HBM writeback.
    hidden_ref[...] = h_final.astype(hidden_ref.dtype)


def encoder_forward(src, params):
    """Mirrors Encoder.forward (eval mode). src: [S, B] int32 -> hidden [1, B, H]."""
    emb_table = params["embedding"]                       # [V, E] f32
    # Plain-JAX glue: embedding gather for the whole sequence
    # (dropout = identity in eval mode); cast to bf16 to halve DMA bytes.
    embedded = emb_table[src].astype(jnp.bfloat16)        # [S, B, E]
    S, B, E = embedded.shape
    H = params["w_hh"].shape[0]

    emb2d = embedded.reshape(S * B, E)                    # time-major flatten

    hidden = pl.pallas_call(
        encoder_gru_kernel,
        out_shape=jax.ShapeDtypeStruct((B, H), jnp.float32),
        grid_spec=pltpu.PrefetchScalarGridSpec(
            num_scalar_prefetch=0,
            grid=(1,),                                    # single invocation
            in_specs=[
                pl.BlockSpec((S * B, E), lambda i: (0, 0)),      # full sequence
                pl.BlockSpec((E, 3 * H), lambda i: (0, 0)),      # W_ih (resident)
                pl.BlockSpec((1, 3 * H), lambda i: (0, 0)),      # b_ih
                pl.BlockSpec((H, 3 * H), lambda i: (0, 0)),      # W_hh (resident)
                pl.BlockSpec((1, 3 * H), lambda i: (0, 0)),      # b_hh
            ],
            out_specs=pl.BlockSpec((B, H), lambda i: (0, 0)),
            scratch_shapes=[pltpu.VMEM((S * B, 3 * H), jnp.float32)],
        ),
        compiler_params=pltpu.CompilerParams(
            dimension_semantics=("arbitrary",),
        ),
    )(emb2d, params["w_ih"], params["b_ih"], params["w_hh"], params["b_hh"])

    # PyTorch nn.GRU hidden shape: [num_layers * num_dirs, B, H] = [1, B, H]
    return hidden[None, :, :]


def reference_forward(src, params):
    """Pure-JAX f32 reference of the same math (sanity check)."""
    emb = params["embedding"][src].astype(jnp.float32)    # [S, B, E]
    w_ih = params["w_ih"].astype(jnp.float32)
    w_hh = params["w_hh"].astype(jnp.float32)
    b_ih = params["b_ih"]
    b_hh = params["b_hh"]
    H = w_hh.shape[0]
    B = src.shape[1]

    def step(h, x):
        gi = x @ w_ih + b_ih
        gh = h @ w_hh + b_hh
        r = jax.nn.sigmoid(gi[:, :H] + gh[:, :H])
        z = jax.nn.sigmoid(gi[:, H:2 * H] + gh[:, H:2 * H])
        n = jnp.tanh(gi[:, 2 * H:] + r * gh[:, 2 * H:])
        h_new = (1.0 - z) * n + z * h
        return h_new, None

    h0 = jnp.zeros((B, H), jnp.float32)
    h_final, _ = jax.lax.scan(step, h0, emb)
    return h_final[None, :, :]


def init_params(key, input_dim, emb_dim, hid_dim):
    ks = jax.random.split(key, 5)
    scale = 0.1
    return {
        # embedding table kept f32 (gather happens in plain JAX)
        "embedding": scale * jax.random.normal(ks[0], (input_dim, emb_dim), jnp.float32),
        # GRU weights in "x @ W" orientation, gate order r|z|n along the last
        # axis, stored bf16 (MXU full-rate, half the HBM weight bytes).
        "w_ih": (scale * jax.random.normal(ks[1], (emb_dim, 3 * hid_dim),
                                           jnp.float32)).astype(jnp.bfloat16),
        "b_ih": scale * jax.random.normal(ks[2], (1, 3 * hid_dim), jnp.float32),
        "w_hh": (scale * jax.random.normal(ks[3], (hid_dim, 3 * hid_dim),
                                           jnp.float32)).astype(jnp.bfloat16),
        "b_hh": scale * jax.random.normal(ks[4], (1, 3 * hid_dim), jnp.float32),
    }


if __name__ == "__main__":
    INPUT_DIM = 256   # vocab size
    EMB_DIM = 128     # lane-aligned
    HID_DIM = 128     # lane-aligned (3H = 384 is a multiple of 128)
    SEQ_LEN = 12
    BATCH = 16        # full bf16 sublane group

    key = jax.random.PRNGKey(0)
    k_params, k_src = jax.random.split(key, 2)

    params = init_params(k_params, INPUT_DIM, EMB_DIM, HID_DIM)
    src = jax.random.randint(k_src, (SEQ_LEN, BATCH), 0, INPUT_DIM, dtype=jnp.int32)

    hidden = encoder_forward(src, params)
    hidden = jax.block_until_ready(hidden)

    hidden_ref = reference_forward(src, params)

    assert hidden.shape == (1, BATCH, HID_DIM)
    assert jnp.allclose(hidden, hidden_ref, atol=2e-2, rtol=2e-2)

    print("KERNEL_OK")
</pallas_src>

<mosaic_0001>
module attributes {stable_mosaic.version = 11 : i64} {
  func.func @encoder_gru_kernel(%arg0: i32, %arg1: memref<192x128xbf16, #tpu.memory_space<vmem>>, %arg2: memref<128x384xbf16, #tpu.memory_space<vmem>>, %arg3: memref<1x384xf32, #tpu.memory_space<vmem>>, %arg4: memref<128x384xbf16, #tpu.memory_space<vmem>>, %arg5: memref<1x384xf32, #tpu.memory_space<vmem>>, %arg6: memref<16x128xf32, #tpu.memory_space<vmem>>, %arg7: memref<192x384xf32, #tpu.memory_space<vmem>>) attributes {dimension_semantics = [#tpu.dimension_semantics<arbitrary>], iteration_bounds = array<i64: 1>, scalar_prefetch = 0 : i64, scratch_operands = 1 : i64, tpu.core_type = #tpu.core_type<tc>, window_params = [{pipeline_mode = #tpu.pipeline_mode<synchronous>, transform_indices = @transform_0, window_bounds = array<i64: 192, 128>}, {pipeline_mode = #tpu.pipeline_mode<synchronous>, transform_indices = @transform_1, window_bounds = array<i64: 128, 384>}, {pipeline_mode = #tpu.pipeline_mode<synchronous>, transform_indices = @transform_2, window_bounds = array<i64: 1, 384>}, {pipeline_mode = #tpu.pipeline_mode<synchronous>, transform_indices = @transform_3, window_bounds = array<i64: 128, 384>}, {pipeline_mode = #tpu.pipeline_mode<synchronous>, transform_indices = @transform_4, window_bounds = array<i64: 1, 384>}, {pipeline_mode = #tpu.pipeline_mode<synchronous>, transform_indices = @transform_5, window_bounds = array<i64: 16, 128>}]} {
    %c0 = arith.constant 0 : index
    %c0_0 = arith.constant 0 : index
    %0 = vector.load %arg1[%c0, %c0_0] : memref<192x128xbf16, #tpu.memory_space<vmem>>, vector<192x128xbf16>
    %c0_1 = arith.constant 0 : index
    %c0_2 = arith.constant 0 : index
    %1 = vector.load %arg2[%c0_1, %c0_2] : memref<128x384xbf16, #tpu.memory_space<vmem>>, vector<128x384xbf16>
    %cst = arith.constant dense<0.000000e+00> : vector<192x384xf32>
    %2 = tpu.matmul %0, %1, %cst {dimension_numbers = #tpu.dot_dimension_numbers<[1], [0], [0], [1], [0, 0, 1, 1], [], []>} : vector<192x128xbf16>, vector<128x384xbf16>, vector<192x384xf32> -> vector<192x384xf32>
    %c0_3 = arith.constant 0 : index
    %c0_4 = arith.constant 0 : index
    %3 = vector.load %arg3[%c0_3, %c0_4] : memref<1x384xf32, #tpu.memory_space<vmem>>, vector<1x384xf32>
    %4 = vector.broadcast %3 : vector<1x384xf32> to vector<192x384xf32>
    %5 = arith.addf %2, %4 : vector<192x384xf32>
    %c0_5 = arith.constant 0 : index
    %c0_6 = arith.constant 0 : index
    %6 = vector.load %arg7[%c0_5, %c0_6] : memref<192x384xf32, #tpu.memory_space<vmem>>, vector<192x384xf32>
    tpu.vector_store %arg7[%c0_5, %c0_6], %5 {strides = array<i32>} : memref<192x384xf32, #tpu.memory_space<vmem>>, vector<192x384xf32>,
    %c0_7 = arith.constant 0 : index
    %c0_8 = arith.constant 0 : index
    %7 = vector.load %arg5[%c0_7, %c0_8] : memref<1x384xf32, #tpu.memory_space<vmem>>, vector<1x384xf32>
    %8 = vector.shape_cast %7 : vector<1x384xf32> to vector<1x384xf32>
    %9 = vector.broadcast %8 : vector<1x384xf32> to vector<16x384xf32>
    %c0_9 = arith.constant 0 : index
    %c0_10 = arith.constant 0 : index
    %10 = vector.load %arg4[%c0_9, %c0_10] : memref<128x384xbf16, #tpu.memory_space<vmem>>, vector<128x384xbf16>
    %cst_11 = arith.constant 0.000000e+00 : f32
    %11 = vector.broadcast %cst_11 : f32 to vector<16x128xf32>
    %c0_i32 = arith.constant 0 : i32
    %c16_i32 = arith.constant 16 : i32
    %12 = arith.muli %c0_i32, %c16_i32 : i32
    %13 = tpu.assume_multiple %12, 16 : i32
    %14 = arith.index_cast %13 : i32 to index
    %c0_12 = arith.constant 0 : index
    %15 = vector.load %arg7[%14, %c0_12] : memref<192x384xf32, #tpu.memory_space<vmem>>, vector<16x384xf32>
    %16 = arith.truncf %11 : vector<16x128xf32> to vector<16x128xbf16>
    %cst_13 = arith.constant dense<0.000000e+00> : vector<16x384xf32>
    %17 = tpu.matmul %16, %10, %cst_13 {dimension_numbers = #tpu.dot_dimension_numbers<[1], [0], [0], [1], [0, 0, 1, 1], [], []>} : vector<16x128xbf16>, vector<128x384xbf16>, vector<16x384xf32> -> vector<16x384xf32>
    %18 = arith.addf %17, %9 : vector<16x384xf32>
    %19 = vector.extract_strided_slice %15 {offsets = [0, 0], sizes = [16, 128], strides = [1, 1]} : vector<16x384xf32> to vector<16x128xf32>
    %20 = vector.extract_strided_slice %18 {offsets = [0, 0], sizes = [16, 128], strides = [1, 1]} : vector<16x384xf32> to vector<16x128xf32>
    %21 = arith.addf %19, %20 : vector<16x128xf32>
    %22 = arith.negf %21 : vector<16x128xf32>
    %23 = math.exp %22 : vector<16x128xf32>
    %cst_14 = arith.constant 1.000000e+00 : f32
    %24 = vector.broadcast %cst_14 : f32 to vector<16x128xf32>
    %25 = arith.addf %24, %23 : vector<16x128xf32>
    %26 = arith.divf %24, %25 : vector<16x128xf32>
    %27 = vector.extract_strided_slice %15 {offsets = [0, 128], sizes = [16, 128], strides = [1, 1]} : vector<16x384xf32> to vector<16x128xf32>
    %28 = vector.extract_strided_slice %18 {offsets = [0, 128], sizes = [16, 128], strides = [1, 1]} : vector<16x384xf32> to vector<16x128xf32>
    %29 = arith.addf %27, %28 : vector<16x128xf32>
    %30 = arith.negf %29 : vector<16x128xf32>
    %31 = math.exp %30 : vector<16x128xf32>
    %cst_15 = arith.constant 1.000000e+00 : f32
    %32 = vector.broadcast %cst_15 : f32 to vector<16x128xf32>
    %33 = arith.addf %32, %31 : vector<16x128xf32>
    %34 = arith.divf %32, %33 : vector<16x128xf32>
    %35 = vector.extract_strided_slice %15 {offsets = [0, 256], sizes = [16, 128], strides = [1, 1]} : vector<16x384xf32> to vector<16x128xf32>
    %36 = vector.extract_strided_slice %18 {offsets = [0, 256], sizes = [16, 128], strides = [1, 1]} : vector<16x384xf32> to vector<16x128xf32>
    %37 = arith.mulf %26, %36 : vector<16x128xf32>
    %38 = arith.addf %35, %37 : vector<16x128xf32>
    %39 = math.tanh %38 : vector<16x128xf32>
    %cst_16 = arith.constant 1.000000e+00 : f32
    %40 = vector.broadcast %cst_16 : f32 to vector<16x128xf32>
    %41 = arith.subf %40, %34 : vector<16x128xf32>
    %42 = arith.mulf %41, %39 : vector<16x128xf32>
    %43 = arith.mulf %34, %11 : vector<16x128xf32>
    %44 = arith.addf %42, %43 : vector<16x128xf32>
    %c1_i32 = arith.constant 1 : i32
    %c16_i32_17 = arith.constant 16 : i32
    %45 = arith.muli %c1_i32, %c16_i32_17 : i32
    %46 = tpu.assume_multiple %45, 16 : i32
    %47 = arith.index_cast %46 : i32 to index
    %c0_18 = arith.constant 0 : index
    %48 = vector.load %arg7[%47, %c0_18] : memref<192x384xf32, #tpu.memory_space<vmem>>, vector<16x384xf32>
    %49 = arith.truncf %44 : vector<16x128xf32> to vector<16x128xbf16>
    %cst_19 = arith.constant dense<0.000000e+00> : vector<16x384xf32>
    %50 = tpu.matmul %49, %10, %cst_19 {dimension_numbers = #tpu.dot_dimension_numbers<[1], [0], [0], [1], [0, 0, 1, 1], [], []>} : vector<16x128xbf16>, vector<128x384xbf16>, vector<16x384xf32> -> vector<16x384xf32>
    %51 = arith.addf %50, %9 : vector<16x384xf32>
    %52 = vector.extract_strided_slice %48 {offsets = [0, 0], sizes = [16, 128], strides = [1, 1]} : vector<16x384xf32> to vector<16x128xf32>
    %53 = vector.extract_strided_slice %51 {offsets = [0, 0], sizes = [16, 128], strides = [1, 1]} : vector<16x384xf32> to vector<16x128xf32>
    %54 = arith.addf %52, %53 : vector<16x128xf32>
    %55 = arith.negf %54 : vector<16x128xf32>
    %56 = math.exp %55 : vector<16x128xf32>
    %cst_20 = arith.constant 1.000000e+00 : f32
    %57 = vector.broadcast %cst_20 : f32 to vector<16x128xf32>
    %58 = arith.addf %57, %56 : vector<16x128xf32>
    %59 = arith.divf %57, %58 : vector<16x128xf32>
    %60 = vector.extract_strided_slice %48 {offsets = [0, 128], sizes = [16, 128], strides = [1, 1]} : vector<16x384xf32> to vector<16x128xf32>
    %61 = vector.extract_strided_slice %51 {offsets = [0, 128], sizes = [16, 128], strides = [1, 1]} : vector<16x384xf32> to vector<16x128xf32>
    %62 = arith.addf %60, %61 : vector<16x128xf32>
    %63 = arith.negf %62 : vector<16x128xf32>
    %64 = math.exp %63 : vector<16x128xf32>
    %cst_21 = arith.constant 1.000000e+00 : f32
    %65 = vector.broadcast %cst_21 : f32 to vector<16x128xf32>
    %66 = arith.addf %65, %64 : vector<16x128xf32>
    %67 = arith.divf %65, %66 : vector<16x128xf32>
    %68 = vector.extract_strided_slice %48 {offsets = [0, 256], sizes = [16, 128], strides = [1, 1]} : vector<16x384xf32> to vector<16x128xf32>
    %69 = vector.extract_strided_slice %51 {offsets = [0, 256], sizes = [16, 128], strides = [1, 1]} : vector<16x384xf32> to vector<16x128xf32>
    %70 = arith.mulf %59, %69 : vector<16x128xf32>
    %71 = arith.addf %68, %70 : vector<16x128xf32>
    %72 = math.tanh %71 : vector<16x128xf32>
    %cst_22 = arith.constant 1.000000e+00 : f32
    %73 = vector.broadcast %cst_22 : f32 to vector<16x128xf32>
    %74 = arith.subf %73, %67 : vector<16x128xf32>
    %75 = arith.mulf %74, %72 : vector<16x128xf32>
    %76 = arith.mulf %67, %44 : vector<16x128xf32>
    %77 = arith.addf %75, %76 : vector<16x128xf32>
    %c2_i32 = arith.constant 2 : i32
    %c16_i32_23 = arith.constant 16 : i32
    %78 = arith.muli %c2_i32, %c16_i32_23 : i32
    %79 = tpu.assume_multiple %78, 16 : i32
    %80 = arith.index_cast %79 : i32 to index
    %c0_24 = arith.constant 0 : index
    %81 = vector.load %arg7[%80, %c0_24] : memref<192x384xf32, #tpu.memory_space<vmem>>, vector<16x384xf32>
    %82 = arith.truncf %77 : vector<16x128xf32> to vector<16x128xbf16>
    %cst_25 = arith.constant dense<0.000000e+00> : vector<16x384xf32>
    %83 = tpu.matmul %82, %10, %cst_25 {dimension_numbers = #tpu.dot_dimension_numbers<[1], [0], [0], [1], [0, 0, 1, 1], [], []>} : vector<16x128xbf16>, vector<128x384xbf16>, vector<16x384xf32> -> vector<16x384xf32>
    %84 = arith.addf %83, %9 : vector<16x384xf32>
    %85 = vector.extract_strided_slice %81 {offsets = [0, 0], sizes = [16, 128], strides = [1, 1]} : vector<16x384xf32> to vector<16x128xf32>
    %86 = vector.extract_strided_slice %84 {offsets = [0, 0], sizes = [16, 128], strides = [1, 1]} : vector<16x384xf32> to vector<16x128xf32>
    %87 = arith.addf %85, %86 : vector<16x128xf32>
    %88 = arith.negf %87 : vector<16x128xf32>
    %89 = math.exp %88 : vector<16x128xf32>
    %cst_26 = arith.constant 1.000000e+00 : f32
    %90 = vector.broadcast %cst_26 : f32 to vector<16x128xf32>
    %91 = arith.addf %90, %89 : vector<16x128xf32>
    %92 = arith.divf %90, %91 : vector<16x128xf32>
    %93 = vector.extract_strided_slice %81 {offsets = [0, 128], sizes = [16, 128], strides = [1, 1]} : vector<16x384xf32> to vector<16x128xf32>
    %94 = vector.extract_strided_slice %84 {offsets = [0, 128], sizes = [16, 128], strides = [1, 1]} : vector<16x384xf32> to vector<16x128xf32>
    %95 = arith.addf %93, %94 : vector<16x128xf32>
    %96 = arith.negf %95 : vector<16x128xf32>
    %97 = math.exp %96 : vector<16x128xf32>
    %cst_27 = arith.constant 1.000000e+00 : f32
    %98 = vector.broadcast %cst_27 : f32 to vector<16x128xf32>
    %99 = arith.addf %98, %97 : vector<16x128xf32>
    %100 = arith.divf %98, %99 : vector<16x128xf32>
    %101 = vector.extract_strided_slice %81 {offsets = [0, 256], sizes = [16, 128], strides = [1, 1]} : vector<16x384xf32> to vector<16x128xf32>
    %102 = vector.extract_strided_slice %84 {offsets = [0, 256], sizes = [16, 128], strides = [1, 1]} : vector<16x384xf32> to vector<16x128xf32>
    %103 = arith.mulf %92, %102 : vector<16x128xf32>
    %104 = arith.addf %101, %103 : vector<16x128xf32>
    %105 = math.tanh %104 : vector<16x128xf32>
    %cst_28 = arith.constant 1.000000e+00 : f32
    %106 = vector.broadcast %cst_28 : f32 to vector<16x128xf32>
    %107 = arith.subf %106, %100 : vector<16x128xf32>
    %108 = arith.mulf %107, %105 : vector<16x128xf32>
    %109 = arith.mulf %100, %77 : vector<16x128xf32>
    %110 = arith.addf %108, %109 : vector<16x128xf32>
    %c3_i32 = arith.constant 3 : i32
    %c16_i32_29 = arith.constant 16 : i32
    %111 = arith.muli %c3_i32, %c16_i32_29 : i32
    %112 = tpu.assume_multiple %111, 16 : i32
    %113 = arith.index_cast %112 : i32 to index
    %c0_30 = arith.constant 0 : index
    %114 = vector.load %arg7[%113, %c0_30] : memref<192x384xf32, #tpu.memory_space<vmem>>, vector<16x384xf32>
    %115 = arith.truncf %110 : vector<16x128xf32> to vector<16x128xbf16>
    %cst_31 = arith.constant dense<0.000000e+00> : vector<16x384xf32>
    %116 = tpu.matmul %115, %10, %cst_31 {dimension_numbers = #tpu.dot_dimension_numbers<[1], [0], [0], [1], [0, 0, 1, 1], [], []>} : vector<16x128xbf16>, vector<128x384xbf16>, vector<16x384xf32> -> vector<16x384xf32>
    %117 = arith.addf %116, %9 : vector<16x384xf32>
    %118 = vector.extract_strided_slice %114 {offsets = [0, 0], sizes = [16, 128], strides = [1, 1]} : vector<16x384xf32> to vector<16x128xf32>
    %119 = vector.extract_strided_slice %117 {offsets = [0, 0], sizes = [16, 128], strides = [1, 1]} : vector<16x384xf32> to vector<16x128xf32>
    %120 = arith.addf %118, %119 : vector<16x128xf32>
    %121 = arith.negf %120 : vector<16x128xf32>
    %122 = math.exp %121 : vector<16x128xf32>
    %cst_32 = arith.constant 1.000000e+00 : f32
    %123 = vector.broadcast %cst_32 : f32 to vector<16x128xf32>
    %124 = arith.addf %123, %122 : vector<16x128xf32>
    %125 = arith.divf %123, %124 : vector<16x128xf32>
    %126 = vector.extract_strided_slice %114 {offsets = [0, 128], sizes = [16, 128], strides = [1, 1]} : vector<16x384xf32> to vector<16x128xf32>
    %127 = vector.extract_strided_slice %117 {offsets = [0, 128], sizes = [16, 128], strides = [1, 1]} : vector<16x384xf32> to vector<16x128xf32>
    %128 = arith.addf %126, %127 : vector<16x128xf32>
    %129 = arith.negf %128 : vector<16x128xf32>
    %130 = math.exp %129 : vector<16x128xf32>
    %cst_33 = arith.constant 1.000000e+00 : f32
    %131 = vector.broadcast %cst_33 : f32 to vector<16x128xf32>
    %132 = arith.addf %131, %130 : vector<16x128xf32>
    %133 = arith.divf %131, %132 : vector<16x128xf32>
    %134 = vector.extract_strided_slice %114 {offsets = [0, 256], sizes = [16, 128], strides = [1, 1]} : vector<16x384xf32> to vector<16x128xf32>
    %135 = vector.extract_strided_slice %117 {offsets = [0, 256], sizes = [16, 128], strides = [1, 1]} : vector<16x384xf32> to vector<16x128xf32>
    %136 = arith.mulf %125, %135 : vector<16x128xf32>
    %137 = arith.addf %134, %136 : vector<16x128xf32>
    %138 = math.tanh %137 : vector<16x128xf32>
    %cst_34 = arith.constant 1.000000e+00 : f32
    %139 = vector.broadcast %cst_34 : f32 to vector<16x128xf32>
    %140 = arith.subf %139, %133 : vector<16x128xf32>
    %141 = arith.mulf %140, %138 : vector<16x128xf32>
    %142 = arith.mulf %133, %110 : vector<16x128xf32>
    %143 = arith.addf %141, %142 : vector<16x128xf32>
    %c4_i32 = arith.constant 4 : i32
    %c16_i32_35 = arith.constant 16 : i32
    %144 = arith.muli %c4_i32, %c16_i32_35 : i32
    %145 = tpu.assume_multiple %144, 16 : i32
    %146 = arith.index_cast %145 : i32 to index
    %c0_36 = arith.constant 0 : index
    %147 = vector.load %arg7[%146, %c0_36] : memref<192x384xf32, #tpu.memory_space<vmem>>, vector<16x384xf32>
    %148 = arith.truncf %143 : vector<16x128xf32> to vector<16x128xbf16>
    %cst_37 = arith.constant dense<0.000000e+00> : vector<16x384xf32>
    %149 = tpu.matmul %148, %10, %cst_37 {dimension_numbers = #tpu.dot_dimension_numbers<[1], [0], [0], [1], [0, 0, 1, 1], [], []>} : vector<16x128xbf16>, vector<128x384xbf16>, vector<16x384xf32> -> vector<16x384xf32>
    %150 = arith.addf %149, %9 : vector<16x384xf32>
    %151 = vector.extract_strided_slice %147 {offsets = [0, 0], sizes = [16, 128], strides = [1, 1]} : vector<16x384xf32> to vector<16x128xf32>
    %152 = vector.extract_strided_slice %150 {offsets = [0, 0], sizes = [16, 128], strides = [1, 1]} : vector<16x384xf32> to vector<16x128xf32>
    %153 = arith.addf %151, %152 : vector<16x128xf32>
    %154 = arith.negf %153 : vector<16x128xf32>
    %155 = math.exp %154 : vector<16x128xf32>
    %cst_38 = arith.constant 1.000000e+00 : f32
    %156 = vector.broadcast %cst_38 : f32 to vector<16x128xf32>
    %157 = arith.addf %156, %155 : vector<16x128xf32>
    %158 = arith.divf %156, %157 : vector<16x128xf32>
    %159 = vector.extract_strided_slice %147 {offsets = [0, 128], sizes = [16, 128], strides = [1, 1]} : vector<16x384xf32> to vector<16x128xf32>
    %160 = vector.extract_strided_slice %150 {offsets = [0, 128], sizes = [16, 128], strides = [1, 1]} : vector<16x384xf32> to vector<16x128xf32>
    %161 = arith.addf %159, %160 : vector<16x128xf32>
    %162 = arith.negf %161 : vector<16x128xf32>
    %163 = math.exp %162 : vector<16x128xf32>
    %cst_39 = arith.constant 1.000000e+00 : f32
    %164 = vector.broadcast %cst_39 : f32 to vector<16x128xf32>
    %165 = arith.addf %164, %163 : vector<16x128xf32>
    %166 = arith.divf %164, %165 : vector<16x128xf32>
    %167 = vector.extract_strided_slice %147 {offsets = [0, 256], sizes = [16, 128], strides = [1, 1]} : vector<16x384xf32> to vector<16x128xf32>
    %168 = vector.extract_strided_slice %150 {offsets = [0, 256], sizes = [16, 128], strides = [1, 1]} : vector<16x384xf32> to vector<16x128xf32>
    %169 = arith.mulf %158, %168 : vector<16x128xf32>
    %170 = arith.addf %167, %169 : vector<16x128xf32>
    %171 = math.tanh %170 : vector<16x128xf32>
    %cst_40 = arith.constant 1.000000e+00 : f32
    %172 = vector.broadcast %cst_40 : f32 to vector<16x128xf32>
    %173 = arith.subf %172, %166 : vector<16x128xf32>
    %174 = arith.mulf %173, %171 : vector<16x128xf32>
    %175 = arith.mulf %166, %143 : vector<16x128xf32>
    %176 = arith.addf %174, %175 : vector<16x128xf32>
    %c5_i32 = arith.constant 5 : i32
    %c16_i32_41 = arith.constant 16 : i32
    %177 = arith.muli %c5_i32, %c16_i32_41 : i32
    %178 = tpu.assume_multiple %177, 16 : i32
    %179 = arith.index_cast %178 : i32 to index
    %c0_42 = arith.constant 0 : index
    %180 = vector.load %arg7[%179, %c0_42] : memref<192x384xf32, #tpu.memory_space<vmem>>, vector<16x384xf32>
    %181 = arith.truncf %176 : vector<16x128xf32> to vector<16x128xbf16>
    %cst_43 = arith.constant dense<0.000000e+00> : vector<16x384xf32>
    %182 = tpu.matmul %181, %10, %cst_43 {dimension_numbers = #tpu.dot_dimension_numbers<[1], [0], [0], [1], [0, 0, 1, 1], [], []>} : vector<16x128xbf16>, vector<128x384xbf16>, vector<16x384xf32> -> vector<16x384xf32>
    %183 = arith.addf %182, %9 : vector<16x384xf32>
    %184 = vector.extract_strided_slice %180 {offsets = [0, 0], sizes = [16, 128], strides = [1, 1]} : vector<16x384xf32> to vector<16x128xf32>
    %185 = vector.extract_strided_slice %183 {offsets = [0, 0], sizes = [16, 128], strides = [1, 1]} : vector<16x384xf32> to vector<16x128xf32>
    %186 = arith.addf %184, %185 : vector<16x128xf32>
    %187 = arith.negf %186 : vector<16x128xf32>
    %188 = math.exp %187 : vector<16x128xf32>
    %cst_44 = arith.constant 1.000000e+00 : f32
    %189 = vector.broadcast %cst_44 : f32 to vector<16x128xf32>
    %190 = arith.addf %189, %188 : vector<16x128xf32>
    %191 = arith.divf %189, %190 : vector<16x128xf32>
    %192 = vector.extract_strided_slice %180 {offsets = [0, 128], sizes = [16, 128], strides = [1, 1]} : vector<16x384xf32> to vector<16x128xf32>
    %193 = vector.extract_strided_slice %183 {offsets = [0, 128], sizes = [16, 128], strides = [1, 1]} : vector<16x384xf32> to vector<16x128xf32>
    %194 = arith.addf %192, %193 : vector<16x128xf32>
    %195 = arith.negf %194 : vector<16x128xf32>
    %196 = math.exp %195 : vector<16x128xf32>
    %cst_45 = arith.constant 1.000000e+00 : f32
    %197 = vector.broadcast %cst_45 : f32 to vector<16x128xf32>
    %198 = arith.addf %197, %196 : vector<16x128xf32>
    %199 = arith.divf %197, %198 : vector<16x128xf32>
    %200 = vector.extract_strided_slice %180 {offsets = [0, 256], sizes = [16, 128], strides = [1, 1]} : vector<16x384xf32> to vector<16x128xf32>
    %201 = vector.extract_strided_slice %183 {offsets = [0, 256], sizes = [16, 128], strides = [1, 1]} : vector<16x384xf32> to vector<16x128xf32>
    %202 = arith.mulf %191, %201 : vector<16x128xf32>
    %203 = arith.addf %200, %202 : vector<16x128xf32>
    %204 = math.tanh %203 : vector<16x128xf32>
    %cst_46 = arith.constant 1.000000e+00 : f32
    %205 = vector.broadcast %cst_46 : f32 to vector<16x128xf32>
    %206 = arith.subf %205, %199 : vector<16x128xf32>
    %207 = arith.mulf %206, %204 : vector<16x128xf32>
    %208 = arith.mulf %199, %176 : vector<16x128xf32>
    %209 = arith.addf %207, %208 : vector<16x128xf32>
    %c6_i32 = arith.constant 6 : i32
    %c16_i32_47 = arith.constant 16 : i32
    %210 = arith.muli %c6_i32, %c16_i32_47 : i32
    %211 = tpu.assume_multiple %210, 16 : i32
    %212 = arith.index_cast %211 : i32 to index
    %c0_48 = arith.constant 0 : index
    %213 = vector.load %arg7[%212, %c0_48] : memref<192x384xf32, #tpu.memory_space<vmem>>, vector<16x384xf32>
    %214 = arith.truncf %209 : vector<16x128xf32> to vector<16x128xbf16>
    %cst_49 = arith.constant dense<0.000000e+00> : vector<16x384xf32>
    %215 = tpu.matmul %214, %10, %cst_49 {dimension_numbers = #tpu.dot_dimension_numbers<[1], [0], [0], [1], [0, 0, 1, 1], [], []>} : vector<16x128xbf16>, vector<128x384xbf16>, vector<16x384xf32> -> vector<16x384xf32>
    %216 = arith.addf %215, %9 : vector<16x384xf32>
    %217 = vector.extract_strided_slice %213 {offsets = [0, 0], sizes = [16, 128], strides = [1, 1]} : vector<16x384xf32> to vector<16x128xf32>
    %218 = vector.extract_strided_slice %216 {offsets = [0, 0], sizes = [16, 128], strides = [1, 1]} : vector<16x384xf32> to vector<16x128xf32>
    %219 = arith.addf %217, %218 : vector<16x128xf32>
    %220 = arith.negf %219 : vector<16x128xf32>
    %221 = math.exp %220 : vector<16x128xf32>
    %cst_50 = arith.constant 1.000000e+00 : f32
    %222 = vector.broadcast %cst_50 : f32 to vector<16x128xf32>
    %223 = arith.addf %222, %221 : vector<16x128xf32>
    %224 = arith.divf %222, %223 : vector<16x128xf32>
    %225 = vector.extract_strided_slice %213 {offsets = [0, 128], sizes = [16, 128], strides = [1, 1]} : vector<16x384xf32> to vector<16x128xf32>
    %226 = vector.extract_strided_slice %216 {offsets = [0, 128], sizes = [16, 128], strides = [1, 1]} : vector<16x384xf32> to vector<16x128xf32>
    %227 = arith.addf %225, %226 : vector<16x128xf32>
    %228 = arith.negf %227 : vector<16x128xf32>
    %229 = math.exp %228 : vector<16x128xf32>
    %cst_51 = arith.constant 1.000000e+00 : f32
    %230 = vector.broadcast %cst_51 : f32 to vector<16x128xf32>
    %231 = arith.addf %230, %229 : vector<16x128xf32>
    %232 = arith.divf %230, %231 : vector<16x128xf32>
    %233 = vector.extract_strided_slice %213 {offsets = [0, 256], sizes = [16, 128], strides = [1, 1]} : vector<16x384xf32> to vector<16x128xf32>
    %234 = vector.extract_strided_slice %216 {offsets = [0, 256], sizes = [16, 128], strides = [1, 1]} : vector<16x384xf32> to vector<16x128xf32>
    %235 = arith.mulf %224, %234 : vector<16x128xf32>
    %236 = arith.addf %233, %235 : vector<16x128xf32>
    %237 = math.tanh %236 : vector<16x128xf32>
    %cst_52 = arith.constant 1.000000e+00 : f32
    %238 = vector.broadcast %cst_52 : f32 to vector<16x128xf32>
    %239 = arith.subf %238, %232 : vector<16x128xf32>
    %240 = arith.mulf %239, %237 : vector<16x128xf32>
    %241 = arith.mulf %232, %209 : vector<16x128xf32>
    %242 = arith.addf %240, %241 : vector<16x128xf32>
    %c7_i32 = arith.constant 7 : i32
    %c16_i32_53 = arith.constant 16 : i32
    %243 = arith.muli %c7_i32, %c16_i32_53 : i32
    %244 = tpu.assume_multiple %243, 16 : i32
    %245 = arith.index_cast %244 : i32 to index
    %c0_54 = arith.constant 0 : index
    %246 = vector.load %arg7[%245, %c0_54] : memref<192x384xf32, #tpu.memory_space<vmem>>, vector<16x384xf32>
    %247 = arith.truncf %242 : vector<16x128xf32> to vector<16x128xbf16>
    %cst_55 = arith.constant dense<0.000000e+00> : vector<16x384xf32>
    %248 = tpu.matmul %247, %10, %cst_55 {dimension_numbers = #tpu.dot_dimension_numbers<[1], [0], [0], [1], [0, 0, 1, 1], [], []>} : vector<16x128xbf16>, vector<128x384xbf16>, vector<16x384xf32> -> vector<16x384xf32>
    %249 = arith.addf %248, %9 : vector<16x384xf32>
    %250 = vector.extract_strided_slice %246 {offsets = [0, 0], sizes = [16, 128], strides = [1, 1]} : vector<16x384xf32> to vector<16x128xf32>
    %251 = vector.extract_strided_slice %249 {offsets = [0, 0], sizes = [16, 128], strides = [1, 1]} : vector<16x384xf32> to vector<16x128xf32>
    %252 = arith.addf %250, %251 : vector<16x128xf32>
    %253 = arith.negf %252 : vector<16x128xf32>
    %254 = math.exp %253 : vector<16x128xf32>
    %cst_56 = arith.constant 1.000000e+00 : f32
    %255 = vector.broadcast %cst_56 : f32 to vector<16x128xf32>
    %256 = arith.addf %255, %254 : vector<16x128xf32>
    %257 = arith.divf %255, %256 : vector<16x128xf32>
    %258 = vector.extract_strided_slice %246 {offsets = [0, 128], sizes = [16, 128], strides = [1, 1]} : vector<16x384xf32> to vector<16x128xf32>
    %259 = vector.extract_strided_slice %249 {offsets = [0, 128], sizes = [16, 128], strides = [1, 1]} : vector<16x384xf32> to vector<16x128xf32>
    %260 = arith.addf %258, %259 : vector<16x128xf32>
    %261 = arith.negf %260 : vector<16x128xf32>
    %262 = math.exp %261 : vector<16x128xf32>
    %cst_57 = arith.constant 1.000000e+00 : f32
    %263 = vector.broadcast %cst_57 : f32 to vector<16x128xf32>
    %264 = arith.addf %263, %262 : vector<16x128xf32>
    %265 = arith.divf %263, %264 : vector<16x128xf32>
    %266 = vector.extract_strided_slice %246 {offsets = [0, 256], sizes = [16, 128], strides = [1, 1]} : vector<16x384xf32> to vector<16x128xf32>
    %267 = vector.extract_strided_slice %249 {offsets = [0, 256], sizes = [16, 128], strides = [1, 1]} : vector<16x384xf32> to vector<16x128xf32>
    %268 = arith.mulf %257, %267 : vector<16x128xf32>
    %269 = arith.addf %266, %268 : vector<16x128xf32>
    %270 = math.tanh %269 : vector<16x128xf32>
    %cst_58 = arith.constant 1.000000e+00 : f32
    %271 = vector.broadcast %cst_58 : f32 to vector<16x128xf32>
    %272 = arith.subf %271, %265 : vector<16x128xf32>
    %273 = arith.mulf %272, %270 : vector<16x128xf32>
    %274 = arith.mulf %265, %242 : vector<16x128xf32>
    %275 = arith.addf %273, %274 : vector<16x128xf32>
    %c8_i32 = arith.constant 8 : i32
    %c16_i32_59 = arith.constant 16 : i32
    %276 = arith.muli %c8_i32, %c16_i32_59 : i32
    %277 = tpu.assume_multiple %276, 16 : i32
    %278 = arith.index_cast %277 : i32 to index
    %c0_60 = arith.constant 0 : index
    %279 = vector.load %arg7[%278, %c0_60] : memref<192x384xf32, #tpu.memory_space<vmem>>, vector<16x384xf32>
    %280 = arith.truncf %275 : vector<16x128xf32> to vector<16x128xbf16>
    %cst_61 = arith.constant dense<0.000000e+00> : vector<16x384xf32>
    %281 = tpu.matmul %280, %10, %cst_61 {dimension_numbers = #tpu.dot_dimension_numbers<[1], [0], [0], [1], [0, 0, 1, 1], [], []>} : vector<16x128xbf16>, vector<128x384xbf16>, vector<16x384xf32> -> vector<16x384xf32>
    %282 = arith.addf %281, %9 : vector<16x384xf32>
    %283 = vector.extract_strided_slice %279 {offsets = [0, 0], sizes = [16, 128], strides = [1, 1]} : vector<16x384xf32> to vector<16x128xf32>
    %284 = vector.extract_strided_slice %282 {offsets = [0, 0], sizes = [16, 128], strides = [1, 1]} : vector<16x384xf32> to vector<16x128xf32>
    %285 = arith.addf %283, %284 : vector<16x128xf32>
    %286 = arith.negf %285 : vector<16x128xf32>
    %287 = math.exp %286 : vector<16x128xf32>
    %cst_62 = arith.constant 1.000000e+00 : f32
    %288 = vector.broadcast %cst_62 : f32 to vector<16x128xf32>
    %289 = arith.addf %288, %287 : vector<16x128xf32>
    %290 = arith.divf %288, %289 : vector<16x128xf32>
    %291 = vector.extract_strided_slice %279 {offsets = [0, 128], sizes = [16, 128], strides = [1, 1]} : vector<16x384xf32> to vector<16x128xf32>
    %292 = vector.extract_strided_slice %282 {offsets = [0, 128], sizes = [16, 128], strides = [1, 1]} : vector<16x384xf32> to vector<16x128xf32>
    %293 = arith.addf %291, %292 : vector<16x128xf32>
    %294 = arith.negf %293 : vector<16x128xf32>
    %295 = math.exp %294 : vector<16x128xf32>
    %cst_63 = arith.constant 1.000000e+00 : f32
    %296 = vector.broadcast %cst_63 : f32 to vector<16x128xf32>
    %297 = arith.addf %296, %295 : vector<16x128xf32>
    %298 = arith.divf %296, %297 : vector<16x128xf32>
    %299 = vector.extract_strided_slice %279 {offsets = [0, 256], sizes = [16, 128], strides = [1, 1]} : vector<16x384xf32> to vector<16x128xf32>
    %300 = vector.extract_strided_slice %282 {offsets = [0, 256], sizes = [16, 128], strides = [1, 1]} : vector<16x384xf32> to vector<16x128xf32>
    %301 = arith.mulf %290, %300 : vector<16x128xf32>
    %302 = arith.addf %299, %301 : vector<16x128xf32>
    %303 = math.tanh %302 : vector<16x128xf32>
    %cst_64 = arith.constant 1.000000e+00 : f32
    %304 = vector.broadcast %cst_64 : f32 to vector<16x128xf32>
    %305 = arith.subf %304, %298 : vector<16x128xf32>
    %306 = arith.mulf %305, %303 : vector<16x128xf32>
    %307 = arith.mulf %298, %275 : vector<16x128xf32>
    %308 = arith.addf %306, %307 : vector<16x128xf32>
    %c9_i32 = arith.constant 9 : i32
    %c16_i32_65 = arith.constant 16 : i32
    %309 = arith.muli %c9_i32, %c16_i32_65 : i32
    %310 = tpu.assume_multiple %309, 16 : i32
    %311 = arith.index_cast %310 : i32 to index
    %c0_66 = arith.constant 0 : index
    %312 = vector.load %arg7[%311, %c0_66] : memref<192x384xf32, #tpu.memory_space<vmem>>, vector<16x384xf32>
    %313 = arith.truncf %308 : vector<16x128xf32> to vector<16x128xbf16>
    %cst_67 = arith.constant dense<0.000000e+00> : vector<16x384xf32>
    %314 = tpu.matmul %313, %10, %cst_67 {dimension_numbers = #tpu.dot_dimension_numbers<[1], [0], [0], [1], [0, 0, 1, 1], [], []>} : vector<16x128xbf16>, vector<128x384xbf16>, vector<16x384xf32> -> vector<16x384xf32>
    %315 = arith.addf %314, %9 : vector<16x384xf32>
    %316 = vector.extract_strided_slice %312 {offsets = [0, 0], sizes = [16, 128], strides = [1, 1]} : vector<16x384xf32> to vector<16x128xf32>
    %317 = vector.extract_strided_slice %315 {offsets = [0, 0], sizes = [16, 128], strides = [1, 1]} : vector<16x384xf32> to vector<16x128xf32>
    %318 = arith.addf %316, %317 : vector<16x128xf32>
    %319 = arith.negf %318 : vector<16x128xf32>
    %320 = math.exp %319 : vector<16x128xf32>
    %cst_68 = arith.constant 1.000000e+00 : f32
    %321 = vector.broadcast %cst_68 : f32 to vector<16x128xf32>
    %322 = arith.addf %321, %320 : vector<16x128xf32>
    %323 = arith.divf %321, %322 : vector<16x128xf32>
    %324 = vector.extract_strided_slice %312 {offsets = [0, 128], sizes = [16, 128], strides = [1, 1]} : vector<16x384xf32> to vector<16x128xf32>
    %325 = vector.extract_strided_slice %315 {offsets = [0, 128], sizes = [16, 128], strides = [1, 1]} : vector<16x384xf32> to vector<16x128xf32>
    %326 = arith.addf %324, %325 : vector<16x128xf32>
    %327 = arith.negf %326 : vector<16x128xf32>
    %328 = math.exp %327 : vector<16x128xf32>
    %cst_69 = arith.constant 1.000000e+00 : f32
    %329 = vector.broadcast %cst_69 : f32 to vector<16x128xf32>
    %330 = arith.addf %329, %328 : vector<16x128xf32>
    %331 = arith.divf %329, %330 : vector<16x128xf32>
    %332 = vector.extract_strided_slice %312 {offsets = [0, 256], sizes = [16, 128], strides = [1, 1]} : vector<16x384xf32> to vector<16x128xf32>
    %333 = vector.extract_strided_slice %315 {offsets = [0, 256], sizes = [16, 128], strides = [1, 1]} : vector<16x384xf32> to vector<16x128xf32>
    %334 = arith.mulf %323, %333 : vector<16x128xf32>
    %335 = arith.addf %332, %334 : vector<16x128xf32>
    %336 = math.tanh %335 : vector<16x128xf32>
    %cst_70 = arith.constant 1.000000e+00 : f32
    %337 = vector.broadcast %cst_70 : f32 to vector<16x128xf32>
    %338 = arith.subf %337, %331 : vector<16x128xf32>
    %339 = arith.mulf %338, %336 : vector<16x128xf32>
    %340 = arith.mulf %331, %308 : vector<16x128xf32>
    %341 = arith.addf %339, %340 : vector<16x128xf32>
    %c10_i32 = arith.constant 10 : i32
    %c16_i32_71 = arith.constant 16 : i32
    %342 = arith.muli %c10_i32, %c16_i32_71 : i32
    %343 = tpu.assume_multiple %342, 16 : i32
    %344 = arith.index_cast %343 : i32 to index
    %c0_72 = arith.constant 0 : index
    %345 = vector.load %arg7[%344, %c0_72] : memref<192x384xf32, #tpu.memory_space<vmem>>, vector<16x384xf32>
    %346 = arith.truncf %341 : vector<16x128xf32> to vector<16x128xbf16>
    %cst_73 = arith.constant dense<0.000000e+00> : vector<16x384xf32>
    %347 = tpu.matmul %346, %10, %cst_73 {dimension_numbers = #tpu.dot_dimension_numbers<[1], [0], [0], [1], [0, 0, 1, 1], [], []>} : vector<16x128xbf16>, vector<128x384xbf16>, vector<16x384xf32> -> vector<16x384xf32>
    %348 = arith.addf %347, %9 : vector<16x384xf32>
    %349 = vector.extract_strided_slice %345 {offsets = [0, 0], sizes = [16, 128], strides = [1, 1]} : vector<16x384xf32> to vector<16x128xf32>
    %350 = vector.extract_strided_slice %348 {offsets = [0, 0], sizes = [16, 128], strides = [1, 1]} : vector<16x384xf32> to vector<16x128xf32>
    %351 = arith.addf %349, %350 : vector<16x128xf32>
    %352 = arith.negf %351 : vector<16x128xf32>
    %353 = math.exp %352 : vector<16x128xf32>
    %cst_74 = arith.constant 1.000000e+00 : f32
    %354 = vector.broadcast %cst_74 : f32 to vector<16x128xf32>
    %355 = arith.addf %354, %353 : vector<16x128xf32>
    %356 = arith.divf %354, %355 : vector<16x128xf32>
    %357 = vector.extract_strided_slice %345 {offsets = [0, 128], sizes = [16, 128], strides = [1, 1]} : vector<16x384xf32> to vector<16x128xf32>
    %358 = vector.extract_strided_slice %348 {offsets = [0, 128], sizes = [16, 128], strides = [1, 1]} : vector<16x384xf32> to vector<16x128xf32>
    %359 = arith.addf %357, %358 : vector<16x128xf32>
    %360 = arith.negf %359 : vector<16x128xf32>
    %361 = math.exp %360 : vector<16x128xf32>
    %cst_75 = arith.constant 1.000000e+00 : f32
    %362 = vector.broadcast %cst_75 : f32 to vector<16x128xf32>
    %363 = arith.addf %362, %361 : vector<16x128xf32>
    %364 = arith.divf %362, %363 : vector<16x128xf32>
    %365 = vector.extract_strided_slice %345 {offsets = [0, 256], sizes = [16, 128], strides = [1, 1]} : vector<16x384xf32> to vector<16x128xf32>
    %366 = vector.extract_strided_slice %348 {offsets = [0, 256], sizes = [16, 128], strides = [1, 1]} : vector<16x384xf32> to vector<16x128xf32>
    %367 = arith.mulf %356, %366 : vector<16x128xf32>
    %368 = arith.addf %365, %367 : vector<16x128xf32>
    %369 = math.tanh %368 : vector<16x128xf32>
    %cst_76 = arith.constant 1.000000e+00 : f32
    %370 = vector.broadcast %cst_76 : f32 to vector<16x128xf32>
    %371 = arith.subf %370, %364 : vector<16x128xf32>
    %372 = arith.mulf %371, %369 : vector<16x128xf32>
    %373 = arith.mulf %364, %341 : vector<16x128xf32>
    %374 = arith.addf %372, %373 : vector<16x128xf32>
    %c11_i32 = arith.constant 11 : i32
    %c16_i32_77 = arith.constant 16 : i32
    %375 = arith.muli %c11_i32, %c16_i32_77 : i32
    %376 = tpu.assume_multiple %375, 16 : i32
    %377 = arith.index_cast %376 : i32 to index
    %c0_78 = arith.constant 0 : index
    %378 = vector.load %arg7[%377, %c0_78] : memref<192x384xf32, #tpu.memory_space<vmem>>, vector<16x384xf32>
    %379 = arith.truncf %374 : vector<16x128xf32> to vector<16x128xbf16>
    %cst_79 = arith.constant dense<0.000000e+00> : vector<16x384xf32>
    %380 = tpu.matmul %379, %10, %cst_79 {dimension_numbers = #tpu.dot_dimension_numbers<[1], [0], [0], [1], [0, 0, 1, 1], [], []>} : vector<16x128xbf16>, vector<128x384xbf16>, vector<16x384xf32> -> vector<16x384xf32>
    %381 = arith.addf %380, %9 : vector<16x384xf32>
    %382 = vector.extract_strided_slice %378 {offsets = [0, 0], sizes = [16, 128], strides = [1, 1]} : vector<16x384xf32> to vector<16x128xf32>
    %383 = vector.extract_strided_slice %381 {offsets = [0, 0], sizes = [16, 128], strides = [1, 1]} : vector<16x384xf32> to vector<16x128xf32>
    %384 = arith.addf %382, %383 : vector<16x128xf32>
    %385 = arith.negf %384 : vector<16x128xf32>
    %386 = math.exp %385 : vector<16x128xf32>
    %cst_80 = arith.constant 1.000000e+00 : f32
    %387 = vector.broadcast %cst_80 : f32 to vector<16x128xf32>
    %388 = arith.addf %387, %386 : vector<16x128xf32>
    %389 = arith.divf %387, %388 : vector<16x128xf32>
    %390 = vector.extract_strided_slice %378 {offsets = [0, 128], sizes = [16, 128], strides = [1, 1]} : vector<16x384xf32> to vector<16x128xf32>
    %391 = vector.extract_strided_slice %381 {offsets = [0, 128], sizes = [16, 128], strides = [1, 1]} : vector<16x384xf32> to vector<16x128xf32>
    %392 = arith.addf %390, %391 : vector<16x128xf32>
    %393 = arith.negf %392 : vector<16x128xf32>
    %394 = math.exp %393 : vector<16x128xf32>
    %cst_81 = arith.constant 1.000000e+00 : f32
    %395 = vector.broadcast %cst_81 : f32 to vector<16x128xf32>
    %396 = arith.addf %395, %394 : vector<16x128xf32>
    %397 = arith.divf %395, %396 : vector<16x128xf32>
    %398 = vector.extract_strided_slice %378 {offsets = [0, 256], sizes = [16, 128], strides = [1, 1]} : vector<16x384xf32> to vector<16x128xf32>
    %399 = vector.extract_strided_slice %381 {offsets = [0, 256], sizes = [16, 128], strides = [1, 1]} : vector<16x384xf32> to vector<16x128xf32>
    %400 = arith.mulf %389, %399 : vector<16x128xf32>
    %401 = arith.addf %398, %400 : vector<16x128xf32>
    %402 = math.tanh %401 : vector<16x128xf32>
    %cst_82 = arith.constant 1.000000e+00 : f32
    %403 = vector.broadcast %cst_82 : f32 to vector<16x128xf32>
    %404 = arith.subf %403, %397 : vector<16x128xf32>
    %405 = arith.mulf %404, %402 : vector<16x128xf32>
    %406 = arith.mulf %397, %374 : vector<16x128xf32>
    %407 = arith.addf %405, %406 : vector<16x128xf32>
    %c12_i32 = arith.constant 12 : i32
    %c0_83 = arith.constant 0 : index
    %c0_84 = arith.constant 0 : index
    %408 = vector.load %arg6[%c0_83, %c0_84] : memref<16x128xf32, #tpu.memory_space<vmem>>, vector<16x128xf32>
    tpu.vector_store %arg6[%c0_83, %c0_84], %407 {strides = array<i32>} : memref<16x128xf32, #tpu.memory_space<vmem>>, vector<16x128xf32>,
    return
  }
  func.func @transform_0(%arg0: i32) -> (i32, i32) {
    %c0_i32 = arith.constant 0 : i32
    %c0_i32_0 = arith.constant 0 : i32
    %c0_i32_1 = arith.constant 0 : i32
    return %c0_i32, %c0_i32_0 : i32, i32
  }
  func.func @transform_1(%arg0: i32) -> (i32, i32) {
    %c0_i32 = arith.constant 0 : i32
    %c0_i32_0 = arith.constant 0 : i32
    %c0_i32_1 = arith.constant 0 : i32
    return %c0_i32, %c0_i32_0 : i32, i32
  }
  func.func @transform_2(%arg0: i32) -> (i32, i32) {
    %c0_i32 = arith.constant 0 : i32
    %c0_i32_0 = arith.constant 0 : i32
    %c0_i32_1 = arith.constant 0 : i32
    return %c0_i32, %c0_i32_0 : i32, i32
  }
  func.func @transform_3(%arg0: i32) -> (i32, i32) {
    %c0_i32 = arith.constant 0 : i32
    %c0_i32_0 = arith.constant 0 : i32
    %c0_i32_1 = arith.constant 0 : i32
    return %c0_i32, %c0_i32_0 : i32, i32
  }
  func.func @transform_4(%arg0: i32) -> (i32, i32) {
    %c0_i32 = arith.constant 0 : i32
    %c0_i32_0 = arith.constant 0 : i32
    %c0_i32_1 = arith.constant 0 : i32
    return %c0_i32, %c0_i32_0 : i32, i32
  }
  func.func @transform_5(%arg0: i32) -> (i32, i32) {
    %c0_i32 = arith.constant 0 : i32
    %c0_i32_0 = arith.constant 0 : i32
    %c0_i32_1 = arith.constant 0 : i32
    return %c0_i32, %c0_i32_0 : i32, i32
  }
}

</mosaic_0001>

<llo_original>
// kernel: tpu_custom_call.1
$region0: #{tpu_custom_call.1}
  #allocation0 [shape = 'u32[]', space=smem, size = 0x4, offset = 0x4, fixed_abs, tag = 'smem constant byte address 0x4 - core index']
  #allocation1 [shape = 'u32[72,128]{1,0:T(1,128)}', space=vmem, size = 0x9000, scoped, tag = 'internal scratch']
  #allocation2 [shape = 'f32[192,384]{1,0:T(8,128)}', space=vmem, size = 0x48000, scoped, tag = 'scratch operand']
  %s0 = inlined_call_operand.hbm [shape: bf16[192,128], index: 0, kind: input, shape index: {}]
  %s1 = inlined_call_operand.hbm [shape: bf16[128,384], index: 1, kind: input, shape index: {}]
  %s2 = inlined_call_operand.hbm [shape: f32[1,384], index: 2, kind: input, shape index: {}]
  %s3 = inlined_call_operand.hbm [shape: bf16[128,384], index: 3, kind: input, shape index: {}]
  %s4 = inlined_call_operand.vmem [shape: f32[1,384], index: 4, kind: input, shape index: {}]
  %s5 = inlined_call_operand.hbm [shape: f32[16,128], index: 5, kind: output, shape index: {}]
  %s6 = sld [smem:[#allocation0]]
  $region46: #{tpu_custom_call.1} parent=0
    _
  %s8 = ssub.s32 1, %s6
  %s9 = scalar_select 0, %s8, %s6
  $region1: #{tpu_custom_call.1} parent=0
    #allocation3 [shape = 'u8[49152]{0}', space=vmem, size = 0xc000, scoped, tag = 'input window, operand 0, single buffered']
    #allocation4 [shape = 's32[1]{0}', space=sflag, size = 0x4, scoped, tag = 'scoped memory for tpu_custom_call.1']
    #allocation5 [shape = 's32[1]{0}', space=sflag, size = 0x4, scoped, tag = 'scoped memory for tpu_custom_call.1']
    #allocation6 [shape = 'u8[98304]{0}', space=vmem, size = 0x18000, scoped, tag = 'input window, operand 1, single buffered']
    #allocation7 [shape = 's32[1]{0}', space=sflag, size = 0x4, scoped, tag = 'scoped memory for tpu_custom_call.1']
    #allocation8 [shape = 'u8[1536]{0}', space=vmem, size = 0x800, scoped, tag = 'input window, operand 2, single buffered']
    #allocation9 [shape = 'u8[98304]{0}', space=vmem, size = 0x18000, scoped, tag = 'input window, operand 3, single buffered']
    #allocation10 [shape = 's32[1]{0}', space=sflag, size = 0x4, scoped, tag = 'scoped memory for tpu_custom_call.1']
    #allocation11 [shape = 'u8[8192]{0}', space=vmem, size = 0x2000, scoped, tag = 'output window, operand 0, single buffered']
    %10 = vsyncpa [#allocation4], 0
    %11 = vsyncpa [#allocation7], 0
    %12 = vsyncpa [#allocation10], 0
    %13 = vsyncpa [#allocation5], 0
    // Predicated region
    $region2: #{tpu_custom_call.1} parent=1 // pred_check
      _
    $region3: #{tpu_custom_call.1} parent=1 // pred_check_branch
      %15 = sbr.rel (0) target = $region5
    $region4: #{tpu_custom_call.1} parent=1 // pred_region
      %17 = vsyncadd [#allocation4], 0
      %s18 = sshll.u32 %s0, 4
      %s19 = int_to_ptr.hbm [resolvable:$true] %s18
      %s20 = sshll.u32 [#allocation3], 4
      %s21 = int_to_ptr.vmem [resolvable:$true] %s20
      %26 = dma.hbm_to_vmem [thread:$0]  %s19, 1536, %s21, [#allocation4], 64, 64, 4
    $region5: #{tpu_custom_call.1} parent=1 // pred_fallthru
      _
    // Predicated region
    $region6: #{tpu_custom_call.1} parent=1 // pred_check
      _
    $region7: #{tpu_custom_call.1} parent=1 // pred_check_branch
      %28 = sbr.rel (0) target = $region9
    $region8: #{tpu_custom_call.1} parent=1 // pred_region
      %30 = vsyncadd [#allocation7], 0
      %s31 = sshll.u32 %s1, 4
      %s32 = int_to_ptr.hbm [resolvable:$true] %s31
      %s33 = sshll.u32 [#allocation6], 4
      %s34 = int_to_ptr.vmem [resolvable:$true] %s33
      %39 = dma.hbm_to_vmem [thread:$0]  %s32, 3072, %s34, [#allocation7], 192, 192, 12
    $region9: #{tpu_custom_call.1} parent=1 // pred_fallthru
      _
    // Predicated region
    $region10: #{tpu_custom_call.1} parent=1 // pred_check
      _
    $region11: #{tpu_custom_call.1} parent=1 // pred_check_branch
      %41 = sbr.rel (0) target = $region13
    $region12: #{tpu_custom_call.1} parent=1 // pred_region
      %43 = vsyncadd [#allocation7], 0
      %s45 = sshll.u32 %s2, 4
      %s46 = int_to_ptr.hbm [resolvable:$true] %s45
      %s47 = sshll.u32 [#allocation8], 4
      %s48 = int_to_ptr.vmem [resolvable:$true] %s47
      %50 = dma.hbm_to_vmem [thread:$0]  %s46, 48, %s48, [#allocation7]
    $region13: #{tpu_custom_call.1} parent=1 // pred_fallthru
      _
    // Predicated region
    $region14: #{tpu_custom_call.1} parent=1 // pred_check
      _
    $region15: #{tpu_custom_call.1} parent=1 // pred_check_branch
      %52 = sbr.rel (0) target = $region17
    $region16: #{tpu_custom_call.1} parent=1 // pred_region
      %54 = vsyncadd [#allocation10], 0
      %s55 = sshll.u32 %s3, 4
      %s56 = int_to_ptr.hbm [resolvable:$true] %s55
      %s57 = sshll.u32 [#allocation9], 4
      %s58 = int_to_ptr.vmem [resolvable:$true] %s57
      %63 = dma.hbm_to_vmem [thread:$0]  %s56, 3072, %s58, [#allocation10], 192, 192, 12
    $region17: #{tpu_custom_call.1} parent=1 // pred_fallthru
      _
    // Predicated region
    $region18: #{tpu_custom_call.1} parent=1 // pred_check
      _
    $region19: #{tpu_custom_call.1} parent=1 // pred_check_branch
      %65 = sbr.rel (0) target = $region21
    $region20: #{tpu_custom_call.1} parent=1 // pred_region
      _
    $region21: #{tpu_custom_call.1} parent=1 // pred_fallthru
      _
    // Predicated region
    $region22: #{tpu_custom_call.1} parent=1 // pred_check
      _
    $region23: #{tpu_custom_call.1} parent=1 // pred_check_branch
      %67 = sbr.rel (0) target = $region25
    $region24: #{tpu_custom_call.1} parent=1 // pred_region
      %69 = dma.done [#allocation4], 1536
    $region25: #{tpu_custom_call.1} parent=1 // pred_fallthru
      _
    // Predicated region
    $region26: #{tpu_custom_call.1} parent=1 // pred_check
      _
    $region27: #{tpu_custom_call.1} parent=1 // pred_check_branch
      %71 = sbr.rel (0) target = $region29
    $region28: #{tpu_custom_call.1} parent=1 // pred_region
      %73 = dma.done [#allocation7], 3072
    $region29: #{tpu_custom_call.1} parent=1 // pred_fallthru
      _
    // Predicated region
    $region30: #{tpu_custom_call.1} parent=1 // pred_check
      _
    $region31: #{tpu_custom_call.1} parent=1 // pred_check_branch
      %75 = sbr.rel (0) target = $region33
    $region32: #{tpu_custom_call.1} parent=1 // pred_region
      %77 = dma.done [#allocation7], 48
    $region33: #{tpu_custom_call.1} parent=1 // pred_fallthru
      _
    // Predicated region
    $region34: #{tpu_custom_call.1} parent=1 // pred_check
      _
    $region35: #{tpu_custom_call.1} parent=1 // pred_check_branch
      %79 = sbr.rel (0) target = $region37
    $region36: #{tpu_custom_call.1} parent=1 // pred_region
      %81 = dma.done [#allocation10], 3072
    $region37: #{tpu_custom_call.1} parent=1 // pred_fallthru
      _
    %v83 = vld [vmem:[#allocation3] sm:$0xf]
    %v84 = vld [vmem:[#allocation3 + $0x4] sm:$0xf]
    %v85 = vld [vmem:[#allocation3 + $0x8] sm:$0xf]
    %v86 = vld [vmem:[#allocation3 + $0xc] sm:$0xf]
    %v87 = vld [vmem:[#allocation3 + $0x10] sm:$0xf]
    %v88 = vld [vmem:[#allocation3 + $0x14] sm:$0xf]
    %v89 = vld [vmem:[#allocation3 + $0x18] sm:$0xf]
    %v90 = vld [vmem:[#allocation3 + $0x1c] sm:$0xf]
    %v91 = vld [vmem:[#allocation3 + $0x20] sm:$0xf]
    %v92 = vld [vmem:[#allocation3 + $0x24] sm:$0xf]
    %v93 = vld [vmem:[#allocation3 + $0x28] sm:$0xf]
    %v94 = vld [vmem:[#allocation3 + $0x2c] sm:$0xf]
    %v95 = vld [vmem:[#allocation3 + $0x30] sm:$0xf]
    %v96 = vld [vmem:[#allocation3 + $0x34] sm:$0xf]
    %v97 = vld [vmem:[#allocation3 + $0x38] sm:$0xf]
    %v98 = vld [vmem:[#allocation3 + $0x3c] sm:$0xf]
    %v99 = vld [vmem:[#allocation3 + $0x40] sm:$0xf]
    %v100 = vld [vmem:[#allocation3 + $0x44] sm:$0xf]
    %v101 = vld [vmem:[#allocation3 + $0x48] sm:$0xf]
    %v102 = vld [vmem:[#allocation3 + $0x4c] sm:$0xf]
    %v103 = vld [vmem:[#allocation3 + $0x50] sm:$0xf]
    %v104 = vld [vmem:[#allocation3 + $0x54] sm:$0xf]
    %v105 = vld [vmem:[#allocation3 + $0x58] sm:$0xf]
    %v106 = vld [vmem:[#allocation3 + $0x5c] sm:$0xf]
    %v107 = vld [vmem:[#allocation6] sm:$0xff]
    %v108 = vld [vmem:[#allocation6 + $0x8] sm:$0xf]
    %v109 = vld [vmem:[#allocation6 + $0xc] sm:$0xff]
    %v110 = vld [vmem:[#allocation6 + $0x14] sm:$0xf]
    %v111 = vld [vmem:[#allocation6 + $0x18] sm:$0xff]
    %v112 = vld [vmem:[#allocation6 + $0x20] sm:$0xf]
    %v113 = vld [vmem:[#allocation6 + $0x24] sm:$0xff]
    %v114 = vld [vmem:[#allocation6 + $0x2c] sm:$0xf]
    %v115 = vld [vmem:[#allocation6 + $0x30] sm:$0xff]
    %v116 = vld [vmem:[#allocation6 + $0x38] sm:$0xf]
    %v117 = vld [vmem:[#allocation6 + $0x3c] sm:$0xff]
    %v118 = vld [vmem:[#allocation6 + $0x44] sm:$0xf]
    %v119 = vld [vmem:[#allocation6 + $0x48] sm:$0xff]
    %v120 = vld [vmem:[#allocation6 + $0x50] sm:$0xf]
    %v121 = vld [vmem:[#allocation6 + $0x54] sm:$0xff]
    %v122 = vld [vmem:[#allocation6 + $0x5c] sm:$0xf]
    %v123 = vld [vmem:[#allocation6 + $0x60] sm:$0xff]
    %v124 = vld [vmem:[#allocation6 + $0x68] sm:$0xf]
    %v125 = vld [vmem:[#allocation6 + $0x6c] sm:$0xff]
    %v126 = vld [vmem:[#allocation6 + $0x74] sm:$0xf]
    %v127 = vld [vmem:[#allocation6 + $0x78] sm:$0xff]
    %v128 = vld [vmem:[#allocation6 + $0x80] sm:$0xf]
    %v129 = vld [vmem:[#allocation6 + $0x84] sm:$0xff]
    %v130 = vld [vmem:[#allocation6 + $0x8c] sm:$0xf]
    %v131 = vld [vmem:[#allocation6 + $0x90] sm:$0xff]
    %v132 = vld [vmem:[#allocation6 + $0x98] sm:$0xf]
    %v133 = vld [vmem:[#allocation6 + $0x9c] sm:$0xff]
    %v134 = vld [vmem:[#allocation6 + $0xa4] sm:$0xf]
    %v135 = vld [vmem:[#allocation6 + $0xa8] sm:$0xff]
    %v136 = vld [vmem:[#allocation6 + $0xb0] sm:$0xf]
    %v137 = vld [vmem:[#allocation6 + $0xb4] sm:$0xff]
    %v138 = vld [vmem:[#allocation6 + $0xbc] sm:$0xf]
    %v139 = vld [vmem:[#allocation8] sm:$0x7]
    %v141 = vperm.slane %v139, 0
    %v142 = vperm.slane %v139, 1
    %v143 = vperm.slane %v139, 2
    %v171 = vunpack.c.l.b16 %v83
    %v172 = vunpack.c.l.b16 %v84
    %v173 = vunpack.c.l.b16 %v85
    %v174 = vunpack.c.l.b16 %v86
    %v175 = vunpack.c.l.b16 %v87
    %v176 = vunpack.c.l.b16 %v88
    %v177 = vunpack.c.l.b16 %v89
    %v178 = vunpack.c.l.b16 %v90
    %v179 = vunpack.c.l.b16 %v91
    %v180 = vunpack.c.l.b16 %v92
    %v181 = vunpack.c.l.b16 %v93
    %v182 = vunpack.c.l.b16 %v94
    %v183 = vunpack.c.l.b16 %v95
    %v184 = vunpack.c.l.b16 %v96
    %v185 = vunpack.c.l.b16 %v97
    %v186 = vunpack.c.l.b16 %v98
    %v187 = vunpack.c.l.b16 %v99
    %v188 = vunpack.c.l.b16 %v100
    %v189 = vunpack.c.l.b16 %v101
    %v190 = vunpack.c.l.b16 %v102
    %v191 = vunpack.c.l.b16 %v103
    %v192 = vunpack.c.l.b16 %v104
    %v193 = vunpack.c.l.b16 %v105
    %v194 = vunpack.c.l.b16 %v106
    %v195 = vpack.c.b16 %v172, %v171
    %v196 = vpack.c.b16 %v174, %v173
    %v197 = vpack.c.b16 %v176, %v175
    %v198 = vpack.c.b16 %v178, %v177
    %v199 = vpack.c.b16 %v180, %v179
    %v200 = vpack.c.b16 %v182, %v181
    %v201 = vpack.c.b16 %v184, %v183
    %v202 = vpack.c.b16 %v186, %v185
    %v203 = vpack.c.b16 %v188, %v187
    %v204 = vpack.c.b16 %v190, %v189
    %v205 = vpack.c.b16 %v192, %v191
    %v206 = vpack.c.b16 %v194, %v193
    %v251 = vunpack.c.l.b16 %v107
    %v252 = vunpack.c.h.b16 %v107
    %v253 = vunpack.c.l.b16 %v108
    %v254 = vunpack.c.l.b16 %v109
    %v255 = vunpack.c.h.b16 %v109
    %v256 = vunpack.c.l.b16 %v110
    %v257 = vunpack.c.l.b16 %v111
    %v258 = vunpack.c.h.b16 %v111
    %v259 = vunpack.c.l.b16 %v112
    %v260 = vunpack.c.l.b16 %v113
    %v261 = vunpack.c.h.b16 %v113
    %v262 = vunpack.c.l.b16 %v114
    %v263 = vunpack.c.l.b16 %v115
    %v264 = vunpack.c.h.b16 %v115
    %v265 = vunpack.c.l.b16 %v116
    %v266 = vunpack.c.l.b16 %v117
    %v267 = vunpack.c.h.b16 %v117
    %v268 = vunpack.c.l.b16 %v118
    %v269 = vunpack.c.l.b16 %v119
    %v270 = vunpack.c.h.b16 %v119
    %v271 = vunpack.c.l.b16 %v120
    %v272 = vunpack.c.l.b16 %v121
    %v273 = vunpack.c.h.b16 %v121
    %v274 = vunpack.c.l.b16 %v122
    %v275 = vunpack.c.l.b16 %v123
    %v276 = vunpack.c.h.b16 %v123
    %v277 = vunpack.c.l.b16 %v124
    %v278 = vunpack.c.l.b16 %v125
    %v279 = vunpack.c.h.b16 %v125
    %v280 = vunpack.c.l.b16 %v126
    %v281 = vunpack.c.l.b16 %v127
    %v282 = vunpack.c.h.b16 %v127
    %v283 = vunpack.c.l.b16 %v128
    %v284 = vunpack.c.l.b16 %v129
    %v285 = vunpack.c.h.b16 %v129
    %v286 = vunpack.c.l.b16 %v130
    %v287 = vunpack.c.l.b16 %v131
    %v288 = vunpack.c.h.b16 %v131
    %v289 = vunpack.c.l.b16 %v132
    %v290 = vunpack.c.l.b16 %v133
    %v291 = vunpack.c.h.b16 %v133
    %v292 = vunpack.c.l.b16 %v134
    %v293 = vunpack.c.l.b16 %v135
    %v294 = vunpack.c.h.b16 %v135
    %v295 = vunpack.c.l.b16 %v136
    %v296 = vunpack.c.l.b16 %v137
    %v297 = vunpack.c.h.b16 %v137
    %v298 = vunpack.c.l.b16 %v138
    %v299 = vpack.c.b16 %v254, %v251
    %v300 = vpack.c.b16 %v255, %v252
    %v301 = vpack.c.b16 %v256, %v253
    %v302 = vpack.c.b16 %v260, %v257
    %v303 = vpack.c.b16 %v261, %v258
    %v304 = vpack.c.b16 %v262, %v259
    %v305 = vpack.c.b16 %v266, %v263
    %v306 = vpack.c.b16 %v267, %v264
    %v307 = vpack.c.b16 %v268, %v265
    %v308 = vpack.c.b16 %v272, %v269
    %v309 = vpack.c.b16 %v273, %v270
    %v310 = vpack.c.b16 %v274, %v271
    %v311 = vpack.c.b16 %v278, %v275
    %v312 = vpack.c.b16 %v279, %v276
    %v313 = vpack.c.b16 %v280, %v277
    %v314 = vpack.c.b16 %v284, %v281
    %v315 = vpack.c.b16 %v285, %v282
    %v316 = vpack.c.b16 %v286, %v283
    %v317 = vpack.c.b16 %v290, %v287
    %v318 = vpack.c.b16 %v291, %v288
    %v319 = vpack.c.b16 %v292, %v289
    %v320 = vpack.c.b16 %v296, %v293
    %v321 = vpack.c.b16 %v297, %v294
    %v322 = vpack.c.b16 %v298, %v295
    %347 = vmatpush.bf16.msra.mxu0 %v320
    %348 = vmatpush.bf16.msra.mxu0 %v317
    %349 = vmatpush.bf16.msra.mxu0 %v314
    %350 = vmatpush.bf16.msra.mxu0 %v311
    %351 = vmatpush.bf16.msra.mxu0 %v308
    %352 = vmatpush.bf16.msra.mxu0 %v305
    %353 = vmatpush.bf16.msra.mxu0 %v302
    %354 = vmatpush.bf16.msra.mxu0 %v299
    %355 = vmatmul.bf16.gmra.mxu0 %v195
    %v356 = vpop.f32.mrf.mxu0
    %v357 = vadd.f32 %v141, %v356
    %v358 = vpop.f32.mrf.mxu0
    %v359 = vadd.f32 %v141, %v358
    %360 = vmatmul.bf16.gmra.mxu0 %v196
    %v361 = vpop.f32.mrf.mxu0
    %v362 = vadd.f32 %v141, %v361
    %v363 = vpop.f32.mrf.mxu0
    %v364 = vadd.f32 %v141, %v363
    %365 = vmatmul.bf16.gmra.mxu0 %v197
    %v366 = vpop.f32.mrf.mxu0
    %v367 = vadd.f32 %v141, %v366
    %v368 = vpop.f32.mrf.mxu0
    %v369 = vadd.f32 %v141, %v368
    %370 = vmatmul.bf16.gmra.mxu0 %v198
    %v371 = vpop.f32.mrf.mxu0
    %v372 = vadd.f32 %v141, %v371
    %v373 = vpop.f32.mrf.mxu0
    %v374 = vadd.f32 %v141, %v373
    %375 = vmatmul.bf16.gmra.mxu0 %v199
    %v376 = vpop.f32.mrf.mxu0
    %v377 = vadd.f32 %v141, %v376
    %v378 = vpop.f32.mrf.mxu0
    %v379 = vadd.f32 %v141, %v378
    %380 = vmatmul.bf16.gmra.mxu0 %v200
    %v381 = vpop.f32.mrf.mxu0
    %v382 = vadd.f32 %v141, %v381
    %v383 = vpop.f32.mrf.mxu0
    %v384 = vadd.f32 %v141, %v383
    %385 = vmatmul.bf16.gmra.mxu0 %v201
    %v386 = vpop.f32.mrf.mxu0
    %v387 = vadd.f32 %v141, %v386
    %v388 = vpop.f32.mrf.mxu0
    %v389 = vadd.f32 %v141, %v388
    %390 = vmatmul.bf16.gmra.mxu0 %v202
    %v391 = vpop.f32.mrf.mxu0
    %v392 = vadd.f32 %v141, %v391
    %v393 = vpop.f32.mrf.mxu0
    %v394 = vadd.f32 %v141, %v393
    %395 = vmatmul.bf16.gmra.mxu0 %v203
    %v396 = vpop.f32.mrf.mxu0
    %v397 = vadd.f32 %v141, %v396
    %v398 = vpop.f32.mrf.mxu0
    %v399 = vadd.f32 %v141, %v398
    %400 = vmatmul.bf16.gmra.mxu0 %v204
    %v401 = vpop.f32.mrf.mxu0
    %v402 = vadd.f32 %v141, %v401
    %v403 = vpop.f32.mrf.mxu0
    %v404 = vadd.f32 %v141, %v403
    %405 = vmatmul.bf16.gmra.mxu0 %v205
    %v406 = vpop.f32.mrf.mxu0
    %v407 = vadd.f32 %v141, %v406
    %v408 = vpop.f32.mrf.mxu0
    %v409 = vadd.f32 %v141, %v408
    %410 = vmatmul.bf16.gmra.mxu0 %v206
    %v411 = vpop.f32.mrf.mxu0
    %v412 = vadd.f32 %v141, %v411
    %v413 = vpop.f32.mrf.mxu0
    %v414 = vadd.f32 %v141, %v413
    %415 = vdwg.mxu0
    %416 = vmatpush.bf16.msra.mxu0 %v321
    %417 = vmatpush.bf16.msra.mxu0 %v318
    %418 = vmatpush.bf16.msra.mxu0 %v315
    %419 = vmatpush.bf16.msra.mxu0 %v312
    %420 = vmatpush.bf16.msra.mxu0 %v309
    %421 = vmatpush.bf16.msra.mxu0 %v306
    %422 = vmatpush.bf16.msra.mxu0 %v303
    %423 = vmatpush.bf16.msra.mxu0 %v300
    %424 = vmatmul.bf16.gmra.mxu0 %v195
    %v425 = vpop.f32.mrf.mxu0
    %v426 = vadd.f32 %v142, %v425
    %v427 = vpop.f32.mrf.mxu0
    %v428 = vadd.f32 %v142, %v427
    %429 = vmatmul.bf16.gmra.mxu0 %v196
    %v430 = vpop.f32.mrf.mxu0
    %v431 = vadd.f32 %v142, %v430
    %v432 = vpop.f32.mrf.mxu0
    %v433 = vadd.f32 %v142, %v432
    %434 = vmatmul.bf16.gmra.mxu0 %v197
    %v435 = vpop.f32.mrf.mxu0
    %v436 = vadd.f32 %v142, %v435
    %v437 = vpop.f32.mrf.mxu0
    %v438 = vadd.f32 %v142, %v437
    %439 = vmatmul.bf16.gmra.mxu0 %v198
    %v440 = vpop.f32.mrf.mxu0
    %v441 = vadd.f32 %v142, %v440
    %v442 = vpop.f32.mrf.mxu0
    %v443 = vadd.f32 %v142, %v442
    %444 = vmatmul.bf16.gmra.mxu0 %v199
    %v445 = vpop.f32.mrf.mxu0
    %v446 = vadd.f32 %v142, %v445
    %v447 = vpop.f32.mrf.mxu0
    %v448 = vadd.f32 %v142, %v447
    %449 = vmatmul.bf16.gmra.mxu0 %v200
    %v450 = vpop.f32.mrf.mxu0
    %v451 = vadd.f32 %v142, %v450
    %v452 = vpop.f32.mrf.mxu0
    %v453 = vadd.f32 %v142, %v452
    %454 = vmatmul.bf16.gmra.mxu0 %v201
    %v455 = vpop.f32.mrf.mxu0
    %v456 = vadd.f32 %v142, %v455
    %v457 = vpop.f32.mrf.mxu0
    %v458 = vadd.f32 %v142, %v457
    %459 = vmatmul.bf16.gmra.mxu0 %v202
    %v460 = vpop.f32.mrf.mxu0
    %v461 = vadd.f32 %v142, %v460
    %v462 = vpop.f32.mrf.mxu0
    %v463 = vadd.f32 %v142, %v462
    %464 = vmatmul.bf16.gmra.mxu0 %v203
    %v465 = vpop.f32.mrf.mxu0
    %v466 = vadd.f32 %v142, %v465
    %v467 = vpop.f32.mrf.mxu0
    %v468 = vadd.f32 %v142, %v467
    %469 = vmatmul.bf16.gmra.mxu0 %v204
    %v470 = vpop.f32.mrf.mxu0
    %v471 = vadd.f32 %v142, %v470
    %v472 = vpop.f32.mrf.mxu0
    %v473 = vadd.f32 %v142, %v472
    %474 = vmatmul.bf16.gmra.mxu0 %v205
    %v475 = vpop.f32.mrf.mxu0
    %v476 = vadd.f32 %v142, %v475
    %v477 = vpop.f32.mrf.mxu0
    %v478 = vadd.f32 %v142, %v477
    %479 = vmatmul.bf16.gmra.mxu0 %v206
    %v480 = vpop.f32.mrf.mxu0
    %v481 = vadd.f32 %v142, %v480
    %v482 = vpop.f32.mrf.mxu0
    %v483 = vadd.f32 %v142, %v482
    %484 = vdwg.mxu0
    %485 = vmatpush.bf16.msra.mxu0 %v322
    %486 = vmatpush.bf16.msra.mxu0 %v319
    %487 = vmatpush.bf16.msra.mxu0 %v316
    %488 = vmatpush.bf16.msra.mxu0 %v313
    %489 = vmatpush.bf16.msra.mxu0 %v310
    %490 = vmatpush.bf16.msra.mxu0 %v307
    %491 = vmatpush.bf16.msra.mxu0 %v304
    %492 = vmatpush.bf16.msra.mxu0 %v301
    %493 = vmatmul.bf16.gmra.mxu0 %v195
    %v494 = vpop.f32.mrf.mxu0
    %v495 = vadd.f32 %v143, %v494
    %v496 = vpop.f32.mrf.mxu0
    %v497 = vadd.f32 %v143, %v496
    %498 = vmatmul.bf16.gmra.mxu0 %v196
    %v499 = vpop.f32.mrf.mxu0
    %v500 = vadd.f32 %v143, %v499
    %v501 = vpop.f32.mrf.mxu0
    %v502 = vadd.f32 %v143, %v501
    %503 = vmatmul.bf16.gmra.mxu0 %v197
    %v504 = vpop.f32.mrf.mxu0
    %v505 = vadd.f32 %v143, %v504
    %v506 = vpop.f32.mrf.mxu0
    %v507 = vadd.f32 %v143, %v506
    %508 = vmatmul.bf16.gmra.mxu0 %v198
    %v509 = vpop.f32.mrf.mxu0
    %v510 = vadd.f32 %v143, %v509
    %v511 = vpop.f32.mrf.mxu0
    %v512 = vadd.f32 %v143, %v511
    %513 = vmatmul.bf16.gmra.mxu0 %v199
    %v514 = vpop.f32.mrf.mxu0
    %v515 = vadd.f32 %v143, %v514
    %v516 = vpop.f32.mrf.mxu0
    %v517 = vadd.f32 %v143, %v516
    %518 = vmatmul.bf16.gmra.mxu0 %v200
    %v519 = vpop.f32.mrf.mxu0
    %v520 = vadd.f32 %v143, %v519
    %v521 = vpop.f32.mrf.mxu0
    %v522 = vadd.f32 %v143, %v521
    %523 = vmatmul.bf16.gmra.mxu0 %v201
    %v524 = vpop.f32.mrf.mxu0
    %v525 = vadd.f32 %v143, %v524
    %v526 = vpop.f32.mrf.mxu0
    %v527 = vadd.f32 %v143, %v526
    %528 = vmatmul.bf16.gmra.mxu0 %v202
    %v529 = vpop.f32.mrf.mxu0
    %v530 = vadd.f32 %v143, %v529
    %v531 = vpop.f32.mrf.mxu0
    %v532 = vadd.f32 %v143, %v531
    %533 = vmatmul.bf16.gmra.mxu0 %v203
    %v534 = vpop.f32.mrf.mxu0
    %v535 = vadd.f32 %v143, %v534
    %v536 = vpop.f32.mrf.mxu0
    %v537 = vadd.f32 %v143, %v536
    %538 = vmatmul.bf16.gmra.mxu0 %v204
    %v539 = vpop.f32.mrf.mxu0
    %v540 = vadd.f32 %v143, %v539
    %v541 = vpop.f32.mrf.mxu0
    %v542 = vadd.f32 %v143, %v541
    %543 = vmatmul.bf16.gmra.mxu0 %v205
    %v544 = vpop.f32.mrf.mxu0
    %v545 = vadd.f32 %v143, %v544
    %v546 = vpop.f32.mrf.mxu0
    %v547 = vadd.f32 %v143, %v546
    %548 = vmatmul.bf16.gmra.mxu0 %v206
    %v549 = vpop.f32.mrf.mxu0
    %v550 = vadd.f32 %v143, %v549
    %v551 = vpop.f32.mrf.mxu0
    %v552 = vadd.f32 %v143, %v551
    %553 = vdwg.mxu0
    %554 = vst [vmem:[#allocation2] sm:$0xff] %v357
    %555 = vst [vmem:[#allocation2 + $0x8] sm:$0xff] %v426
    %556 = vst [vmem:[#allocation2 + $0x10] sm:$0xff] %v495
    %557 = vst [vmem:[#allocation2 + $0x18] sm:$0xff] %v359
    %558 = vst [vmem:[#allocation2 + $0x20] sm:$0xff] %v428
    %559 = vst [vmem:[#allocation2 + $0x28] sm:$0xff] %v497
    %560 = vst [vmem:[#allocation2 + $0x30] sm:$0xff] %v362
    %561 = vst [vmem:[#allocation2 + $0x38] sm:$0xff] %v431
    %562 = vst [vmem:[#allocation2 + $0x40] sm:$0xff] %v500
    %563 = vst [vmem:[#allocation2 + $0x48] sm:$0xff] %v364
    %564 = vst [vmem:[#allocation2 + $0x50] sm:$0xff] %v433
    %565 = vst [vmem:[#allocation2 + $0x58] sm:$0xff] %v502
    %566 = vst [vmem:[#allocation2 + $0x60] sm:$0xff] %v367
    %567 = vst [vmem:[#allocation2 + $0x68] sm:$0xff] %v436
    %568 = vst [vmem:[#allocation2 + $0x70] sm:$0xff] %v505
    %569 = vst [vmem:[#allocation2 + $0x78] sm:$0xff] %v369
    %570 = vst [vmem:[#allocation2 + $0x80] sm:$0xff] %v438
    %571 = vst [vmem:[#allocation2 + $0x88] sm:$0xff] %v507
    %572 = vst [vmem:[#allocation2 + $0x90] sm:$0xff] %v372
    %573 = vst [vmem:[#allocation2 + $0x98] sm:$0xff] %v441
    %574 = vst [vmem:[#allocation2 + $0xa0] sm:$0xff] %v510
    %575 = vst [vmem:[#allocation2 + $0xa8] sm:$0xff] %v374
    %576 = vst [vmem:[#allocation2 + $0xb0] sm:$0xff] %v443
    %577 = vst [vmem:[#allocation2 + $0xb8] sm:$0xff] %v512
    %578 = vst [vmem:[#allocation2 + $0xc0] sm:$0xff] %v377
    %579 = vst [vmem:[#allocation2 + $0xc8] sm:$0xff] %v446
    %580 = vst [vmem:[#allocation2 + $0xd0] sm:$0xff] %v515
    %581 = vst [vmem:[#allocation2 + $0xd8] sm:$0xff] %v379
    %582 = vst [vmem:[#allocation2 + $0xe0] sm:$0xff] %v448
    %583 = vst [vmem:[#allocation2 + $0xe8] sm:$0xff] %v517
    %584 = vst [vmem:[#allocation2 + $0xf0] sm:$0xff] %v382
    %585 = vst [vmem:[#allocation2 + $0xf8] sm:$0xff] %v451
    %586 = vst [vmem:[#allocation2 + $0x100] sm:$0xff] %v520
    %587 = vst [vmem:[#allocation2 + $0x108] sm:$0xff] %v384
    %588 = vst [vmem:[#allocation2 + $0x110] sm:$0xff] %v453
    %589 = vst [vmem:[#allocation2 + $0x118] sm:$0xff] %v522
    %590 = vst [vmem:[#allocation2 + $0x120] sm:$0xff] %v387
    %591 = vst [vmem:[#allocation2 + $0x128] sm:$0xff] %v456
    %592 = vst [vmem:[#allocation2 + $0x130] sm:$0xff] %v525
    %593 = vst [vmem:[#allocation2 + $0x138] sm:$0xff] %v389
    %594 = vst [vmem:[#allocation2 + $0x140] sm:$0xff] %v458
    %595 = vst [vmem:[#allocation2 + $0x148] sm:$0xff] %v527
    %596 = vst [vmem:[#allocation2 + $0x150] sm:$0xff] %v392
    %597 = vst [vmem:[#allocation2 + $0x158] sm:$0xff] %v461
    %598 = vst [vmem:[#allocation2 + $0x160] sm:$0xff] %v530
    %599 = vst [vmem:[#allocation2 + $0x168] sm:$0xff] %v394
    %600 = vst [vmem:[#allocation2 + $0x170] sm:$0xff] %v463
    %601 = vst [vmem:[#allocation2 + $0x178] sm:$0xff] %v532
    %602 = vst [vmem:[#allocation2 + $0x180] sm:$0xff] %v397
    %603 = vst [vmem:[#allocation2 + $0x188] sm:$0xff] %v466
    %604 = vst [vmem:[#allocation2 + $0x190] sm:$0xff] %v535
    %605 = vst [vmem:[#allocation2 + $0x198] sm:$0xff] %v399
    %606 = vst [vmem:[#allocation2 + $0x1a0] sm:$0xff] %v468
    %607 = vst [vmem:[#allocation2 + $0x1a8] sm:$0xff] %v537
    %608 = vst [vmem:[#allocation2 + $0x1b0] sm:$0xff] %v402
    %609 = vst [vmem:[#allocation2 + $0x1b8] sm:$0xff] %v471
    %610 = vst [vmem:[#allocation2 + $0x1c0] sm:$0xff] %v540
    %611 = vst [vmem:[#allocation2 + $0x1c8] sm:$0xff] %v404
    %612 = vst [vmem:[#allocation2 + $0x1d0] sm:$0xff] %v473
    %613 = vst [vmem:[#allocation2 + $0x1d8] sm:$0xff] %v542
    %614 = vst [vmem:[#allocation2 + $0x1e0] sm:$0xff] %v407
    %615 = vst [vmem:[#allocation2 + $0x1e8] sm:$0xff] %v476
    %616 = vst [vmem:[#allocation2 + $0x1f0] sm:$0xff] %v545
    %617 = vst [vmem:[#allocation2 + $0x1f8] sm:$0xff] %v409
    %618 = vst [vmem:[#allocation2 + $0x200] sm:$0xff] %v478
    %619 = vst [vmem:[#allocation2 + $0x208] sm:$0xff] %v547
    %620 = vst [vmem:[#allocation2 + $0x210] sm:$0xff] %v412
    %621 = vst [vmem:[#allocation2 + $0x218] sm:$0xff] %v481
    %622 = vst [vmem:[#allocation2 + $0x220] sm:$0xff] %v550
    %623 = vst [vmem:[#allocation2 + $0x228] sm:$0xff] %v414
    %624 = vst [vmem:[#allocation2 + $0x230] sm:$0xff] %v483
    %625 = vst [vmem:[#allocation2 + $0x238] sm:$0xff] %v552
    %v626 = vld [vmem:[%s4] sm:$0x7]
    %v628 = vperm.slane %v626, 0
    %v629 = vperm.slane %v626, 1
    %v630 = vperm.slane %v626, 2
    %v634 = vld [vmem:[#allocation9] sm:$0xff]
    %v635 = vld [vmem:[#allocation9 + $0x8] sm:$0xf]
    %v636 = vld [vmem:[#allocation9 + $0xc] sm:$0xff]
    %v637 = vld [vmem:[#allocation9 + $0x14] sm:$0xf]
    %v638 = vld [vmem:[#allocation9 + $0x18] sm:$0xff]
    %v639 = vld [vmem:[#allocation9 + $0x20] sm:$0xf]
    %v640 = vld [vmem:[#allocation9 + $0x24] sm:$0xff]
    %v641 = vld [vmem:[#allocation9 + $0x2c] sm:$0xf]
    %v642 = vld [vmem:[#allocation9 + $0x30] sm:$0xff]
    %v643 = vld [vmem:[#allocation9 + $0x38] sm:$0xf]
    %v644 = vld [vmem:[#allocation9 + $0x3c] sm:$0xff]
    %v645 = vld [vmem:[#allocation9 + $0x44] sm:$0xf]
    %v646 = vld [vmem:[#allocation9 + $0x48] sm:$0xff]
    %v647 = vld [vmem:[#allocation9 + $0x50] sm:$0xf]
    %v648 = vld [vmem:[#allocation9 + $0x54] sm:$0xff]
    %v649 = vld [vmem:[#allocation9 + $0x5c] sm:$0xf]
    %v650 = vld [vmem:[#allocation9 + $0x60] sm:$0xff]
    %v651 = vld [vmem:[#allocation9 + $0x68] sm:$0xf]
    %v652 = vld [vmem:[#allocation9 + $0x6c] sm:$0xff]
    %v653 = vld [vmem:[#allocation9 + $0x74] sm:$0xf]
    %v654 = vld [vmem:[#allocation9 + $0x78] sm:$0xff]
    %v655 = vld [vmem:[#allocation9 + $0x80] sm:$0xf]
    %v656 = vld [vmem:[#allocation9 + $0x84] sm:$0xff]
    %v657 = vld [vmem:[#allocation9 + $0x8c] sm:$0xf]
    %v658 = vld [vmem:[#allocation9 + $0x90] sm:$0xff]
    %v659 = vld [vmem:[#allocation9 + $0x98] sm:$0xf]
    %v660 = vld [vmem:[#allocation9 + $0x9c] sm:$0xff]
    %v661 = vld [vmem:[#allocation9 + $0xa4] sm:$0xf]
    %v662 = vld [vmem:[#allocation9 + $0xa8] sm:$0xff]
    %v663 = vld [vmem:[#allocation9 + $0xb0] sm:$0xf]
    %v664 = vld [vmem:[#allocation9 + $0xb4] sm:$0xff]
    %v665 = vld [vmem:[#allocation9 + $0xbc] sm:$0xf]
    %s666 = smul.u32 0, 3
    %s667 = smul.addr %s666, 8
    %s668 = scalar_lea.vmem [#allocation2], %s667
    %v669 = vld [vmem:[%s668] sm:$0xff]
    %v670 = vld [vmem:[%s668 + $0x8] sm:$0xff]
    %v671 = vld [vmem:[%s668 + $0x10] sm:$0xff]
    %v672 = vld [vmem:[%s668 + $0x18] sm:$0xff]
    %v673 = vld [vmem:[%s668 + $0x20] sm:$0xff]
    %v674 = vld [vmem:[%s668 + $0x28] sm:$0xff]
    %v707 = vunpack.c.l.b16 %v634
    %v708 = vunpack.c.h.b16 %v634
    %v709 = vunpack.c.l.b16 %v635
    %v710 = vunpack.c.l.b16 %v636
    %v711 = vunpack.c.h.b16 %v636
    %v712 = vunpack.c.l.b16 %v637
    %v713 = vunpack.c.l.b16 %v638
    %v714 = vunpack.c.h.b16 %v638
    %v715 = vunpack.c.l.b16 %v639
    %v716 = vunpack.c.l.b16 %v640
    %v717 = vunpack.c.h.b16 %v640
    %v718 = vunpack.c.l.b16 %v641
    %v719 = vunpack.c.l.b16 %v642
    %v720 = vunpack.c.h.b16 %v642
    %v721 = vunpack.c.l.b16 %v643
    %v722 = vunpack.c.l.b16 %v644
    %v723 = vunpack.c.h.b16 %v644
    %v724 = vunpack.c.l.b16 %v645
    %v725 = vunpack.c.l.b16 %v646
    %v726 = vunpack.c.h.b16 %v646
    %v727 = vunpack.c.l.b16 %v647
    %v728 = vunpack.c.l.b16 %v648
    %v729 = vunpack.c.h.b16 %v648
    %v730 = vunpack.c.l.b16 %v649
    %v731 = vunpack.c.l.b16 %v650
    %v732 = vunpack.c.h.b16 %v650
    %v733 = vunpack.c.l.b16 %v651
    %v734 = vunpack.c.l.b16 %v652
    %v735 = vunpack.c.h.b16 %v652
    %v736 = vunpack.c.l.b16 %v653
    %v737 = vunpack.c.l.b16 %v654
    %v738 = vunpack.c.h.b16 %v654
    %v739 = vunpack.c.l.b16 %v655
    %v740 = vunpack.c.l.b16 %v656
    %v741 = vunpack.c.h.b16 %v656
    %v742 = vunpack.c.l.b16 %v657
    %v743 = vunpack.c.l.b16 %v658
    %v744 = vunpack.c.h.b16 %v658
    %v745 = vunpack.c.l.b16 %v659
    %v746 = vunpack.c.l.b16 %v660
    %v747 = vunpack.c.h.b16 %v660
    %v748 = vunpack.c.l.b16 %v661
    %v749 = vunpack.c.l.b16 %v662
    %v750 = vunpack.c.h.b16 %v662
    %v751 = vunpack.c.l.b16 %v663
    %v752 = vunpack.c.l.b16 %v664
    %v753 = vunpack.c.h.b16 %v664
    %v754 = vunpack.c.l.b16 %v665
    %v755 = vpack.c.b16 %v710, %v707
    %v756 = vpack.c.b16 %v711, %v708
    %v757 = vpack.c.b16 %v712, %v709
    %v758 = vpack.c.b16 %v716, %v713
    %v759 = vpack.c.b16 %v717, %v714
    %v760 = vpack.c.b16 %v718, %v715
    %v761 = vpack.c.b16 %v722, %v719
    %v762 = vpack.c.b16 %v723, %v720
    %v763 = vpack.c.b16 %v724, %v721
    %v764 = vpack.c.b16 %v728, %v725
    %v765 = vpack.c.b16 %v729, %v726
    %v766 = vpack.c.b16 %v730, %v727
    %v767 = vpack.c.b16 %v734, %v731
    %v768 = vpack.c.b16 %v735, %v732
    %v769 = vpack.c.b16 %v736, %v733
    %v770 = vpack.c.b16 %v740, %v737
    %v771 = vpack.c.b16 %v741, %v738
    %v772 = vpack.c.b16 %v742, %v739
    %v773 = vpack.c.b16 %v746, %v743
    %v774 = vpack.c.b16 %v747, %v744
    %v775 = vpack.c.b16 %v748, %v745
    %v776 = vpack.c.b16 %v752, %v749
    %v777 = vpack.c.b16 %v753, %v750
    %v778 = vpack.c.b16 %v754, %v751
    %803 = vmatpush.bf16.msra.mxu0 %v776
    %804 = vmatpush.bf16.msra.mxu0 %v773
    %805 = vmatpush.bf16.msra.mxu0 %v770
    %806 = vmatpush.bf16.msra.mxu0 %v767
    %807 = vmatpush.bf16.msra.mxu0 %v764
    %808 = vmatpush.bf16.msra.mxu0 %v761
    %809 = vmatpush.bf16.msra.mxu0 %v758
    %810 = vmatpush.bf16.msra.mxu0 %v755
    %811 = vmatmul.bf16.gmra.mxu0 0
    %v812 = vpop.f32.mrf.mxu0
    %v813 = vadd.f32 %v628, %v812
    %v814 = vpop.f32.mrf.mxu0
    %v815 = vadd.f32 %v628, %v814
    %816 = vdwg.mxu0
    %817 = vmatpush.bf16.msra.mxu0 %v777
    %818 = vmatpush.bf16.msra.mxu0 %v774
    %819 = vmatpush.bf16.msra.mxu0 %v771
    %820 = vmatpush.bf16.msra.mxu0 %v768
    %821 = vmatpush.bf16.msra.mxu0 %v765
    %822 = vmatpush.bf16.msra.mxu0 %v762
    %823 = vmatpush.bf16.msra.mxu0 %v759
    %824 = vmatpush.bf16.msra.mxu0 %v756
    %825 = vmatmul.bf16.gmra.mxu0 0
    %v826 = vpop.f32.mrf.mxu0
    %v827 = vadd.f32 %v629, %v826
    %v828 = vpop.f32.mrf.mxu0
    %v829 = vadd.f32 %v629, %v828
    %830 = vdwg.mxu0
    %831 = vmatpush.bf16.msra.mxu0 %v778
    %832 = vmatpush.bf16.msra.mxu0 %v775
    %833 = vmatpush.bf16.msra.mxu0 %v772
    %834 = vmatpush.bf16.msra.mxu0 %v769
    %835 = vmatpush.bf16.msra.mxu0 %v766
    %836 = vmatpush.bf16.msra.mxu0 %v763
    %837 = vmatpush.bf16.msra.mxu0 %v760
    %838 = vmatpush.bf16.msra.mxu0 %v757
    %839 = vmatmul.bf16.gmra.mxu0 0
    %v840 = vpop.f32.mrf.mxu0
    %v841 = vadd.f32 %v630, %v840
    %v842 = vpop.f32.mrf.mxu0
    %v843 = vadd.f32 %v630, %v842
    %844 = vdwg.mxu0
    %v845 = vadd.f32 %v669, %v813
    %v846 = vadd.f32 %v672, %v815
    %v847 = vxor.u32 %v845, 2147483648
    %v848 = vxor.u32 %v846, 2147483648
    %v849 = vmul.f32 %v847, 1.442695
    %v850 = vpow.pop %v849
    %v851 = vmul.f32 %v848, 1.442695
    %v852 = vpow.pop %v851
    %v853 = vadd.f32 %v850, 1.0
    %v854 = vadd.f32 %v852, 1.0
    %v855 = vrcp.pop %v853
    %v856 = vmul.f32 %v853, %v855
    %v857 = vsub.f32 1.0, %v856
    %v858 = vmul.f32 %v855, %v857
    %v859 = vadd.f32 %v855, %v858
    %vm860 = vweird.f32 %v853
    %vm861 = vweird.f32 %v855
    %vm862 = vmor %vm860, %vm861
    %v863 = vsel %vm862, %v855, %v859
    %v864 = vand.u32 2147483647, %v853
    %vm865 = vcmp.eq.f32.partialorder %v864, 8.507059e+37
    %v866 = vand.u32 %v853, 2147483648
    %v867 = vor.u32 1.1754944e-38, %v866
    %v868 = vsel %vm865, %v867, %v863
    %v869 = vmul.f32 1.0, %v868
    %v870 = vrcp.pop %v854
    %v871 = vmul.f32 %v854, %v870
    %v872 = vsub.f32 1.0, %v871
    %v873 = vmul.f32 %v870, %v872
    %v874 = vadd.f32 %v870, %v873
    %vm875 = vweird.f32 %v854
    %vm876 = vweird.f32 %v870
    %vm877 = vmor %vm875, %vm876
    %v878 = vsel %vm877, %v870, %v874
    %v879 = vand.u32 2147483647, %v854
    %vm880 = vcmp.eq.f32.partialorder %v879, 8.507059e+37
    %v881 = vand.u32 %v854, 2147483648
    %v882 = vor.u32 1.1754944e-38, %v881
    %v883 = vsel %vm880, %v882, %v878
    %v884 = vmul.f32 1.0, %v883
    %v885 = vadd.f32 %v670, %v827
    %v886 = vadd.f32 %v673, %v829
    %v887 = vxor.u32 %v885, 2147483648
    %v888 = vxor.u32 %v886, 2147483648
    %v889 = vmul.f32 %v887, 1.442695
    %v890 = vpow.pop %v889
    %v891 = vmul.f32 %v888, 1.442695
    %v892 = vpow.pop %v891
    %v893 = vadd.f32 %v890, 1.0
    %v894 = vadd.f32 %v892, 1.0
    %v895 = vrcp.pop %v893
    %v896 = vmul.f32 %v893, %v895
    %v897 = vsub.f32 1.0, %v896
    %v898 = vmul.f32 %v895, %v897
    %v899 = vadd.f32 %v895, %v898
    %vm900 = vweird.f32 %v893
    %vm901 = vweird.f32 %v895
    %vm902 = vmor %vm900, %vm901
    %v903 = vsel %vm902, %v895, %v899
    %v904 = vand.u32 2147483647, %v893
    %vm905 = vcmp.eq.f32.partialorder %v904, 8.507059e+37
    %v906 = vand.u32 %v893, 2147483648
    %v907 = vor.u32 1.1754944e-38, %v906
    %v908 = vsel %vm905, %v907, %v903
    %v909 = vmul.f32 1.0, %v908
    %v910 = vrcp.pop %v894
    %v911 = vmul.f32 %v894, %v910
    %v912 = vsub.f32 1.0, %v911
    %v913 = vmul.f32 %v910, %v912
    %v914 = vadd.f32 %v910, %v913
    %vm915 = vweird.f32 %v894
    %vm916 = vweird.f32 %v910
    %vm917 = vmor %vm915, %vm916
    %v918 = vsel %vm917, %v910, %v914
    %v919 = vand.u32 2147483647, %v894
    %vm920 = vcmp.eq.f32.partialorder %v919, 8.507059e+37
    %v921 = vand.u32 %v894, 2147483648
    %v922 = vor.u32 1.1754944e-38, %v921
    %v923 = vsel %vm920, %v922, %v918
    %v924 = vmul.f32 1.0, %v923
    %v925 = vmul.f32 %v869, %v841
    %v926 = vmul.f32 %v884, %v843
    %v927 = vadd.f32 %v671, %v925
    %v928 = vadd.f32 %v674, %v926
    %v929 = vtanh.pop %v927
    %v930 = vtanh.pop %v928
    %v931 = vsub.f32 1.0, %v909
    %v932 = vsub.f32 1.0, %v924
    %v933 = vmul.f32 %v931, %v929
    %v934 = vmul.f32 %v932, %v930
    %v935 = vmul.f32 %v909, 0.0
    %v936 = vmul.f32 %v924, 0.0
    %v937 = vadd.f32 %v933, %v935
    %v938 = vadd.f32 %v934, %v936
    %s939 = smul.u32 2, 3
    %s940 = smul.addr %s939, 8
    %s941 = scalar_lea.vmem [#allocation2], %s940
    %v942 = vld [vmem:[%s941] sm:$0xff]
    %v943 = vld [vmem:[%s941 + $0x8] sm:$0xff]
    %v944 = vld [vmem:[%s941 + $0x10] sm:$0xff]
    %v945 = vld [vmem:[%s941 + $0x18] sm:$0xff]
    %v946 = vld [vmem:[%s941 + $0x20] sm:$0xff]
    %v947 = vld [vmem:[%s941 + $0x28] sm:$0xff]
    %v948 = vpack.c.bf16 %v938, %v937
    %949 = vmatpush.bf16.msra.mxu0 %v776
    %950 = vmatpush.bf16.msra.mxu0 %v773
    %951 = vmatpush.bf16.msra.mxu0 %v770
    %952 = vmatpush.bf16.msra.mxu0 %v767
    %953 = vmatpush.bf16.msra.mxu0 %v764
    %954 = vmatpush.bf16.msra.mxu0 %v761
    %955 = vmatpush.bf16.msra.mxu0 %v758
    %956 = vmatpush.bf16.msra.mxu0 %v755
    %957 = vmatmul.bf16.gmra.mxu0 %v948
    %v958 = vpop.f32.mrf.mxu0
    %v959 = vadd.f32 %v628, %v958
    %v960 = vpop.f32.mrf.mxu0
    %v961 = vadd.f32 %v628, %v960
    %962 = vdwg.mxu0
    %963 = vmatpush.bf16.msra.mxu0 %v777
    %964 = vmatpush.bf16.msra.mxu0 %v774
    %965 = vmatpush.bf16.msra.mxu0 %v771
    %966 = vmatpush.bf16.msra.mxu0 %v768
    %967 = vmatpush.bf16.msra.mxu0 %v765
    %968 = vmatpush.bf16.msra.mxu0 %v762
    %969 = vmatpush.bf16.msra.mxu0 %v759
    %970 = vmatpush.bf16.msra.mxu0 %v756
    %971 = vmatmul.bf16.gmra.mxu0 %v948
    %v972 = vpop.f32.mrf.mxu0
    %v973 = vadd.f32 %v629, %v972
    %v974 = vpop.f32.mrf.mxu0
    %v975 = vadd.f32 %v629, %v974
    %976 = vdwg.mxu0
    %977 = vmatpush.bf16.msra.mxu0 %v778
    %978 = vmatpush.bf16.msra.mxu0 %v775
    %979 = vmatpush.bf16.msra.mxu0 %v772
    %980 = vmatpush.bf16.msra.mxu0 %v769
    %981 = vmatpush.bf16.msra.mxu0 %v766
    %982 = vmatpush.bf16.msra.mxu0 %v763
    %983 = vmatpush.bf16.msra.mxu0 %v760
    %984 = vmatpush.bf16.msra.mxu0 %v757
    %985 = vmatmul.bf16.gmra.mxu0 %v948
    %v986 = vpop.f32.mrf.mxu0
    %v987 = vadd.f32 %v630, %v986
    %v988 = vpop.f32.mrf.mxu0
    %v989 = vadd.f32 %v630, %v988
    %990 = vdwg.mxu0
    %v991 = vadd.f32 %v942, %v959
    %v992 = vadd.f32 %v945, %v961
    %v993 = vxor.u32 %v991, 2147483648
    %v994 = vxor.u32 %v992, 2147483648
    %v995 = vmul.f32 %v993, 1.442695
    %v996 = vpow.pop %v995
    %v997 = vmul.f32 %v994, 1.442695
    %v998 = vpow.pop %v997
    %v999 = vadd.f32 %v996, 1.0
    %v1000 = vadd.f32 %v998, 1.0
    %v1001 = vrcp.pop %v999
    %v1002 = vmul.f32 %v999, %v1001
    %v1003 = vsub.f32 1.0, %v1002
    %v1004 = vmul.f32 %v1001, %v1003
    %v1005 = vadd.f32 %v1001, %v1004
    %vm1006 = vweird.f32 %v999
    %vm1007 = vweird.f32 %v1001
    %vm1008 = vmor %vm1006, %vm1007
    %v1009 = vsel %vm1008, %v1001, %v1005
    %v1010 = vand.u32 2147483647, %v999
    %vm1011 = vcmp.eq.f32.partialorder %v1010, 8.507059e+37
    %v1012 = vand.u32 %v999, 2147483648
    %v1013 = vor.u32 1.1754944e-38, %v1012
    %v1014 = vsel %vm1011, %v1013, %v1009
    %v1015 = vmul.f32 1.0, %v1014
    %v1016 = vrcp.pop %v1000
    %v1017 = vmul.f32 %v1000, %v1016
    %v1018 = vsub.f32 1.0, %v1017
    %v1019 = vmul.f32 %v1016, %v1018
    %v1020 = vadd.f32 %v1016, %v1019
    %vm1021 = vweird.f32 %v1000
    %vm1022 = vweird.f32 %v1016
    %vm1023 = vmor %vm1021, %vm1022
    %v1024 = vsel %vm1023, %v1016, %v1020
    %v1025 = vand.u32 2147483647, %v1000
    %vm1026 = vcmp.eq.f32.partialorder %v1025, 8.507059e+37
    %v1027 = vand.u32 %v1000, 2147483648
    %v1028 = vor.u32 1.1754944e-38, %v1027
    %v1029 = vsel %vm1026, %v1028, %v1024
    %v1030 = vmul.f32 1.0, %v1029
    %v1031 = vadd.f32 %v943, %v973
    %v1032 = vadd.f32 %v946, %v975
    %v1033 = vxor.u32 %v1031, 2147483648
    %v1034 = vxor.u32 %v1032, 2147483648
    %v1035 = vmul.f32 %v1033, 1.442695
    %v1036 = vpow.pop %v1035
    %v1037 = vmul.f32 %v1034, 1.442695
    %v1038 = vpow.pop %v1037
    %v1039 = vadd.f32 %v1036, 1.0
    %v1040 = vadd.f32 %v1038, 1.0
    %v1041 = vrcp.pop %v1039
    %v1042 = vmul.f32 %v1039, %v1041
    %v1043 = vsub.f32 1.0, %v1042
    %v1044 = vmul.f32 %v1041, %v1043
    %v1045 = vadd.f32 %v1041, %v1044
    %vm1046 = vweird.f32 %v1039
    %vm1047 = vweird.f32 %v1041
    %vm1048 = vmor %vm1046, %vm1047
    %v1049 = vsel %vm1048, %v1041, %v1045
    %v1050 = vand.u32 2147483647, %v1039
    %vm1051 = vcmp.eq.f32.partialorder %v1050, 8.507059e+37
    %v1052 = vand.u32 %v1039, 2147483648
    %v1053 = vor.u32 1.1754944e-38, %v1052
    %v1054 = vsel %vm1051, %v1053, %v1049
    %v1055 = vmul.f32 1.0, %v1054
    %v1056 = vrcp.pop %v1040
    %v1057 = vmul.f32 %v1040, %v1056
    %v1058 = vsub.f32 1.0, %v1057
    %v1059 = vmul.f32 %v1056, %v1058
    %v1060 = vadd.f32 %v1056, %v1059
    %vm1061 = vweird.f32 %v1040
    %vm1062 = vweird.f32 %v1056
    %vm1063 = vmor %vm1061, %vm1062
    %v1064 = vsel %vm1063, %v1056, %v1060
    %v1065 = vand.u32 2147483647, %v1040
    %vm1066 = vcmp.eq.f32.partialorder %v1065, 8.507059e+37
    %v1067 = vand.u32 %v1040, 2147483648
    %v1068 = vor.u32 1.1754944e-38, %v1067
    %v1069 = vsel %vm1066, %v1068, %v1064
    %v1070 = vmul.f32 1.0, %v1069
    %v1071 = vmul.f32 %v1015, %v987
    %v1072 = vmul.f32 %v1030, %v989
    %v1073 = vadd.f32 %v944, %v1071
    %v1074 = vadd.f32 %v947, %v1072
    %v1075 = vtanh.pop %v1073
    %v1076 = vtanh.pop %v1074
    %v1077 = vsub.f32 1.0, %v1055
    %v1078 = vsub.f32 1.0, %v1070
    %v1079 = vmul.f32 %v1077, %v1075
    %v1080 = vmul.f32 %v1078, %v1076
    %v1081 = vmul.f32 %v1055, %v937
    %v1082 = vmul.f32 %v1070, %v938
    %v1083 = vadd.f32 %v1079, %v1081
    %v1084 = vadd.f32 %v1080, %v1082
    %s1085 = smul.u32 4, 3
    %s1086 = smul.addr %s1085, 8
    %s1087 = scalar_lea.vmem [#allocation2], %s1086
    %v1088 = vld [vmem:[%s1087] sm:$0xff]
    %v1089 = vld [vmem:[%s1087 + $0x8] sm:$0xff]
    %v1090 = vld [vmem:[%s1087 + $0x10] sm:$0xff]
    %v1091 = vld [vmem:[%s1087 + $0x18] sm:$0xff]
    %v1092 = vld [vmem:[%s1087 + $0x20] sm:$0xff]
    %v1093 = vld [vmem:[%s1087 + $0x28] sm:$0xff]
    %v1094 = vpack.c.bf16 %v1084, %v1083
    %1095 = vmatpush.bf16.msra.mxu0 %v776
    %1096 = vmatpush.bf16.msra.mxu0 %v773
    %1097 = vmatpush.bf16.msra.mxu0 %v770
    %1098 = vmatpush.bf16.msra.mxu0 %v767
    %1099 = vmatpush.bf16.msra.mxu0 %v764
    %1100 = vmatpush.bf16.msra.mxu0 %v761
    %1101 = vmatpush.bf16.msra.mxu0 %v758
    %1102 = vmatpush.bf16.msra.mxu0 %v755
    %1103 = vmatmul.bf16.gmra.mxu0 %v1094
    %v1104 = vpop.f32.mrf.mxu0
    %v1105 = vadd.f32 %v628, %v1104
    %v1106 = vpop.f32.mrf.mxu0
    %v1107 = vadd.f32 %v628, %v1106
    %1108 = vdwg.mxu0
    %1109 = vmatpush.bf16.msra.mxu0 %v777
    %1110 = vmatpush.bf16.msra.mxu0 %v774
    %1111 = vmatpush.bf16.msra.mxu0 %v771
    %1112 = vmatpush.bf16.msra.mxu0 %v768
    %1113 = vmatpush.bf16.msra.mxu0 %v765
    %1114 = vmatpush.bf16.msra.mxu0 %v762
    %1115 = vmatpush.bf16.msra.mxu0 %v759
    %1116 = vmatpush.bf16.msra.mxu0 %v756
    %1117 = vmatmul.bf16.gmra.mxu0 %v1094
    %v1118 = vpop.f32.mrf.mxu0
    %v1119 = vadd.f32 %v629, %v1118
    %v1120 = vpop.f32.mrf.mxu0
    %v1121 = vadd.f32 %v629, %v1120
    %1122 = vdwg.mxu0
    %1123 = vmatpush.bf16.msra.mxu0 %v778
    %1124 = vmatpush.bf16.msra.mxu0 %v775
    %1125 = vmatpush.bf16.msra.mxu0 %v772
    %1126 = vmatpush.bf16.msra.mxu0 %v769
    %1127 = vmatpush.bf16.msra.mxu0 %v766
    %1128 = vmatpush.bf16.msra.mxu0 %v763
    %1129 = vmatpush.bf16.msra.mxu0 %v760
    %1130 = vmatpush.bf16.msra.mxu0 %v757
    %1131 = vmatmul.bf16.gmra.mxu0 %v1094
    %v1132 = vpop.f32.mrf.mxu0
    %v1133 = vadd.f32 %v630, %v1132
    %v1134 = vpop.f32.mrf.mxu0
    %v1135 = vadd.f32 %v630, %v1134
    %1136 = vdwg.mxu0
    %v1137 = vadd.f32 %v1088, %v1105
    %v1138 = vadd.f32 %v1091, %v1107
    %v1139 = vxor.u32 %v1137, 2147483648
    %v1140 = vxor.u32 %v1138, 2147483648
    %v1141 = vmul.f32 %v1139, 1.442695
    %v1142 = vpow.pop %v1141
    %v1143 = vmul.f32 %v1140, 1.442695
    %v1144 = vpow.pop %v1143
    %v1145 = vadd.f32 %v1142, 1.0
    %v1146 = vadd.f32 %v1144, 1.0
    %v1147 = vrcp.pop %v1145
    %v1148 = vmul.f32 %v1145, %v1147
    %v1149 = vsub.f32 1.0, %v1148
    %v1150 = vmul.f32 %v1147, %v1149
    %v1151 = vadd.f32 %v1147, %v1150
    %vm1152 = vweird.f32 %v1145
    %vm1153 = vweird.f32 %v1147
    %vm1154 = vmor %vm1152, %vm1153
    %v1155 = vsel %vm1154, %v1147, %v1151
    %v1156 = vand.u32 2147483647, %v1145
    %vm1157 = vcmp.eq.f32.partialorder %v1156, 8.507059e+37
    %v1158 = vand.u32 %v1145, 2147483648
    %v1159 = vor.u32 1.1754944e-38, %v1158
    %v1160 = vsel %vm1157, %v1159, %v1155
    %v1161 = vmul.f32 1.0, %v1160
    %v1162 = vrcp.pop %v1146
    %v1163 = vmul.f32 %v1146, %v1162
    %v1164 = vsub.f32 1.0, %v1163
    %v1165 = vmul.f32 %v1162, %v1164
    %v1166 = vadd.f32 %v1162, %v1165
    %vm1167 = vweird.f32 %v1146
    %vm1168 = vweird.f32 %v1162
    %vm1169 = vmor %vm1167, %vm1168
    %v1170 = vsel %vm1169, %v1162, %v1166
    %v1171 = vand.u32 2147483647, %v1146
    %vm1172 = vcmp.eq.f32.partialorder %v1171, 8.507059e+37
    %v1173 = vand.u32 %v1146, 2147483648
    %v1174 = vor.u32 1.1754944e-38, %v1173
    %v1175 = vsel %vm1172, %v1174, %v1170
    %v1176 = vmul.f32 1.0, %v1175
    %v1177 = vadd.f32 %v1089, %v1119
    %v1178 = vadd.f32 %v1092, %v1121
    %v1179 = vxor.u32 %v1177, 2147483648
    %v1180 = vxor.u32 %v1178, 2147483648
    %v1181 = vmul.f32 %v1179, 1.442695
    %v1182 = vpow.pop %v1181
    %v1183 = vmul.f32 %v1180, 1.442695
    %v1184 = vpow.pop %v1183
    %v1185 = vadd.f32 %v1182, 1.0
    %v1186 = vadd.f32 %v1184, 1.0
    %v1187 = vrcp.pop %v1185
    %v1188 = vmul.f32 %v1185, %v1187
    %v1189 = vsub.f32 1.0, %v1188
    %v1190 = vmul.f32 %v1187, %v1189
    %v1191 = vadd.f32 %v1187, %v1190
    %vm1192 = vweird.f32 %v1185
    %vm1193 = vweird.f32 %v1187
    %vm1194 = vmor %vm1192, %vm1193
    %v1195 = vsel %vm1194, %v1187, %v1191
    %v1196 = vand.u32 2147483647, %v1185
    %vm1197 = vcmp.eq.f32.partialorder %v1196, 8.507059e+37
    %v1198 = vand.u32 %v1185, 2147483648
    %v1199 = vor.u32 1.1754944e-38, %v1198
    %v1200 = vsel %vm1197, %v1199, %v1195
    %v1201 = vmul.f32 1.0, %v1200
    %v1202 = vrcp.pop %v1186
    %v1203 = vmul.f32 %v1186, %v1202
    %v1204 = vsub.f32 1.0, %v1203
    %v1205 = vmul.f32 %v1202, %v1204
    %v1206 = vadd.f32 %v1202, %v1205
    %vm1207 = vweird.f32 %v1186
    %vm1208 = vweird.f32 %v1202
    %vm1209 = vmor %vm1207, %vm1208
    %v1210 = vsel %vm1209, %v1202, %v1206
    %v1211 = vand.u32 2147483647, %v1186
    %vm1212 = vcmp.eq.f32.partialorder %v1211, 8.507059e+37
    %v1213 = vand.u32 %v1186, 2147483648
    %v1214 = vor.u32 1.1754944e-38, %v1213
    %v1215 = vsel %vm1212, %v1214, %v1210
    %v1216 = vmul.f32 1.0, %v1215
    %v1217 = vmul.f32 %v1161, %v1133
    %v1218 = vmul.f32 %v1176, %v1135
    %v1219 = vadd.f32 %v1090, %v1217
    %v1220 = vadd.f32 %v1093, %v1218
    %v1221 = vtanh.pop %v1219
    %v1222 = vtanh.pop %v1220
    %v1223 = vsub.f32 1.0, %v1201
    %v1224 = vsub.f32 1.0, %v1216
    %v1225 = vmul.f32 %v1223, %v1221
    %v1226 = vmul.f32 %v1224, %v1222
    %v1227 = vmul.f32 %v1201, %v1083
    %v1228 = vmul.f32 %v1216, %v1084
    %v1229 = vadd.f32 %v1225, %v1227
    %v1230 = vadd.f32 %v1226, %v1228
    %s1231 = smul.u32 6, 3
    %s1232 = smul.addr %s1231, 8
    %s1233 = scalar_lea.vmem [#allocation2], %s1232
    %v1234 = vld [vmem:[%s1233] sm:$0xff]
    %v1235 = vld [vmem:[%s1233 + $0x8] sm:$0xff]
    %v1236 = vld [vmem:[%s1233 + $0x10] sm:$0xff]
    %v1237 = vld [vmem:[%s1233 + $0x18] sm:$0xff]
    %v1238 = vld [vmem:[%s1233 + $0x20] sm:$0xff]
    %v1239 = vld [vmem:[%s1233 + $0x28] sm:$0xff]
    %v1240 = vpack.c.bf16 %v1230, %v1229
    %1241 = vmatpush.bf16.msra.mxu0 %v776
    %1242 = vmatpush.bf16.msra.mxu0 %v773
    %1243 = vmatpush.bf16.msra.mxu0 %v770
    %1244 = vmatpush.bf16.msra.mxu0 %v767
    %1245 = vmatpush.bf16.msra.mxu0 %v764
    %1246 = vmatpush.bf16.msra.mxu0 %v761
    %1247 = vmatpush.bf16.msra.mxu0 %v758
    %1248 = vmatpush.bf16.msra.mxu0 %v755
    %1249 = vmatmul.bf16.gmra.mxu0 %v1240
    %v1250 = vpop.f32.mrf.mxu0
    %v1251 = vadd.f32 %v628, %v1250
    %v1252 = vpop.f32.mrf.mxu0
    %v1253 = vadd.f32 %v628, %v1252
    %1254 = vdwg.mxu0
    %1255 = vmatpush.bf16.msra.mxu0 %v777
    %1256 = vmatpush.bf16.msra.mxu0 %v774
    %1257 = vmatpush.bf16.msra.mxu0 %v771
    %1258 = vmatpush.bf16.msra.mxu0 %v768
    %1259 = vmatpush.bf16.msra.mxu0 %v765
    %1260 = vmatpush.bf16.msra.mxu0 %v762
    %1261 = vmatpush.bf16.msra.mxu0 %v759
    %1262 = vmatpush.bf16.msra.mxu0 %v756
    %1263 = vmatmul.bf16.gmra.mxu0 %v1240
    %v1264 = vpop.f32.mrf.mxu0
    %v1265 = vadd.f32 %v629, %v1264
    %v1266 = vpop.f32.mrf.mxu0
    %v1267 = vadd.f32 %v629, %v1266
    %1268 = vdwg.mxu0
    %1269 = vmatpush.bf16.msra.mxu0 %v778
    %1270 = vmatpush.bf16.msra.mxu0 %v775
    %1271 = vmatpush.bf16.msra.mxu0 %v772
    %1272 = vmatpush.bf16.msra.mxu0 %v769
    %1273 = vmatpush.bf16.msra.mxu0 %v766
    %1274 = vmatpush.bf16.msra.mxu0 %v763
    %1275 = vmatpush.bf16.msra.mxu0 %v760
    %1276 = vmatpush.bf16.msra.mxu0 %v757
    %1277 = vmatmul.bf16.gmra.mxu0 %v1240
    %v1278 = vpop.f32.mrf.mxu0
    %v1279 = vadd.f32 %v630, %v1278
    %v1280 = vpop.f32.mrf.mxu0
    %v1281 = vadd.f32 %v630, %v1280
    %1282 = vdwg.mxu0
    %v1283 = vadd.f32 %v1234, %v1251
    %v1284 = vadd.f32 %v1237, %v1253
    %v1285 = vxor.u32 %v1283, 2147483648
    %v1286 = vxor.u32 %v1284, 2147483648
    %v1287 = vmul.f32 %v1285, 1.442695
    %v1288 = vpow.pop %v1287
    %v1289 = vmul.f32 %v1286, 1.442695
    %v1290 = vpow.pop %v1289
    %v1291 = vadd.f32 %v1288, 1.0
    %v1292 = vadd.f32 %v1290, 1.0
    %v1293 = vrcp.pop %v1291
    %v1294 = vmul.f32 %v1291, %v1293
    %v1295 = vsub.f32 1.0, %v1294
    %v1296 = vmul.f32 %v1293, %v1295
    %v1297 = vadd.f32 %v1293, %v1296
    %vm1298 = vweird.f32 %v1291
    %vm1299 = vweird.f32 %v1293
    %vm1300 = vmor %vm1298, %vm1299
    %v1301 = vsel %vm1300, %v1293, %v1297
    %v1302 = vand.u32 2147483647, %v1291
    %vm1303 = vcmp.eq.f32.partialorder %v1302, 8.507059e+37
    %v1304 = vand.u32 %v1291, 2147483648
    %v1305 = vor.u32 1.1754944e-38, %v1304
    %v1306 = vsel %vm1303, %v1305, %v1301
    %v1307 = vmul.f32 1.0, %v1306
    %v1308 = vrcp.pop %v1292
    %v1309 = vmul.f32 %v1292, %v1308
    %v1310 = vsub.f32 1.0, %v1309
    %v1311 = vmul.f32 %v1308, %v1310
    %v1312 = vadd.f32 %v1308, %v1311
    %vm1313 = vweird.f32 %v1292
    %vm1314 = vweird.f32 %v1308
    %vm1315 = vmor %vm1313, %vm1314
    %v1316 = vsel %vm1315, %v1308, %v1312
    %v1317 = vand.u32 2147483647, %v1292
    %vm1318 = vcmp.eq.f32.partialorder %v1317, 8.507059e+37
    %v1319 = vand.u32 %v1292, 2147483648
    %v1320 = vor.u32 1.1754944e-38, %v1319
    %v1321 = vsel %vm1318, %v1320, %v1316
    %v1322 = vmul.f32 1.0, %v1321
    %v1323 = vadd.f32 %v1235, %v1265
    %v1324 = vadd.f32 %v1238, %v1267
    %v1325 = vxor.u32 %v1323, 2147483648
    %v1326 = vxor.u32 %v1324, 2147483648
    %v1327 = vmul.f32 %v1325, 1.442695
    %v1328 = vpow.pop %v1327
    %v1329 = vmul.f32 %v1326, 1.442695
    %v1330 = vpow.pop %v1329
    %v1331 = vadd.f32 %v1328, 1.0
    %v1332 = vadd.f32 %v1330, 1.0
    %v1333 = vrcp.pop %v1331
    %v1334 = vmul.f32 %v1331, %v1333
    %v1335 = vsub.f32 1.0, %v1334
    %v1336 = vmul.f32 %v1333, %v1335
    %v1337 = vadd.f32 %v1333, %v1336
    %vm1338 = vweird.f32 %v1331
    %vm1339 = vweird.f32 %v1333
    %vm1340 = vmor %vm1338, %vm1339
    %v1341 = vsel %vm1340, %v1333, %v1337
    %v1342 = vand.u32 2147483647, %v1331
    %vm1343 = vcmp.eq.f32.partialorder %v1342, 8.507059e+37
    %v1344 = vand.u32 %v1331, 2147483648
    %v1345 = vor.u32 1.1754944e-38, %v1344
    %v1346 = vsel %vm1343, %v1345, %v1341
    %v1347 = vmul.f32 1.0, %v1346
    %v1348 = vrcp.pop %v1332
    %v1349 = vmul.f32 %v1332, %v1348
    %v1350 = vsub.f32 1.0, %v1349
    %v1351 = vmul.f32 %v1348, %v1350
    %v1352 = vadd.f32 %v1348, %v1351
    %vm1353 = vweird.f32 %v1332
    %vm1354 = vweird.f32 %v1348
    %vm1355 = vmor %vm1353, %vm1354
    %v1356 = vsel %vm1355, %v1348, %v1352
    %v1357 = vand.u32 2147483647, %v1332
    %vm1358 = vcmp.eq.f32.partialorder %v1357, 8.507059e+37
    %v1359 = vand.u32 %v1332, 2147483648
    %v1360 = vor.u32 1.1754944e-38, %v1359
    %v1361 = vsel %vm1358, %v1360, %v1356
    %v1362 = vmul.f32 1.0, %v1361
    %v1363 = vmul.f32 %v1307, %v1279
    %v1364 = vmul.f32 %v1322, %v1281
    %v1365 = vadd.f32 %v1236, %v1363
    %v1366 = vadd.f32 %v1239, %v1364
    %v1367 = vtanh.pop %v1365
    %v1368 = vtanh.pop %v1366
    %v1369 = vsub.f32 1.0, %v1347
    %v1370 = vsub.f32 1.0, %v1362
    %v1371 = vmul.f32 %v1369, %v1367
    %v1372 = vmul.f32 %v1370, %v1368
    %v1373 = vmul.f32 %v1347, %v1229
    %v1374 = vmul.f32 %v1362, %v1230
    %v1375 = vadd.f32 %v1371, %v1373
    %v1376 = vadd.f32 %v1372, %v1374
    %s1377 = smul.u32 8, 3
    %s1378 = smul.addr %s1377, 8
    %s1379 = scalar_lea.vmem [#allocation2], %s1378
    %v1380 = vld [vmem:[%s1379] sm:$0xff]
    %v1381 = vld [vmem:[%s1379 + $0x8] sm:$0xff]
    %v1382 = vld [vmem:[%s1379 + $0x10] sm:$0xff]
    %v1383 = vld [vmem:[%s1379 + $0x18] sm:$0xff]
    %v1384 = vld [vmem:[%s1379 + $0x20] sm:$0xff]
    %v1385 = vld [vmem:[%s1379 + $0x28] sm:$0xff]
    %v1386 = vpack.c.bf16 %v1376, %v1375
    %1387 = vmatpush.bf16.msra.mxu0 %v776
    %1388 = vmatpush.bf16.msra.mxu0 %v773
    %1389 = vmatpush.bf16.msra.mxu0 %v770
    %1390 = vmatpush.bf16.msra.mxu0 %v767
    %1391 = vmatpush.bf16.msra.mxu0 %v764
    %1392 = vmatpush.bf16.msra.mxu0 %v761
    %1393 = vmatpush.bf16.msra.mxu0 %v758
    %1394 = vmatpush.bf16.msra.mxu0 %v755
    %1395 = vmatmul.bf16.gmra.mxu0 %v1386
    %v1396 = vpop.f32.mrf.mxu0
    %v1397 = vadd.f32 %v628, %v1396
    %v1398 = vpop.f32.mrf.mxu0
    %v1399 = vadd.f32 %v628, %v1398
    %1400 = vdwg.mxu0
    %1401 = vmatpush.bf16.msra.mxu0 %v777
    %1402 = vmatpush.bf16.msra.mxu0 %v774
    %1403 = vmatpush.bf16.msra.mxu0 %v771
    %1404 = vmatpush.bf16.msra.mxu0 %v768
    %1405 = vmatpush.bf16.msra.mxu0 %v765
    %1406 = vmatpush.bf16.msra.mxu0 %v762
    %1407 = vmatpush.bf16.msra.mxu0 %v759
    %1408 = vmatpush.bf16.msra.mxu0 %v756
    %1409 = vmatmul.bf16.gmra.mxu0 %v1386
    %v1410 = vpop.f32.mrf.mxu0
    %v1411 = vadd.f32 %v629, %v1410
    %v1412 = vpop.f32.mrf.mxu0
    %v1413 = vadd.f32 %v629, %v1412
    %1414 = vdwg.mxu0
    %1415 = vmatpush.bf16.msra.mxu0 %v778
    %1416 = vmatpush.bf16.msra.mxu0 %v775
    %1417 = vmatpush.bf16.msra.mxu0 %v772
    %1418 = vmatpush.bf16.msra.mxu0 %v769
    %1419 = vmatpush.bf16.msra.mxu0 %v766
    %1420 = vmatpush.bf16.msra.mxu0 %v763
    %1421 = vmatpush.bf16.msra.mxu0 %v760
    %1422 = vmatpush.bf16.msra.mxu0 %v757
    %1423 = vmatmul.bf16.gmra.mxu0 %v1386
    %v1424 = vpop.f32.mrf.mxu0
    %v1425 = vadd.f32 %v630, %v1424
    %v1426 = vpop.f32.mrf.mxu0
    %v1427 = vadd.f32 %v630, %v1426
    %1428 = vdwg.mxu0
    %v1429 = vadd.f32 %v1380, %v1397
    %v1430 = vadd.f32 %v1383, %v1399
    %v1431 = vxor.u32 %v1429, 2147483648
    %v1432 = vxor.u32 %v1430, 2147483648
    %v1433 = vmul.f32 %v1431, 1.442695
    %v1434 = vpow.pop %v1433
    %v1435 = vmul.f32 %v1432, 1.442695
    %v1436 = vpow.pop %v1435
    %v1437 = vadd.f32 %v1434, 1.0
    %v1438 = vadd.f32 %v1436, 1.0
    %v1439 = vrcp.pop %v1437
    %v1440 = vmul.f32 %v1437, %v1439
    %v1441 = vsub.f32 1.0, %v1440
    %v1442 = vmul.f32 %v1439, %v1441
    %v1443 = vadd.f32 %v1439, %v1442
    %vm1444 = vweird.f32 %v1437
    %vm1445 = vweird.f32 %v1439
    %vm1446 = vmor %vm1444, %vm1445
    %v1447 = vsel %vm1446, %v1439, %v1443
    %v1448 = vand.u32 2147483647, %v1437
    %vm1449 = vcmp.eq.f32.partialorder %v1448, 8.507059e+37
    %v1450 = vand.u32 %v1437, 2147483648
    %v1451 = vor.u32 1.1754944e-38, %v1450
    %v1452 = vsel %vm1449, %v1451, %v1447
    %v1453 = vmul.f32 1.0, %v1452
    %v1454 = vrcp.pop %v1438
    %v1455 = vmul.f32 %v1438, %v1454
    %v1456 = vsub.f32 1.0, %v1455
    %v1457 = vmul.f32 %v1454, %v1456
    %v1458 = vadd.f32 %v1454, %v1457
    %vm1459 = vweird.f32 %v1438
    %vm1460 = vweird.f32 %v1454
    %vm1461 = vmor %vm1459, %vm1460
    %v1462 = vsel %vm1461, %v1454, %v1458
    %v1463 = vand.u32 2147483647, %v1438
    %vm1464 = vcmp.eq.f32.partialorder %v1463, 8.507059e+37
    %v1465 = vand.u32 %v1438, 2147483648
    %v1466 = vor.u32 1.1754944e-38, %v1465
    %v1467 = vsel %vm1464, %v1466, %v1462
    %v1468 = vmul.f32 1.0, %v1467
    %v1469 = vadd.f32 %v1381, %v1411
    %v1470 = vadd.f32 %v1384, %v1413
    %v1471 = vxor.u32 %v1469, 2147483648
    %v1472 = vxor.u32 %v1470, 2147483648
    %v1473 = vmul.f32 %v1471, 1.442695
    %v1474 = vpow.pop %v1473
    %v1475 = vmul.f32 %v1472, 1.442695
    %v1476 = vpow.pop %v1475
    %v1477 = vadd.f32 %v1474, 1.0
    %v1478 = vadd.f32 %v1476, 1.0
    %v1479 = vrcp.pop %v1477
    %v1480 = vmul.f32 %v1477, %v1479
    %v1481 = vsub.f32 1.0, %v1480
    %v1482 = vmul.f32 %v1479, %v1481
    %v1483 = vadd.f32 %v1479, %v1482
    %vm1484 = vweird.f32 %v1477
    %vm1485 = vweird.f32 %v1479
    %vm1486 = vmor %vm1484, %vm1485
    %v1487 = vsel %vm1486, %v1479, %v1483
    %v1488 = vand.u32 2147483647, %v1477
    %vm1489 = vcmp.eq.f32.partialorder %v1488, 8.507059e+37
    %v1490 = vand.u32 %v1477, 2147483648
    %v1491 = vor.u32 1.1754944e-38, %v1490
    %v1492 = vsel %vm1489, %v1491, %v1487
    %v1493 = vmul.f32 1.0, %v1492
    %v1494 = vrcp.pop %v1478
    %v1495 = vmul.f32 %v1478, %v1494
    %v1496 = vsub.f32 1.0, %v1495
    %v1497 = vmul.f32 %v1494, %v1496
    %v1498 = vadd.f32 %v1494, %v1497
    %vm1499 = vweird.f32 %v1478
    %vm1500 = vweird.f32 %v1494
    %vm1501 = vmor %vm1499, %vm1500
    %v1502 = vsel %vm1501, %v1494, %v1498
    %v1503 = vand.u32 2147483647, %v1478
    %vm1504 = vcmp.eq.f32.partialorder %v1503, 8.507059e+37
    %v1505 = vand.u32 %v1478, 2147483648
    %v1506 = vor.u32 1.1754944e-38, %v1505
    %v1507 = vsel %vm1504, %v1506, %v1502
    %v1508 = vmul.f32 1.0, %v1507
    %v1509 = vmul.f32 %v1453, %v1425
    %v1510 = vmul.f32 %v1468, %v1427
    %v1511 = vadd.f32 %v1382, %v1509
    %v1512 = vadd.f32 %v1385, %v1510
    %v1513 = vtanh.pop %v1511
    %v1514 = vtanh.pop %v1512
    %v1515 = vsub.f32 1.0, %v1493
    %v1516 = vsub.f32 1.0, %v1508
    %v1517 = vmul.f32 %v1515, %v1513
    %v1518 = vmul.f32 %v1516, %v1514
    %v1519 = vmul.f32 %v1493, %v1375
    %v1520 = vmul.f32 %v1508, %v1376
    %v1521 = vadd.f32 %v1517, %v1519
    %v1522 = vadd.f32 %v1518, %v1520
    %s1523 = smul.u32 10, 3
    %s1524 = smul.addr %s1523, 8
    %s1525 = scalar_lea.vmem [#allocation2], %s1524
    %v1526 = vld [vmem:[%s1525] sm:$0xff]
    %v1527 = vld [vmem:[%s1525 + $0x8] sm:$0xff]
    %v1528 = vld [vmem:[%s1525 + $0x10] sm:$0xff]
    %v1529 = vld [vmem:[%s1525 + $0x18] sm:$0xff]
    %v1530 = vld [vmem:[%s1525 + $0x20] sm:$0xff]
    %v1531 = vld [vmem:[%s1525 + $0x28] sm:$0xff]
    %v1532 = vpack.c.bf16 %v1522, %v1521
    %1533 = vmatpush.bf16.msra.mxu0 %v776
    %1534 = vmatpush.bf16.msra.mxu0 %v773
    %1535 = vmatpush.bf16.msra.mxu0 %v770
    %1536 = vmatpush.bf16.msra.mxu0 %v767
    %1537 = vmatpush.bf16.msra.mxu0 %v764
    %1538 = vmatpush.bf16.msra.mxu0 %v761
    %1539 = vmatpush.bf16.msra.mxu0 %v758
    %1540 = vmatpush.bf16.msra.mxu0 %v755
    %1541 = vmatmul.bf16.gmra.mxu0 %v1532
    %v1542 = vpop.f32.mrf.mxu0
    %v1543 = vadd.f32 %v628, %v1542
    %v1544 = vpop.f32.mrf.mxu0
    %v1545 = vadd.f32 %v628, %v1544
    %1546 = vdwg.mxu0
    %1547 = vmatpush.bf16.msra.mxu0 %v777
    %1548 = vmatpush.bf16.msra.mxu0 %v774
    %1549 = vmatpush.bf16.msra.mxu0 %v771
    %1550 = vmatpush.bf16.msra.mxu0 %v768
    %1551 = vmatpush.bf16.msra.mxu0 %v765
    %1552 = vmatpush.bf16.msra.mxu0 %v762
    %1553 = vmatpush.bf16.msra.mxu0 %v759
    %1554 = vmatpush.bf16.msra.mxu0 %v756
    %1555 = vmatmul.bf16.gmra.mxu0 %v1532
    %v1556 = vpop.f32.mrf.mxu0
    %v1557 = vadd.f32 %v629, %v1556
    %v1558 = vpop.f32.mrf.mxu0
    %v1559 = vadd.f32 %v629, %v1558
    %1560 = vdwg.mxu0
    %1561 = vmatpush.bf16.msra.mxu0 %v778
    %1562 = vmatpush.bf16.msra.mxu0 %v775
    %1563 = vmatpush.bf16.msra.mxu0 %v772
    %1564 = vmatpush.bf16.msra.mxu0 %v769
    %1565 = vmatpush.bf16.msra.mxu0 %v766
    %1566 = vmatpush.bf16.msra.mxu0 %v763
    %1567 = vmatpush.bf16.msra.mxu0 %v760
    %1568 = vmatpush.bf16.msra.mxu0 %v757
    %1569 = vmatmul.bf16.gmra.mxu0 %v1532
    %v1570 = vpop.f32.mrf.mxu0
    %v1571 = vadd.f32 %v630, %v1570
    %v1572 = vpop.f32.mrf.mxu0
    %v1573 = vadd.f32 %v630, %v1572
    %1574 = vdwg.mxu0
    %v1575 = vadd.f32 %v1526, %v1543
    %v1576 = vadd.f32 %v1529, %v1545
    %v1577 = vxor.u32 %v1575, 2147483648
    %v1578 = vxor.u32 %v1576, 2147483648
    %v1579 = vmul.f32 %v1577, 1.442695
    %v1580 = vpow.pop %v1579
    %v1581 = vmul.f32 %v1578, 1.442695
    %v1582 = vpow.pop %v1581
    %v1583 = vadd.f32 %v1580, 1.0
    %v1584 = vadd.f32 %v1582, 1.0
    %v1585 = vrcp.pop %v1583
    %v1586 = vmul.f32 %v1583, %v1585
    %v1587 = vsub.f32 1.0, %v1586
    %v1588 = vmul.f32 %v1585, %v1587
    %v1589 = vadd.f32 %v1585, %v1588
    %vm1590 = vweird.f32 %v1583
    %vm1591 = vweird.f32 %v1585
    %vm1592 = vmor %vm1590, %vm1591
    %v1593 = vsel %vm1592, %v1585, %v1589
    %v1594 = vand.u32 2147483647, %v1583
    %vm1595 = vcmp.eq.f32.partialorder %v1594, 8.507059e+37
    %v1596 = vand.u32 %v1583, 2147483648
    %v1597 = vor.u32 1.1754944e-38, %v1596
    %v1598 = vsel %vm1595, %v1597, %v1593
    %v1599 = vmul.f32 1.0, %v1598
    %v1600 = vrcp.pop %v1584
    %v1601 = vmul.f32 %v1584, %v1600
    %v1602 = vsub.f32 1.0, %v1601
    %v1603 = vmul.f32 %v1600, %v1602
    %v1604 = vadd.f32 %v1600, %v1603
    %vm1605 = vweird.f32 %v1584
    %vm1606 = vweird.f32 %v1600
    %vm1607 = vmor %vm1605, %vm1606
    %v1608 = vsel %vm1607, %v1600, %v1604
    %v1609 = vand.u32 2147483647, %v1584
    %vm1610 = vcmp.eq.f32.partialorder %v1609, 8.507059e+37
    %v1611 = vand.u32 %v1584, 2147483648
    %v1612 = vor.u32 1.1754944e-38, %v1611
    %v1613 = vsel %vm1610, %v1612, %v1608
    %v1614 = vmul.f32 1.0, %v1613
    %v1615 = vadd.f32 %v1527, %v1557
    %v1616 = vadd.f32 %v1530, %v1559
    %v1617 = vxor.u32 %v1615, 2147483648
    %v1618 = vxor.u32 %v1616, 2147483648
    %v1619 = vmul.f32 %v1617, 1.442695
    %v1620 = vpow.pop %v1619
    %v1621 = vmul.f32 %v1618, 1.442695
    %v1622 = vpow.pop %v1621
    %v1623 = vadd.f32 %v1620, 1.0
    %v1624 = vadd.f32 %v1622, 1.0
    %v1625 = vrcp.pop %v1623
    %v1626 = vmul.f32 %v1623, %v1625
    %v1627 = vsub.f32 1.0, %v1626
    %v1628 = vmul.f32 %v1625, %v1627
    %v1629 = vadd.f32 %v1625, %v1628
    %vm1630 = vweird.f32 %v1623
    %vm1631 = vweird.f32 %v1625
    %vm1632 = vmor %vm1630, %vm1631
    %v1633 = vsel %vm1632, %v1625, %v1629
    %v1634 = vand.u32 2147483647, %v1623
    %vm1635 = vcmp.eq.f32.partialorder %v1634, 8.507059e+37
    %v1636 = vand.u32 %v1623, 2147483648
    %v1637 = vor.u32 1.1754944e-38, %v1636
    %v1638 = vsel %vm1635, %v1637, %v1633
    %v1639 = vmul.f32 1.0, %v1638
    %v1640 = vrcp.pop %v1624
    %v1641 = vmul.f32 %v1624, %v1640
    %v1642 = vsub.f32 1.0, %v1641
    %v1643 = vmul.f32 %v1640, %v1642
    %v1644 = vadd.f32 %v1640, %v1643
    %vm1645 = vweird.f32 %v1624
    %vm1646 = vweird.f32 %v1640
    %vm1647 = vmor %vm1645, %vm1646
    %v1648 = vsel %vm1647, %v1640, %v1644
    %v1649 = vand.u32 2147483647, %v1624
    %vm1650 = vcmp.eq.f32.partialorder %v1649, 8.507059e+37
    %v1651 = vand.u32 %v1624, 2147483648
    %v1652 = vor.u32 1.1754944e-38, %v1651
    %v1653 = vsel %vm1650, %v1652, %v1648
    %v1654 = vmul.f32 1.0, %v1653
    %v1655 = vmul.f32 %v1599, %v1571
    %v1656 = vmul.f32 %v1614, %v1573
    %v1657 = vadd.f32 %v1528, %v1655
    %v1658 = vadd.f32 %v1531, %v1656
    %v1659 = vtanh.pop %v1657
    %v1660 = vtanh.pop %v1658
    %v1661 = vsub.f32 1.0, %v1639
    %v1662 = vsub.f32 1.0, %v1654
    %v1663 = vmul.f32 %v1661, %v1659
    %v1664 = vmul.f32 %v1662, %v1660
    %v1665 = vmul.f32 %v1639, %v1521
    %v1666 = vmul.f32 %v1654, %v1522
    %v1667 = vadd.f32 %v1663, %v1665
    %v1668 = vadd.f32 %v1664, %v1666
    %s1669 = smul.u32 12, 3
    %s1670 = smul.addr %s1669, 8
    %s1671 = scalar_lea.vmem [#allocation2], %s1670
    %v1672 = vld [vmem:[%s1671] sm:$0xff]
    %v1673 = vld [vmem:[%s1671 + $0x8] sm:$0xff]
    %v1674 = vld [vmem:[%s1671 + $0x10] sm:$0xff]
    %v1675 = vld [vmem:[%s1671 + $0x18] sm:$0xff]
    %v1676 = vld [vmem:[%s1671 + $0x20] sm:$0xff]
    %v1677 = vld [vmem:[%s1671 + $0x28] sm:$0xff]
    %v1678 = vpack.c.bf16 %v1668, %v1667
    %1679 = vmatpush.bf16.msra.mxu0 %v776
    %1680 = vmatpush.bf16.msra.mxu0 %v773
    %1681 = vmatpush.bf16.msra.mxu0 %v770
    %1682 = vmatpush.bf16.msra.mxu0 %v767
    %1683 = vmatpush.bf16.msra.mxu0 %v764
    %1684 = vmatpush.bf16.msra.mxu0 %v761
    %1685 = vmatpush.bf16.msra.mxu0 %v758
    %1686 = vmatpush.bf16.msra.mxu0 %v755
    %1687 = vmatmul.bf16.gmra.mxu0 %v1678
    %v1688 = vpop.f32.mrf.mxu0
    %v1689 = vadd.f32 %v628, %v1688
    %v1690 = vpop.f32.mrf.mxu0
    %v1691 = vadd.f32 %v628, %v1690
    %1692 = vdwg.mxu0
    %1693 = vmatpush.bf16.msra.mxu0 %v777
    %1694 = vmatpush.bf16.msra.mxu0 %v774
    %1695 = vmatpush.bf16.msra.mxu0 %v771
    %1696 = vmatpush.bf16.msra.mxu0 %v768
    %1697 = vmatpush.bf16.msra.mxu0 %v765
    %1698 = vmatpush.bf16.msra.mxu0 %v762
    %1699 = vmatpush.bf16.msra.mxu0 %v759
    %1700 = vmatpush.bf16.msra.mxu0 %v756
    %1701 = vmatmul.bf16.gmra.mxu0 %v1678
    %v1702 = vpop.f32.mrf.mxu0
    %v1703 = vadd.f32 %v629, %v1702
    %v1704 = vpop.f32.mrf.mxu0
    %v1705 = vadd.f32 %v629, %v1704
    %1706 = vdwg.mxu0
    %1707 = vmatpush.bf16.msra.mxu0 %v778
    %1708 = vmatpush.bf16.msra.mxu0 %v775
    %1709 = vmatpush.bf16.msra.mxu0 %v772
    %1710 = vmatpush.bf16.msra.mxu0 %v769
    %1711 = vmatpush.bf16.msra.mxu0 %v766
    %1712 = vmatpush.bf16.msra.mxu0 %v763
    %1713 = vmatpush.bf16.msra.mxu0 %v760
    %1714 = vmatpush.bf16.msra.mxu0 %v757
    %1715 = vmatmul.bf16.gmra.mxu0 %v1678
    %v1716 = vpop.f32.mrf.mxu0
    %v1717 = vadd.f32 %v630, %v1716
    %v1718 = vpop.f32.mrf.mxu0
    %v1719 = vadd.f32 %v630, %v1718
    %1720 = vdwg.mxu0
    %v1721 = vadd.f32 %v1672, %v1689
    %v1722 = vadd.f32 %v1675, %v1691
    %v1723 = vxor.u32 %v1721, 2147483648
    %v1724 = vxor.u32 %v1722, 2147483648
    %v1725 = vmul.f32 %v1723, 1.442695
    %v1726 = vpow.pop %v1725
    %v1727 = vmul.f32 %v1724, 1.442695
    %v1728 = vpow.pop %v1727
    %v1729 = vadd.f32 %v1726, 1.0
    %v1730 = vadd.f32 %v1728, 1.0
    %v1731 = vrcp.pop %v1729
    %v1732 = vmul.f32 %v1729, %v1731
    %v1733 = vsub.f32 1.0, %v1732
    %v1734 = vmul.f32 %v1731, %v1733
    %v1735 = vadd.f32 %v1731, %v1734
    %vm1736 = vweird.f32 %v1729
    %vm1737 = vweird.f32 %v1731
    %vm1738 = vmor %vm1736, %vm1737
    %v1739 = vsel %vm1738, %v1731, %v1735
    %v1740 = vand.u32 2147483647, %v1729
    %vm1741 = vcmp.eq.f32.partialorder %v1740, 8.507059e+37
    %v1742 = vand.u32 %v1729, 2147483648
    %v1743 = vor.u32 1.1754944e-38, %v1742
    %v1744 = vsel %vm1741, %v1743, %v1739
    %v1745 = vmul.f32 1.0, %v1744
    %v1746 = vrcp.pop %v1730
    %v1747 = vmul.f32 %v1730, %v1746
    %v1748 = vsub.f32 1.0, %v1747
    %v1749 = vmul.f32 %v1746, %v1748
    %v1750 = vadd.f32 %v1746, %v1749
    %vm1751 = vweird.f32 %v1730
    %vm1752 = vweird.f32 %v1746
    %vm1753 = vmor %vm1751, %vm1752
    %v1754 = vsel %vm1753, %v1746, %v1750
    %v1755 = vand.u32 2147483647, %v1730
    %vm1756 = vcmp.eq.f32.partialorder %v1755, 8.507059e+37
    %v1757 = vand.u32 %v1730, 2147483648
    %v1758 = vor.u32 1.1754944e-38, %v1757
    %v1759 = vsel %vm1756, %v1758, %v1754
    %v1760 = vmul.f32 1.0, %v1759
    %v1761 = vadd.f32 %v1673, %v1703
    %v1762 = vadd.f32 %v1676, %v1705
    %v1763 = vxor.u32 %v1761, 2147483648
    %v1764 = vxor.u32 %v1762, 2147483648
    %v1765 = vmul.f32 %v1763, 1.442695
    %v1766 = vpow.pop %v1765
    %v1767 = vmul.f32 %v1764, 1.442695
    %v1768 = vpow.pop %v1767
    %v1769 = vadd.f32 %v1766, 1.0
    %v1770 = vadd.f32 %v1768, 1.0
    %v1771 = vrcp.pop %v1769
    %v1772 = vmul.f32 %v1769, %v1771
    %v1773 = vsub.f32 1.0, %v1772
    %v1774 = vmul.f32 %v1771, %v1773
    %v1775 = vadd.f32 %v1771, %v1774
    %vm1776 = vweird.f32 %v1769
    %vm1777 = vweird.f32 %v1771
    %vm1778 = vmor %vm1776, %vm1777
    %v1779 = vsel %vm1778, %v1771, %v1775
    %v1780 = vand.u32 2147483647, %v1769
    %vm1781 = vcmp.eq.f32.partialorder %v1780, 8.507059e+37
    %v1782 = vand.u32 %v1769, 2147483648
    %v1783 = vor.u32 1.1754944e-38, %v1782
    %v1784 = vsel %vm1781, %v1783, %v1779
    %v1785 = vmul.f32 1.0, %v1784
    %v1786 = vrcp.pop %v1770
    %v1787 = vmul.f32 %v1770, %v1786
    %v1788 = vsub.f32 1.0, %v1787
    %v1789 = vmul.f32 %v1786, %v1788
    %v1790 = vadd.f32 %v1786, %v1789
    %vm1791 = vweird.f32 %v1770
    %vm1792 = vweird.f32 %v1786
    %vm1793 = vmor %vm1791, %vm1792
    %v1794 = vsel %vm1793, %v1786, %v1790
    %v1795 = vand.u32 2147483647, %v1770
    %vm1796 = vcmp.eq.f32.partialorder %v1795, 8.507059e+37
    %v1797 = vand.u32 %v1770, 2147483648
    %v1798 = vor.u32 1.1754944e-38, %v1797
    %v1799 = vsel %vm1796, %v1798, %v1794
    %v1800 = vmul.f32 1.0, %v1799
    %v1801 = vmul.f32 %v1745, %v1717
    %v1802 = vmul.f32 %v1760, %v1719
    %v1803 = vadd.f32 %v1674, %v1801
    %v1804 = vadd.f32 %v1677, %v1802
    %v1805 = vtanh.pop %v1803
    %v1806 = vtanh.pop %v1804
    %v1807 = vsub.f32 1.0, %v1785
    %v1808 = vsub.f32 1.0, %v1800
    %v1809 = vmul.f32 %v1807, %v1805
    %v1810 = vmul.f32 %v1808, %v1806
    %v1811 = vmul.f32 %v1785, %v1667
    %v1812 = vmul.f32 %v1800, %v1668
    %v1813 = vadd.f32 %v1809, %v1811
    %v1814 = vadd.f32 %v1810, %v1812
    %s1815 = smul.u32 14, 3
    %s1816 = smul.addr %s1815, 8
    %s1817 = scalar_lea.vmem [#allocation2], %s1816
    %v1818 = vld [vmem:[%s1817] sm:$0xff]
    %v1819 = vld [vmem:[%s1817 + $0x8] sm:$0xff]
    %v1820 = vld [vmem:[%s1817 + $0x10] sm:$0xff]
    %v1821 = vld [vmem:[%s1817 + $0x18] sm:$0xff]
    %v1822 = vld [vmem:[%s1817 + $0x20] sm:$0xff]
    %v1823 = vld [vmem:[%s1817 + $0x28] sm:$0xff]
    %v1824 = vpack.c.bf16 %v1814, %v1813
    %1825 = vmatpush.bf16.msra.mxu0 %v776
    %1826 = vmatpush.bf16.msra.mxu0 %v773
    %1827 = vmatpush.bf16.msra.mxu0 %v770
    %1828 = vmatpush.bf16.msra.mxu0 %v767
    %1829 = vmatpush.bf16.msra.mxu0 %v764
    %1830 = vmatpush.bf16.msra.mxu0 %v761
    %1831 = vmatpush.bf16.msra.mxu0 %v758
    %1832 = vmatpush.bf16.msra.mxu0 %v755
    %1833 = vmatmul.bf16.gmra.mxu0 %v1824
    %v1834 = vpop.f32.mrf.mxu0
    %v1835 = vadd.f32 %v628, %v1834
    %v1836 = vpop.f32.mrf.mxu0
    %v1837 = vadd.f32 %v628, %v1836
    %1838 = vdwg.mxu0
    %1839 = vmatpush.bf16.msra.mxu0 %v777
    %1840 = vmatpush.bf16.msra.mxu0 %v774
    %1841 = vmatpush.bf16.msra.mxu0 %v771
    %1842 = vmatpush.bf16.msra.mxu0 %v768
    %1843 = vmatpush.bf16.msra.mxu0 %v765
    %1844 = vmatpush.bf16.msra.mxu0 %v762
    %1845 = vmatpush.bf16.msra.mxu0 %v759
    %1846 = vmatpush.bf16.msra.mxu0 %v756
    %1847 = vmatmul.bf16.gmra.mxu0 %v1824
    %v1848 = vpop.f32.mrf.mxu0
    %v1849 = vadd.f32 %v629, %v1848
    %v1850 = vpop.f32.mrf.mxu0
    %v1851 = vadd.f32 %v629, %v1850
    %1852 = vdwg.mxu0
    %1853 = vmatpush.bf16.msra.mxu0 %v778
    %1854 = vmatpush.bf16.msra.mxu0 %v775
    %1855 = vmatpush.bf16.msra.mxu0 %v772
    %1856 = vmatpush.bf16.msra.mxu0 %v769
    %1857 = vmatpush.bf16.msra.mxu0 %v766
    %1858 = vmatpush.bf16.msra.mxu0 %v763
    %1859 = vmatpush.bf16.msra.mxu0 %v760
    %1860 = vmatpush.bf16.msra.mxu0 %v757
    %1861 = vmatmul.bf16.gmra.mxu0 %v1824
    %v1862 = vpop.f32.mrf.mxu0
    %v1863 = vadd.f32 %v630, %v1862
    %v1864 = vpop.f32.mrf.mxu0
    %v1865 = vadd.f32 %v630, %v1864
    %1866 = vdwg.mxu0
    %v1867 = vadd.f32 %v1818, %v1835
    %v1868 = vadd.f32 %v1821, %v1837
    %v1869 = vxor.u32 %v1867, 2147483648
    %v1870 = vxor.u32 %v1868, 2147483648
    %v1871 = vmul.f32 %v1869, 1.442695
    %v1872 = vpow.pop %v1871
    %v1873 = vmul.f32 %v1870, 1.442695
    %v1874 = vpow.pop %v1873
    %v1875 = vadd.f32 %v1872, 1.0
    %v1876 = vadd.f32 %v1874, 1.0
    %v1877 = vrcp.pop %v1875
    %v1878 = vmul.f32 %v1875, %v1877
    %v1879 = vsub.f32 1.0, %v1878
    %v1880 = vmul.f32 %v1877, %v1879
    %v1881 = vadd.f32 %v1877, %v1880
    %vm1882 = vweird.f32 %v1875
    %vm1883 = vweird.f32 %v1877
    %vm1884 = vmor %vm1882, %vm1883
    %v1885 = vsel %vm1884, %v1877, %v1881
    %v1886 = vand.u32 2147483647, %v1875
    %vm1887 = vcmp.eq.f32.partialorder %v1886, 8.507059e+37
    %v1888 = vand.u32 %v1875, 2147483648
    %v1889 = vor.u32 1.1754944e-38, %v1888
    %v1890 = vsel %vm1887, %v1889, %v1885
    %v1891 = vmul.f32 1.0, %v1890
    %v1892 = vrcp.pop %v1876
    %v1893 = vmul.f32 %v1876, %v1892
    %v1894 = vsub.f32 1.0, %v1893
    %v1895 = vmul.f32 %v1892, %v1894
    %v1896 = vadd.f32 %v1892, %v1895
    %vm1897 = vweird.f32 %v1876
    %vm1898 = vweird.f32 %v1892
    %vm1899 = vmor %vm1897, %vm1898
    %v1900 = vsel %vm1899, %v1892, %v1896
    %v1901 = vand.u32 2147483647, %v1876
    %vm1902 = vcmp.eq.f32.partialorder %v1901, 8.507059e+37
    %v1903 = vand.u32 %v1876, 2147483648
    %v1904 = vor.u32 1.1754944e-38, %v1903
    %v1905 = vsel %vm1902, %v1904, %v1900
    %v1906 = vmul.f32 1.0, %v1905
    %v1907 = vadd.f32 %v1819, %v1849
    %v1908 = vadd.f32 %v1822, %v1851
    %v1909 = vxor.u32 %v1907, 2147483648
    %v1910 = vxor.u32 %v1908, 2147483648
    %v1911 = vmul.f32 %v1909, 1.442695
    %v1912 = vpow.pop %v1911
    %v1913 = vmul.f32 %v1910, 1.442695
    %v1914 = vpow.pop %v1913
    %v1915 = vadd.f32 %v1912, 1.0
    %v1916 = vadd.f32 %v1914, 1.0
    %v1917 = vrcp.pop %v1915
    %v1918 = vmul.f32 %v1915, %v1917
    %v1919 = vsub.f32 1.0, %v1918
    %v1920 = vmul.f32 %v1917, %v1919
    %v1921 = vadd.f32 %v1917, %v1920
    %vm1922 = vweird.f32 %v1915
    %vm1923 = vweird.f32 %v1917
    %vm1924 = vmor %vm1922, %vm1923
    %v1925 = vsel %vm1924, %v1917, %v1921
    %v1926 = vand.u32 2147483647, %v1915
    %vm1927 = vcmp.eq.f32.partialorder %v1926, 8.507059e+37
    %v1928 = vand.u32 %v1915, 2147483648
    %v1929 = vor.u32 1.1754944e-38, %v1928
    %v1930 = vsel %vm1927, %v1929, %v1925
    %v1931 = vmul.f32 1.0, %v1930
    %v1932 = vrcp.pop %v1916
    %v1933 = vmul.f32 %v1916, %v1932
    %v1934 = vsub.f32 1.0, %v1933
    %v1935 = vmul.f32 %v1932, %v1934
    %v1936 = vadd.f32 %v1932, %v1935
    %vm1937 = vweird.f32 %v1916
    %vm1938 = vweird.f32 %v1932
    %vm1939 = vmor %vm1937, %vm1938
    %v1940 = vsel %vm1939, %v1932, %v1936
    %v1941 = vand.u32 2147483647, %v1916
    %vm1942 = vcmp.eq.f32.partialorder %v1941, 8.507059e+37
    %v1943 = vand.u32 %v1916, 2147483648
    %v1944 = vor.u32 1.1754944e-38, %v1943
    %v1945 = vsel %vm1942, %v1944, %v1940
    %v1946 = vmul.f32 1.0, %v1945
    %v1947 = vmul.f32 %v1891, %v1863
    %v1948 = vmul.f32 %v1906, %v1865
    %v1949 = vadd.f32 %v1820, %v1947
    %v1950 = vadd.f32 %v1823, %v1948
    %v1951 = vtanh.pop %v1949
    %v1952 = vtanh.pop %v1950
    %v1953 = vsub.f32 1.0, %v1931
    %v1954 = vsub.f32 1.0, %v1946
    %v1955 = vmul.f32 %v1953, %v1951
    %v1956 = vmul.f32 %v1954, %v1952
    %v1957 = vmul.f32 %v1931, %v1813
    %v1958 = vmul.f32 %v1946, %v1814
    %v1959 = vadd.f32 %v1955, %v1957
    %v1960 = vadd.f32 %v1956, %v1958
    %s1961 = smul.u32 16, 3
    %s1962 = smul.addr %s1961, 8
    %s1963 = scalar_lea.vmem [#allocation2], %s1962
    %v1964 = vld [vmem:[%s1963] sm:$0xff]
    %v1965 = vld [vmem:[%s1963 + $0x8] sm:$0xff]
    %v1966 = vld [vmem:[%s1963 + $0x10] sm:$0xff]
    %v1967 = vld [vmem:[%s1963 + $0x18] sm:$0xff]
    %v1968 = vld [vmem:[%s1963 + $0x20] sm:$0xff]
    %v1969 = vld [vmem:[%s1963 + $0x28] sm:$0xff]
    %v1970 = vpack.c.bf16 %v1960, %v1959
    %1971 = vmatpush.bf16.msra.mxu0 %v776
    %1972 = vmatpush.bf16.msra.mxu0 %v773
    %1973 = vmatpush.bf16.msra.mxu0 %v770
    %1974 = vmatpush.bf16.msra.mxu0 %v767
    %1975 = vmatpush.bf16.msra.mxu0 %v764
    %1976 = vmatpush.bf16.msra.mxu0 %v761
    %1977 = vmatpush.bf16.msra.mxu0 %v758
    %1978 = vmatpush.bf16.msra.mxu0 %v755
    %1979 = vmatmul.bf16.gmra.mxu0 %v1970
    %v1980 = vpop.f32.mrf.mxu0
    %v1981 = vadd.f32 %v628, %v1980
    %v1982 = vpop.f32.mrf.mxu0
    %v1983 = vadd.f32 %v628, %v1982
    %1984 = vdwg.mxu0
    %1985 = vmatpush.bf16.msra.mxu0 %v777
    %1986 = vmatpush.bf16.msra.mxu0 %v774
    %1987 = vmatpush.bf16.msra.mxu0 %v771
    %1988 = vmatpush.bf16.msra.mxu0 %v768
    %1989 = vmatpush.bf16.msra.mxu0 %v765
    %1990 = vmatpush.bf16.msra.mxu0 %v762
    %1991 = vmatpush.bf16.msra.mxu0 %v759
    %1992 = vmatpush.bf16.msra.mxu0 %v756
    %1993 = vmatmul.bf16.gmra.mxu0 %v1970
    %v1994 = vpop.f32.mrf.mxu0
    %v1995 = vadd.f32 %v629, %v1994
    %v1996 = vpop.f32.mrf.mxu0
    %v1997 = vadd.f32 %v629, %v1996
    %1998 = vdwg.mxu0
    %1999 = vmatpush.bf16.msra.mxu0 %v778
    %2000 = vmatpush.bf16.msra.mxu0 %v775
    %2001 = vmatpush.bf16.msra.mxu0 %v772
    %2002 = vmatpush.bf16.msra.mxu0 %v769
    %2003 = vmatpush.bf16.msra.mxu0 %v766
    %2004 = vmatpush.bf16.msra.mxu0 %v763
    %2005 = vmatpush.bf16.msra.mxu0 %v760
    %2006 = vmatpush.bf16.msra.mxu0 %v757
    %2007 = vmatmul.bf16.gmra.mxu0 %v1970
    %v2008 = vpop.f32.mrf.mxu0
    %v2009 = vadd.f32 %v630, %v2008
    %v2010 = vpop.f32.mrf.mxu0
    %v2011 = vadd.f32 %v630, %v2010
    %2012 = vdwg.mxu0
    %v2013 = vadd.f32 %v1964, %v1981
    %v2014 = vadd.f32 %v1967, %v1983
    %v2015 = vxor.u32 %v2013, 2147483648
    %v2016 = vxor.u32 %v2014, 2147483648
    %v2017 = vmul.f32 %v2015, 1.442695
    %v2018 = vpow.pop %v2017
    %v2019 = vmul.f32 %v2016, 1.442695
    %v2020 = vpow.pop %v2019
    %v2021 = vadd.f32 %v2018, 1.0
    %v2022 = vadd.f32 %v2020, 1.0
    %v2023 = vrcp.pop %v2021
    %v2024 = vmul.f32 %v2021, %v2023
    %v2025 = vsub.f32 1.0, %v2024
    %v2026 = vmul.f32 %v2023, %v2025
    %v2027 = vadd.f32 %v2023, %v2026
    %vm2028 = vweird.f32 %v2021
    %vm2029 = vweird.f32 %v2023
    %vm2030 = vmor %vm2028, %vm2029
    %v2031 = vsel %vm2030, %v2023, %v2027
    %v2032 = vand.u32 2147483647, %v2021
    %vm2033 = vcmp.eq.f32.partialorder %v2032, 8.507059e+37
    %v2034 = vand.u32 %v2021, 2147483648
    %v2035 = vor.u32 1.1754944e-38, %v2034
    %v2036 = vsel %vm2033, %v2035, %v2031
    %v2037 = vmul.f32 1.0, %v2036
    %v2038 = vrcp.pop %v2022
    %v2039 = vmul.f32 %v2022, %v2038
    %v2040 = vsub.f32 1.0, %v2039
    %v2041 = vmul.f32 %v2038, %v2040
    %v2042 = vadd.f32 %v2038, %v2041
    %vm2043 = vweird.f32 %v2022
    %vm2044 = vweird.f32 %v2038
    %vm2045 = vmor %vm2043, %vm2044
    %v2046 = vsel %vm2045, %v2038, %v2042
    %v2047 = vand.u32 2147483647, %v2022
    %vm2048 = vcmp.eq.f32.partialorder %v2047, 8.507059e+37
    %v2049 = vand.u32 %v2022, 2147483648
    %v2050 = vor.u32 1.1754944e-38, %v2049
    %v2051 = vsel %vm2048, %v2050, %v2046
    %v2052 = vmul.f32 1.0, %v2051
    %v2053 = vadd.f32 %v1965, %v1995
    %v2054 = vadd.f32 %v1968, %v1997
    %v2055 = vxor.u32 %v2053, 2147483648
    %v2056 = vxor.u32 %v2054, 2147483648
    %v2057 = vmul.f32 %v2055, 1.442695
    %v2058 = vpow.pop %v2057
    %v2059 = vmul.f32 %v2056, 1.442695
    %v2060 = vpow.pop %v2059
    %v2061 = vadd.f32 %v2058, 1.0
    %v2062 = vadd.f32 %v2060, 1.0
    %v2063 = vrcp.pop %v2061
    %v2064 = vmul.f32 %v2061, %v2063
    %v2065 = vsub.f32 1.0, %v2064
    %v2066 = vmul.f32 %v2063, %v2065
    %v2067 = vadd.f32 %v2063, %v2066
    %vm2068 = vweird.f32 %v2061
    %vm2069 = vweird.f32 %v2063
    %vm2070 = vmor %vm2068, %vm2069
    %v2071 = vsel %vm2070, %v2063, %v2067
    %v2072 = vand.u32 2147483647, %v2061
    %vm2073 = vcmp.eq.f32.partialorder %v2072, 8.507059e+37
    %v2074 = vand.u32 %v2061, 2147483648
    %v2075 = vor.u32 1.1754944e-38, %v2074
    %v2076 = vsel %vm2073, %v2075, %v2071
    %v2077 = vmul.f32 1.0, %v2076
    %v2078 = vrcp.pop %v2062
    %v2079 = vmul.f32 %v2062, %v2078
    %v2080 = vsub.f32 1.0, %v2079
    %v2081 = vmul.f32 %v2078, %v2080
    %v2082 = vadd.f32 %v2078, %v2081
    %vm2083 = vweird.f32 %v2062
    %vm2084 = vweird.f32 %v2078
    %vm2085 = vmor %vm2083, %vm2084
    %v2086 = vsel %vm2085, %v2078, %v2082
    %v2087 = vand.u32 2147483647, %v2062
    %vm2088 = vcmp.eq.f32.partialorder %v2087, 8.507059e+37
    %v2089 = vand.u32 %v2062, 2147483648
    %v2090 = vor.u32 1.1754944e-38, %v2089
    %v2091 = vsel %vm2088, %v2090, %v2086
    %v2092 = vmul.f32 1.0, %v2091
    %v2093 = vmul.f32 %v2037, %v2009
    %v2094 = vmul.f32 %v2052, %v2011
    %v2095 = vadd.f32 %v1966, %v2093
    %v2096 = vadd.f32 %v1969, %v2094
    %v2097 = vtanh.pop %v2095
    %v2098 = vtanh.pop %v2096
    %v2099 = vsub.f32 1.0, %v2077
    %v2100 = vsub.f32 1.0, %v2092
    %v2101 = vmul.f32 %v2099, %v2097
    %v2102 = vmul.f32 %v2100, %v2098
    %v2103 = vmul.f32 %v2077, %v1959
    %v2104 = vmul.f32 %v2092, %v1960
    %v2105 = vadd.f32 %v2101, %v2103
    %v2106 = vadd.f32 %v2102, %v2104
    %s2107 = smul.u32 18, 3
    %s2108 = smul.addr %s2107, 8
    %s2109 = scalar_lea.vmem [#allocation2], %s2108
    %v2110 = vld [vmem:[%s2109] sm:$0xff]
    %v2111 = vld [vmem:[%s2109 + $0x8] sm:$0xff]
    %v2112 = vld [vmem:[%s2109 + $0x10] sm:$0xff]
    %v2113 = vld [vmem:[%s2109 + $0x18] sm:$0xff]
    %v2114 = vld [vmem:[%s2109 + $0x20] sm:$0xff]
    %v2115 = vld [vmem:[%s2109 + $0x28] sm:$0xff]
    %v2116 = vpack.c.bf16 %v2106, %v2105
    %2117 = vmatpush.bf16.msra.mxu0 %v776
    %2118 = vmatpush.bf16.msra.mxu0 %v773
    %2119 = vmatpush.bf16.msra.mxu0 %v770
    %2120 = vmatpush.bf16.msra.mxu0 %v767
    %2121 = vmatpush.bf16.msra.mxu0 %v764
    %2122 = vmatpush.bf16.msra.mxu0 %v761
    %2123 = vmatpush.bf16.msra.mxu0 %v758
    %2124 = vmatpush.bf16.msra.mxu0 %v755
    %2125 = vmatmul.bf16.gmra.mxu0 %v2116
    %v2126 = vpop.f32.mrf.mxu0
    %v2127 = vadd.f32 %v628, %v2126
    %v2128 = vpop.f32.mrf.mxu0
    %v2129 = vadd.f32 %v628, %v2128
    %2130 = vdwg.mxu0
    %2131 = vmatpush.bf16.msra.mxu0 %v777
    %2132 = vmatpush.bf16.msra.mxu0 %v774
    %2133 = vmatpush.bf16.msra.mxu0 %v771
    %2134 = vmatpush.bf16.msra.mxu0 %v768
    %2135 = vmatpush.bf16.msra.mxu0 %v765
    %2136 = vmatpush.bf16.msra.mxu0 %v762
    %2137 = vmatpush.bf16.msra.mxu0 %v759
    %2138 = vmatpush.bf16.msra.mxu0 %v756
    %2139 = vmatmul.bf16.gmra.mxu0 %v2116
    %v2140 = vpop.f32.mrf.mxu0
    %v2141 = vadd.f32 %v629, %v2140
    %v2142 = vpop.f32.mrf.mxu0
    %v2143 = vadd.f32 %v629, %v2142
    %2144 = vdwg.mxu0
    %2145 = vmatpush.bf16.msra.mxu0 %v778
    %2146 = vmatpush.bf16.msra.mxu0 %v775
    %2147 = vmatpush.bf16.msra.mxu0 %v772
    %2148 = vmatpush.bf16.msra.mxu0 %v769
    %2149 = vmatpush.bf16.msra.mxu0 %v766
    %2150 = vmatpush.bf16.msra.mxu0 %v763
    %2151 = vmatpush.bf16.msra.mxu0 %v760
    %2152 = vmatpush.bf16.msra.mxu0 %v757
    %2153 = vmatmul.bf16.gmra.mxu0 %v2116
    %v2154 = vpop.f32.mrf.mxu0
    %v2155 = vadd.f32 %v630, %v2154
    %v2156 = vpop.f32.mrf.mxu0
    %v2157 = vadd.f32 %v630, %v2156
    %2158 = vdwg.mxu0
    %v2159 = vadd.f32 %v2110, %v2127
    %v2160 = vadd.f32 %v2113, %v2129
    %v2161 = vxor.u32 %v2159, 2147483648
    %v2162 = vxor.u32 %v2160, 2147483648
    %v2163 = vmul.f32 %v2161, 1.442695
    %v2164 = vpow.pop %v2163
    %v2165 = vmul.f32 %v2162, 1.442695
    %v2166 = vpow.pop %v2165
    %v2167 = vadd.f32 %v2164, 1.0
    %v2168 = vadd.f32 %v2166, 1.0
    %v2169 = vrcp.pop %v2167
    %v2170 = vmul.f32 %v2167, %v2169
    %v2171 = vsub.f32 1.0, %v2170
    %v2172 = vmul.f32 %v2169, %v2171
    %v2173 = vadd.f32 %v2169, %v2172
    %vm2174 = vweird.f32 %v2167
    %vm2175 = vweird.f32 %v2169
    %vm2176 = vmor %vm2174, %vm2175
    %v2177 = vsel %vm2176, %v2169, %v2173
    %v2178 = vand.u32 2147483647, %v2167
    %vm2179 = vcmp.eq.f32.partialorder %v2178, 8.507059e+37
    %v2180 = vand.u32 %v2167, 2147483648
    %v2181 = vor.u32 1.1754944e-38, %v2180
    %v2182 = vsel %vm2179, %v2181, %v2177
    %v2183 = vmul.f32 1.0, %v2182
    %v2184 = vrcp.pop %v2168
    %v2185 = vmul.f32 %v2168, %v2184
    %v2186 = vsub.f32 1.0, %v2185
    %v2187 = vmul.f32 %v2184, %v2186
    %v2188 = vadd.f32 %v2184, %v2187
    %vm2189 = vweird.f32 %v2168
    %vm2190 = vweird.f32 %v2184
    %vm2191 = vmor %vm2189, %vm2190
    %v2192 = vsel %vm2191, %v2184, %v2188
    %v2193 = vand.u32 2147483647, %v2168
    %vm2194 = vcmp.eq.f32.partialorder %v2193, 8.507059e+37
    %v2195 = vand.u32 %v2168, 2147483648
    %v2196 = vor.u32 1.1754944e-38, %v2195
    %v2197 = vsel %vm2194, %v2196, %v2192
    %v2198 = vmul.f32 1.0, %v2197
    %v2199 = vadd.f32 %v2111, %v2141
    %v2200 = vadd.f32 %v2114, %v2143
    %v2201 = vxor.u32 %v2199, 2147483648
    %v2202 = vxor.u32 %v2200, 2147483648
    %v2203 = vmul.f32 %v2201, 1.442695
    %v2204 = vpow.pop %v2203
    %v2205 = vmul.f32 %v2202, 1.442695
    %v2206 = vpow.pop %v2205
    %v2207 = vadd.f32 %v2204, 1.0
    %v2208 = vadd.f32 %v2206, 1.0
    %v2209 = vrcp.pop %v2207
    %v2210 = vmul.f32 %v2207, %v2209
    %v2211 = vsub.f32 1.0, %v2210
    %v2212 = vmul.f32 %v2209, %v2211
    %v2213 = vadd.f32 %v2209, %v2212
    %vm2214 = vweird.f32 %v2207
    %vm2215 = vweird.f32 %v2209
    %vm2216 = vmor %vm2214, %vm2215
    %v2217 = vsel %vm2216, %v2209, %v2213
    %v2218 = vand.u32 2147483647, %v2207
    %vm2219 = vcmp.eq.f32.partialorder %v2218, 8.507059e+37
    %v2220 = vand.u32 %v2207, 2147483648
    %v2221 = vor.u32 1.1754944e-38, %v2220
    %v2222 = vsel %vm2219, %v2221, %v2217
    %v2223 = vmul.f32 1.0, %v2222
    %v2224 = vrcp.pop %v2208
    %v2225 = vmul.f32 %v2208, %v2224
    %v2226 = vsub.f32 1.0, %v2225
    %v2227 = vmul.f32 %v2224, %v2226
    %v2228 = vadd.f32 %v2224, %v2227
    %vm2229 = vweird.f32 %v2208
    %vm2230 = vweird.f32 %v2224
    %vm2231 = vmor %vm2229, %vm2230
    %v2232 = vsel %vm2231, %v2224, %v2228
    %v2233 = vand.u32 2147483647, %v2208
    %vm2234 = vcmp.eq.f32.partialorder %v2233, 8.507059e+37
    %v2235 = vand.u32 %v2208, 2147483648
    %v2236 = vor.u32 1.1754944e-38, %v2235
    %v2237 = vsel %vm2234, %v2236, %v2232
    %v2238 = vmul.f32 1.0, %v2237
    %v2239 = vmul.f32 %v2183, %v2155
    %v2240 = vmul.f32 %v2198, %v2157
    %v2241 = vadd.f32 %v2112, %v2239
    %v2242 = vadd.f32 %v2115, %v2240
    %v2243 = vtanh.pop %v2241
    %v2244 = vtanh.pop %v2242
    %v2245 = vsub.f32 1.0, %v2223
    %v2246 = vsub.f32 1.0, %v2238
    %v2247 = vmul.f32 %v2245, %v2243
    %v2248 = vmul.f32 %v2246, %v2244
    %v2249 = vmul.f32 %v2223, %v2105
    %v2250 = vmul.f32 %v2238, %v2106
    %v2251 = vadd.f32 %v2247, %v2249
    %v2252 = vadd.f32 %v2248, %v2250
    %s2253 = smul.u32 20, 3
    %s2254 = smul.addr %s2253, 8
    %s2255 = scalar_lea.vmem [#allocation2], %s2254
    %v2256 = vld [vmem:[%s2255] sm:$0xff]
    %v2257 = vld [vmem:[%s2255 + $0x8] sm:$0xff]
    %v2258 = vld [vmem:[%s2255 + $0x10] sm:$0xff]
    %v2259 = vld [vmem:[%s2255 + $0x18] sm:$0xff]
    %v2260 = vld [vmem:[%s2255 + $0x20] sm:$0xff]
    %v2261 = vld [vmem:[%s2255 + $0x28] sm:$0xff]
    %v2262 = vpack.c.bf16 %v2252, %v2251
    %2263 = vmatpush.bf16.msra.mxu0 %v776
    %2264 = vmatpush.bf16.msra.mxu0 %v773
    %2265 = vmatpush.bf16.msra.mxu0 %v770
    %2266 = vmatpush.bf16.msra.mxu0 %v767
    %2267 = vmatpush.bf16.msra.mxu0 %v764
    %2268 = vmatpush.bf16.msra.mxu0 %v761
    %2269 = vmatpush.bf16.msra.mxu0 %v758
    %2270 = vmatpush.bf16.msra.mxu0 %v755
    %2271 = vmatmul.bf16.gmra.mxu0 %v2262
    %v2272 = vpop.f32.mrf.mxu0
    %v2273 = vadd.f32 %v628, %v2272
    %v2274 = vpop.f32.mrf.mxu0
    %v2275 = vadd.f32 %v628, %v2274
    %2276 = vdwg.mxu0
    %2277 = vmatpush.bf16.msra.mxu0 %v777
    %2278 = vmatpush.bf16.msra.mxu0 %v774
    %2279 = vmatpush.bf16.msra.mxu0 %v771
    %2280 = vmatpush.bf16.msra.mxu0 %v768
    %2281 = vmatpush.bf16.msra.mxu0 %v765
    %2282 = vmatpush.bf16.msra.mxu0 %v762
    %2283 = vmatpush.bf16.msra.mxu0 %v759
    %2284 = vmatpush.bf16.msra.mxu0 %v756
    %2285 = vmatmul.bf16.gmra.mxu0 %v2262
    %v2286 = vpop.f32.mrf.mxu0
    %v2287 = vadd.f32 %v629, %v2286
    %v2288 = vpop.f32.mrf.mxu0
    %v2289 = vadd.f32 %v629, %v2288
    %2290 = vdwg.mxu0
    %2291 = vmatpush.bf16.msra.mxu0 %v778
    %2292 = vmatpush.bf16.msra.mxu0 %v775
    %2293 = vmatpush.bf16.msra.mxu0 %v772
    %2294 = vmatpush.bf16.msra.mxu0 %v769
    %2295 = vmatpush.bf16.msra.mxu0 %v766
    %2296 = vmatpush.bf16.msra.mxu0 %v763
    %2297 = vmatpush.bf16.msra.mxu0 %v760
    %2298 = vmatpush.bf16.msra.mxu0 %v757
    %2299 = vmatmul.bf16.gmra.mxu0 %v2262
    %v2300 = vpop.f32.mrf.mxu0
    %v2301 = vadd.f32 %v630, %v2300
    %v2302 = vpop.f32.mrf.mxu0
    %v2303 = vadd.f32 %v630, %v2302
    %2304 = vdwg.mxu0
    %v2305 = vadd.f32 %v2256, %v2273
    %v2306 = vadd.f32 %v2259, %v2275
    %v2307 = vxor.u32 %v2305, 2147483648
    %v2308 = vxor.u32 %v2306, 2147483648
    %v2309 = vmul.f32 %v2307, 1.442695
    %v2310 = vpow.pop %v2309
    %v2311 = vmul.f32 %v2308, 1.442695
    %v2312 = vpow.pop %v2311
    %v2313 = vadd.f32 %v2310, 1.0
    %v2314 = vadd.f32 %v2312, 1.0
    %v2315 = vrcp.pop %v2313
    %v2316 = vmul.f32 %v2313, %v2315
    %v2317 = vsub.f32 1.0, %v2316
    %v2318 = vmul.f32 %v2315, %v2317
    %v2319 = vadd.f32 %v2315, %v2318
    %vm2320 = vweird.f32 %v2313
    %vm2321 = vweird.f32 %v2315
    %vm2322 = vmor %vm2320, %vm2321
    %v2323 = vsel %vm2322, %v2315, %v2319
    %v2324 = vand.u32 2147483647, %v2313
    %vm2325 = vcmp.eq.f32.partialorder %v2324, 8.507059e+37
    %v2326 = vand.u32 %v2313, 2147483648
    %v2327 = vor.u32 1.1754944e-38, %v2326
    %v2328 = vsel %vm2325, %v2327, %v2323
    %v2329 = vmul.f32 1.0, %v2328
    %v2330 = vrcp.pop %v2314
    %v2331 = vmul.f32 %v2314, %v2330
    %v2332 = vsub.f32 1.0, %v2331
    %v2333 = vmul.f32 %v2330, %v2332
    %v2334 = vadd.f32 %v2330, %v2333
    %vm2335 = vweird.f32 %v2314
    %vm2336 = vweird.f32 %v2330
    %vm2337 = vmor %vm2335, %vm2336
    %v2338 = vsel %vm2337, %v2330, %v2334
    %v2339 = vand.u32 2147483647, %v2314
    %vm2340 = vcmp.eq.f32.partialorder %v2339, 8.507059e+37
    %v2341 = vand.u32 %v2314, 2147483648
    %v2342 = vor.u32 1.1754944e-38, %v2341
    %v2343 = vsel %vm2340, %v2342, %v2338
    %v2344 = vmul.f32 1.0, %v2343
    %v2345 = vadd.f32 %v2257, %v2287
    %v2346 = vadd.f32 %v2260, %v2289
    %v2347 = vxor.u32 %v2345, 2147483648
    %v2348 = vxor.u32 %v2346, 2147483648
    %v2349 = vmul.f32 %v2347, 1.442695
    %v2350 = vpow.pop %v2349
    %v2351 = vmul.f32 %v2348, 1.442695
    %v2352 = vpow.pop %v2351
    %v2353 = vadd.f32 %v2350, 1.0
    %v2354 = vadd.f32 %v2352, 1.0
    %v2355 = vrcp.pop %v2353
    %v2356 = vmul.f32 %v2353, %v2355
    %v2357 = vsub.f32 1.0, %v2356
    %v2358 = vmul.f32 %v2355, %v2357
    %v2359 = vadd.f32 %v2355, %v2358
    %vm2360 = vweird.f32 %v2353
    %vm2361 = vweird.f32 %v2355
    %vm2362 = vmor %vm2360, %vm2361
    %v2363 = vsel %vm2362, %v2355, %v2359
    %v2364 = vand.u32 2147483647, %v2353
    %vm2365 = vcmp.eq.f32.partialorder %v2364, 8.507059e+37
    %v2366 = vand.u32 %v2353, 2147483648
    %v2367 = vor.u32 1.1754944e-38, %v2366
    %v2368 = vsel %vm2365, %v2367, %v2363
    %v2369 = vmul.f32 1.0, %v2368
    %v2370 = vrcp.pop %v2354
    %v2371 = vmul.f32 %v2354, %v2370
    %v2372 = vsub.f32 1.0, %v2371
    %v2373 = vmul.f32 %v2370, %v2372
    %v2374 = vadd.f32 %v2370, %v2373
    %vm2375 = vweird.f32 %v2354
    %vm2376 = vweird.f32 %v2370
    %vm2377 = vmor %vm2375, %vm2376
    %v2378 = vsel %vm2377, %v2370, %v2374
    %v2379 = vand.u32 2147483647, %v2354
    %vm2380 = vcmp.eq.f32.partialorder %v2379, 8.507059e+37
    %v2381 = vand.u32 %v2354, 2147483648
    %v2382 = vor.u32 1.1754944e-38, %v2381
    %v2383 = vsel %vm2380, %v2382, %v2378
    %v2384 = vmul.f32 1.0, %v2383
    %v2385 = vmul.f32 %v2329, %v2301
    %v2386 = vmul.f32 %v2344, %v2303
    %v2387 = vadd.f32 %v2258, %v2385
    %v2388 = vadd.f32 %v2261, %v2386
    %v2389 = vtanh.pop %v2387
    %v2390 = vtanh.pop %v2388
    %v2391 = vsub.f32 1.0, %v2369
    %v2392 = vsub.f32 1.0, %v2384
    %v2393 = vmul.f32 %v2391, %v2389
    %v2394 = vmul.f32 %v2392, %v2390
    %v2395 = vmul.f32 %v2369, %v2251
    %v2396 = vmul.f32 %v2384, %v2252
    %v2397 = vadd.f32 %v2393, %v2395
    %v2398 = vadd.f32 %v2394, %v2396
    %s2399 = smul.u32 22, 3
    %s2400 = smul.addr %s2399, 8
    %s2401 = scalar_lea.vmem [#allocation2], %s2400
    %v2402 = vld [vmem:[%s2401] sm:$0xff]
    %v2403 = vld [vmem:[%s2401 + $0x8] sm:$0xff]
    %v2404 = vld [vmem:[%s2401 + $0x10] sm:$0xff]
    %v2405 = vld [vmem:[%s2401 + $0x18] sm:$0xff]
    %v2406 = vld [vmem:[%s2401 + $0x20] sm:$0xff]
    %v2407 = vld [vmem:[%s2401 + $0x28] sm:$0xff]
    %v2408 = vpack.c.bf16 %v2398, %v2397
    %2409 = vmatpush.bf16.msra.mxu0 %v776
    %2410 = vmatpush.bf16.msra.mxu0 %v773
    %2411 = vmatpush.bf16.msra.mxu0 %v770
    %2412 = vmatpush.bf16.msra.mxu0 %v767
    %2413 = vmatpush.bf16.msra.mxu0 %v764
    %2414 = vmatpush.bf16.msra.mxu0 %v761
    %2415 = vmatpush.bf16.msra.mxu0 %v758
    %2416 = vmatpush.bf16.msra.mxu0 %v755
    %2417 = vmatmul.bf16.gmra.mxu0 %v2408
    %v2418 = vpop.f32.mrf.mxu0
    %v2419 = vadd.f32 %v628, %v2418
    %v2420 = vpop.f32.mrf.mxu0
    %v2421 = vadd.f32 %v628, %v2420
    %2422 = vdwg.mxu0
    %2423 = vmatpush.bf16.msra.mxu0 %v777
    %2424 = vmatpush.bf16.msra.mxu0 %v774
    %2425 = vmatpush.bf16.msra.mxu0 %v771
    %2426 = vmatpush.bf16.msra.mxu0 %v768
    %2427 = vmatpush.bf16.msra.mxu0 %v765
    %2428 = vmatpush.bf16.msra.mxu0 %v762
    %2429 = vmatpush.bf16.msra.mxu0 %v759
    %2430 = vmatpush.bf16.msra.mxu0 %v756
    %2431 = vmatmul.bf16.gmra.mxu0 %v2408
    %v2432 = vpop.f32.mrf.mxu0
    %v2433 = vadd.f32 %v629, %v2432
    %v2434 = vpop.f32.mrf.mxu0
    %v2435 = vadd.f32 %v629, %v2434
    %2436 = vdwg.mxu0
    %2437 = vmatpush.bf16.msra.mxu0 %v778
    %2438 = vmatpush.bf16.msra.mxu0 %v775
    %2439 = vmatpush.bf16.msra.mxu0 %v772
    %2440 = vmatpush.bf16.msra.mxu0 %v769
    %2441 = vmatpush.bf16.msra.mxu0 %v766
    %2442 = vmatpush.bf16.msra.mxu0 %v763
    %2443 = vmatpush.bf16.msra.mxu0 %v760
    %2444 = vmatpush.bf16.msra.mxu0 %v757
    %2445 = vmatmul.bf16.gmra.mxu0 %v2408
    %v2446 = vpop.f32.mrf.mxu0
    %v2447 = vadd.f32 %v630, %v2446
    %v2448 = vpop.f32.mrf.mxu0
    %v2449 = vadd.f32 %v630, %v2448
    %2450 = vdwg.mxu0
    %v2451 = vadd.f32 %v2402, %v2419
    %v2452 = vadd.f32 %v2405, %v2421
    %v2453 = vxor.u32 %v2451, 2147483648
    %v2454 = vxor.u32 %v2452, 2147483648
    %v2455 = vmul.f32 %v2453, 1.442695
    %v2456 = vpow.pop %v2455
    %v2457 = vmul.f32 %v2454, 1.442695
    %v2458 = vpow.pop %v2457
    %v2459 = vadd.f32 %v2456, 1.0
    %v2460 = vadd.f32 %v2458, 1.0
    %v2461 = vrcp.pop %v2459
    %v2462 = vmul.f32 %v2459, %v2461
    %v2463 = vsub.f32 1.0, %v2462
    %v2464 = vmul.f32 %v2461, %v2463
    %v2465 = vadd.f32 %v2461, %v2464
    %vm2466 = vweird.f32 %v2459
    %vm2467 = vweird.f32 %v2461
    %vm2468 = vmor %vm2466, %vm2467
    %v2469 = vsel %vm2468, %v2461, %v2465
    %v2470 = vand.u32 2147483647, %v2459
    %vm2471 = vcmp.eq.f32.partialorder %v2470, 8.507059e+37
    %v2472 = vand.u32 %v2459, 2147483648
    %v2473 = vor.u32 1.1754944e-38, %v2472
    %v2474 = vsel %vm2471, %v2473, %v2469
    %v2475 = vmul.f32 1.0, %v2474
    %v2476 = vrcp.pop %v2460
    %v2477 = vmul.f32 %v2460, %v2476
    %v2478 = vsub.f32 1.0, %v2477
    %v2479 = vmul.f32 %v2476, %v2478
    %v2480 = vadd.f32 %v2476, %v2479
    %vm2481 = vweird.f32 %v2460
    %vm2482 = vweird.f32 %v2476
    %vm2483 = vmor %vm2481, %vm2482
    %v2484 = vsel %vm2483, %v2476, %v2480
    %v2485 = vand.u32 2147483647, %v2460
    %vm2486 = vcmp.eq.f32.partialorder %v2485, 8.507059e+37
    %v2487 = vand.u32 %v2460, 2147483648
    %v2488 = vor.u32 1.1754944e-38, %v2487
    %v2489 = vsel %vm2486, %v2488, %v2484
    %v2490 = vmul.f32 1.0, %v2489
    %v2491 = vadd.f32 %v2403, %v2433
    %v2492 = vadd.f32 %v2406, %v2435
    %v2493 = vxor.u32 %v2491, 2147483648
    %v2494 = vxor.u32 %v2492, 2147483648
    %v2495 = vmul.f32 %v2493, 1.442695
    %v2496 = vpow.pop %v2495
    %v2497 = vmul.f32 %v2494, 1.442695
    %v2498 = vpow.pop %v2497
    %v2499 = vadd.f32 %v2496, 1.0
    %v2500 = vadd.f32 %v2498, 1.0
    %v2501 = vrcp.pop %v2499
    %v2502 = vmul.f32 %v2499, %v2501
    %v2503 = vsub.f32 1.0, %v2502
    %v2504 = vmul.f32 %v2501, %v2503
    %v2505 = vadd.f32 %v2501, %v2504
    %vm2506 = vweird.f32 %v2499
    %vm2507 = vweird.f32 %v2501
    %vm2508 = vmor %vm2506, %vm2507
    %v2509 = vsel %vm2508, %v2501, %v2505
    %v2510 = vand.u32 2147483647, %v2499
    %vm2511 = vcmp.eq.f32.partialorder %v2510, 8.507059e+37
    %v2512 = vand.u32 %v2499, 2147483648
    %v2513 = vor.u32 1.1754944e-38, %v2512
    %v2514 = vsel %vm2511, %v2513, %v2509
    %v2515 = vmul.f32 1.0, %v2514
    %v2516 = vrcp.pop %v2500
    %v2517 = vmul.f32 %v2500, %v2516
    %v2518 = vsub.f32 1.0, %v2517
    %v2519 = vmul.f32 %v2516, %v2518
    %v2520 = vadd.f32 %v2516, %v2519
    %vm2521 = vweird.f32 %v2500
    %vm2522 = vweird.f32 %v2516
    %vm2523 = vmor %vm2521, %vm2522
    %v2524 = vsel %vm2523, %v2516, %v2520
    %v2525 = vand.u32 2147483647, %v2500
    %vm2526 = vcmp.eq.f32.partialorder %v2525, 8.507059e+37
    %v2527 = vand.u32 %v2500, 2147483648
    %v2528 = vor.u32 1.1754944e-38, %v2527
    %v2529 = vsel %vm2526, %v2528, %v2524
    %v2530 = vmul.f32 1.0, %v2529
    %v2531 = vmul.f32 %v2475, %v2447
    %v2532 = vmul.f32 %v2490, %v2449
    %v2533 = vadd.f32 %v2404, %v2531
    %v2534 = vadd.f32 %v2407, %v2532
    %v2535 = vtanh.pop %v2533
    %v2536 = vtanh.pop %v2534
    %v2537 = vsub.f32 1.0, %v2515
    %v2538 = vsub.f32 1.0, %v2530
    %v2539 = vmul.f32 %v2537, %v2535
    %v2540 = vmul.f32 %v2538, %v2536
    %v2541 = vmul.f32 %v2515, %v2397
    %v2542 = vmul.f32 %v2530, %v2398
    %v2543 = vadd.f32 %v2539, %v2541
    %v2544 = vadd.f32 %v2540, %v2542
    %2545 = vst [vmem:[#allocation11] sm:$0xff] %v2543
    %2546 = vst [vmem:[#allocation11 + $0x8] sm:$0xff] %v2544
    // Predicated region
    $region38: #{tpu_custom_call.1} parent=1 // pred_check
      _
    $region39: #{tpu_custom_call.1} parent=1 // pred_check_branch
      %2548 = sbr.rel (0) target = $region41
    $region40: #{tpu_custom_call.1} parent=1 // pred_region
      %2550 = vsyncadd [#allocation5], 0
      %s2551 = sshll.u32 [#allocation11], 4
      %s2552 = int_to_ptr.vmem [resolvable:$true] %s2551
      %s2553 = sshll.u32 %s5, 4
      %s2554 = int_to_ptr.hbm [resolvable:$true] %s2553
      %2559 = dma.vmem_to_hbm [thread:$0]  %s2552, 256, %s2554, [#allocation5], 128, 128, 8
    $region41: #{tpu_custom_call.1} parent=1 // pred_fallthru
      _
    // Predicated region
    $region42: #{tpu_custom_call.1} parent=1 // pred_check
      _
    $region43: #{tpu_custom_call.1} parent=1 // pred_check_branch
      %2561 = sbr.rel (0) target = $region45
    $region44: #{tpu_custom_call.1} parent=1 // pred_region
      %2563 = dma.done [#allocation5], 256
    $region45: #{tpu_custom_call.1} parent=1 // pred_fallthru
      _
    %2564 = vsyncpa [#allocation4], 1
    %2565 = vsyncpa [#allocation7], 1
    %2566 = vsyncpa [#allocation10], 1
    %2567 = vsyncpa [#allocation5], 1

</llo_original>
